<compile_context>
chip_gen: v5e
topology: v5e:2x2
jax: 0.10.0
libtpu: 0.0.40
codegen_flags: <defaults>
</compile_context>

<pallas_src>
import functools
import math

import jax
import jax.numpy as jnp
from jax import lax
from jax.experimental import pallas as pl
from jax.experimental.pallas import tpu as pltpu

LN_EPS = 1e-6  # nn.LayerNorm(..., eps=1e-06)

LAYER_WEIGHT_NAMES = ('ln1_g', 'ln1_b', 'wqkv', 'bqkv', 'wo', 'bo',
                      'ln2_g', 'ln2_b', 'w1', 'b1', 'w2', 'b2')
FINAL_WEIGHT_NAMES = ('lnf_g', 'lnf_b', 'pool_w', 'pool_b', 'dense_w', 'dense_b')


def _layer_norm(x, gamma, beta):
    # two-pass variance (numerically safer than E[x^2]-mu^2)
    mu = jnp.mean(x, axis=-1, keepdims=True)
    xc = x - mu
    var = jnp.mean(xc * xc, axis=-1, keepdims=True)
    return xc * lax.rsqrt(var + LN_EPS) * gamma + beta


def _softmax_last(s):
    s = s - jnp.max(s, axis=-1, keepdims=True)
    e = jnp.exp(s)
    return e / jnp.sum(e, axis=-1, keepdims=True)


# ----------------------------------------------------------------------------
# Fused kernel body: one (batch_block, layer) grid step
# ----------------------------------------------------------------------------
def transformer_inter_encoder_kernel(
        x_ref, mkeys_ref, mcols_ref, pe_ref,
        ln1_g_ref, ln1_b_ref, wqkv_ref, bqkv_ref, wo_ref, bo_ref,
        ln2_g_ref, ln2_b_ref, w1_ref, b1_ref, w2_ref, b2_ref,
        lnf_g_ref, lnf_b_ref, poolw_ref, poolb_ref, densew_ref, denseb_ref,
        out_ref, resid_ref, *, heads, dh, dh_pad, out_mode):
    Bb, S, D = x_ref.shape
    l = pl.program_id(1)
    n_layers = pl.num_programs(1)
    scale = 1.0 / math.sqrt(dh)

    # ---- init residual stream at the first layer of this batch block ----
    @pl.when(l == 0)
    def _init():
        x0 = x_ref[...] * mcols_ref[...] + pe_ref[...][None]        # (Bb, S, D) f32
        resid_ref[...] = x0.reshape(Bb * S, D)

    x2 = resid_ref[...]                                              # (Bb*S, D) f32
    attn_bias = (mkeys_ref[...] - 1.0) * 1e18                        # (Bb, 1, S): 0 keep / -1e18 pad

    # pre-LN only for layers > 0 (matches `if iter != 0`); scalar blend avoids dyn. control flow
    ln_x = _layer_norm(x2, ln1_g_ref[0], ln1_b_ref[0])
    use_ln = (l > 0).astype(jnp.float32)
    h2 = x2 + use_ln * (ln_x - x2)

    # fused QKV projection, head dims padded to 128 lanes: (Bb*S, D) @ (D, 3*H*dh_pad)
    qkv = jnp.dot(h2.astype(jnp.bfloat16), wqkv_ref[0],
                  preferred_element_type=jnp.float32) + bqkv_ref[0]
    qkv = qkv.reshape(Bb, S, 3 * heads * dh_pad)

    attn2 = jnp.zeros((Bb * S, D), jnp.float32)
    for h in range(heads):                                           # static unroll; aligned slices
        q_h = (qkv[:, :, h * dh_pad:(h + 1) * dh_pad] * scale).astype(jnp.bfloat16)
        k_h = qkv[:, :, (heads + h) * dh_pad:(heads + h + 1) * dh_pad].astype(jnp.bfloat16)
        v_h = qkv[:, :, (2 * heads + h) * dh_pad:(2 * heads + h + 1) * dh_pad].astype(jnp.bfloat16)
        s = jnp.einsum('bqd,bkd->bqk', q_h, k_h,
                       preferred_element_type=jnp.float32) + attn_bias
        p = _softmax_last(s).astype(jnp.bfloat16)                    # (Bb, S, S)
        ctx = jnp.einsum('bqk,bkd->bqd', p, v_h,
                         preferred_element_type=jnp.float32)         # (Bb, S, dh_pad)
        # per-head out-projection accumulated directly (no concat)
        attn2 = attn2 + jnp.dot(ctx.reshape(Bb * S, dh_pad).astype(jnp.bfloat16),
                                wo_ref[0, h * dh_pad:(h + 1) * dh_pad, :],
                                preferred_element_type=jnp.float32)

    res1 = attn2 + bo_ref[0] + x2                                    # dropout == identity (eval)

    # PositionwiseFeedForward: LN -> W1 -> gelu(tanh) -> W2 -> + residual
    hn = _layer_norm(res1, ln2_g_ref[0], ln2_b_ref[0])
    inter = jax.nn.gelu(jnp.dot(hn.astype(jnp.bfloat16), w1_ref[0],
                                preferred_element_type=jnp.float32) + b1_ref[0],
                        approximate=True)
    ffn = jnp.dot(inter.astype(jnp.bfloat16), w2_ref[0],
                  preferred_element_type=jnp.float32) + b2_ref[0]
    new_x2 = ffn + res1
    resid_ref[...] = new_x2

    # ---- final LayerNorm + head after the last layer ----
    @pl.when(l == n_layers - 1)
    def _final():
        xf2 = _layer_norm(new_x2, lnf_g_ref[...], lnf_b_ref[...])    # (Bb*S, D)
        if out_mode == 'pool':
            first = xf2.reshape(Bb, S, D)[:, 0, :]                   # (Bb, D)
            pooled = jnp.tanh(jnp.dot(first.astype(jnp.bfloat16), poolw_ref[...],
                                      preferred_element_type=jnp.float32) + poolb_ref[...])
            logits = jnp.dot(pooled.astype(jnp.bfloat16), densew_ref[...],
                             preferred_element_type=jnp.float32) + denseb_ref[...]
            out_ref[...] = logits[:, None, :]
        elif out_mode == 'avg':
            pooled = jnp.mean(xf2.reshape(Bb, S, D), axis=1)         # (Bb, D)
            logits = jnp.dot(pooled.astype(jnp.bfloat16), densew_ref[...],
                             preferred_element_type=jnp.float32) + denseb_ref[...]
            out_ref[...] = logits[:, None, :]
        else:                                                        # per-token logits
            tok = jnp.dot(xf2.astype(jnp.bfloat16), densew_ref[...],
                          preferred_element_type=jnp.float32) + denseb_ref[...]
            out_ref[...] = tok.reshape(Bb, S, tok.shape[-1])


# ----------------------------------------------------------------------------
# Parameter init (PyTorch-default-like), with head padding + bf16 matmul weights
# ----------------------------------------------------------------------------
def init_params(key, d_model, d_ff, heads, num_layers, polarities_dim, max_len=512):
    assert d_model % heads == 0 and num_layers >= 1
    dh = d_model // heads
    dh_pad = ((dh + 127) // 128) * 128
    p_pad = ((max(polarities_dim, 1) + 127) // 128) * 128

    def linear(k, fan_in, fan_out):
        kw, kb = jax.random.split(k)
        bound = 1.0 / math.sqrt(fan_in)
        w = jax.random.uniform(kw, (fan_in, fan_out), jnp.float32, -bound, bound)
        b = jax.random.uniform(kb, (fan_out,), jnp.float32, -bound, bound)
        return w, b

    def pad_head_cols(w):                       # (D, D) -> (D, heads*dh_pad), zero pad per head
        w = w.reshape(d_model, heads, dh)
        w = jnp.pad(w, ((0, 0), (0, 0), (0, dh_pad - dh)))
        return w.reshape(d_model, heads * dh_pad)

    def pad_head_vec(b):                        # (D,) -> (heads*dh_pad,)
        b = b.reshape(heads, dh)
        b = jnp.pad(b, ((0, 0), (0, dh_pad - dh)))
        return b.reshape(heads * dh_pad)

    keys = iter(jax.random.split(key, 6 * num_layers + 4))
    wqkv, bqkv, wo, bo, w1, b1, w2, b2 = [], [], [], [], [], [], [], []
    for _ in range(num_layers):
        wq, bq = linear(next(keys), d_model, d_model)
        wk, bk = linear(next(keys), d_model, d_model)
        wv, bv = linear(next(keys), d_model, d_model)
        wqkv.append(jnp.concatenate([pad_head_cols(wq), pad_head_cols(wk), pad_head_cols(wv)], 1))
        bqkv.append(jnp.concatenate([pad_head_vec(bq), pad_head_vec(bk), pad_head_vec(bv)])[None])
        w, b = linear(next(keys), d_model, d_model)
        w = jnp.pad(w.reshape(heads, dh, d_model), ((0, 0), (0, dh_pad - dh), (0, 0)))
        wo.append(w.reshape(heads * dh_pad, d_model)); bo.append(b[None, :])
        w, b = linear(next(keys), d_model, d_ff);      w1.append(w); b1.append(b[None, :])
        w, b = linear(next(keys), d_ff, d_model);      w2.append(w); b2.append(b[None, :])

    pool_w, pool_b = linear(next(keys), d_model, d_model)
    dense_w, dense_b = linear(next(keys), d_model, polarities_dim)

    # PositionalEncoding buffer: pe[:,0::2]=sin, pe[:,1::2]=cos (forward adds raw pe, no sqrt(D))
    position = jnp.arange(max_len, dtype=jnp.float32)[:, None]
    div_term = jnp.exp(jnp.arange(0, d_model, 2, dtype=jnp.float32)
                       * -(math.log(10000.0) / d_model))
    ang = position * div_term
    pe = jnp.zeros((max_len, d_model), jnp.float32)
    pe = pe.at[:, 0::2].set(jnp.sin(ang))
    pe = pe.at[:, 1::2].set(jnp.cos(ang))

    bf = jnp.bfloat16
    return dict(
        pe=pe,
        ln1_g=jnp.ones((num_layers, 1, d_model), jnp.float32),
        ln1_b=jnp.zeros((num_layers, 1, d_model), jnp.float32),
        wqkv=jnp.stack(wqkv).astype(bf), bqkv=jnp.stack(bqkv),
        wo=jnp.stack(wo).astype(bf), bo=jnp.stack(bo),
        ln2_g=jnp.ones((num_layers, 1, d_model), jnp.float32),
        ln2_b=jnp.zeros((num_layers, 1, d_model), jnp.float32),
        w1=jnp.stack(w1).astype(bf), b1=jnp.stack(b1),
        w2=jnp.stack(w2).astype(bf), b2=jnp.stack(b2),
        lnf_g=jnp.ones((1, d_model), jnp.float32),
        lnf_b=jnp.zeros((1, d_model), jnp.float32),
        pool_w=pool_w.astype(bf), pool_b=pool_b[None, :],
        dense_w=jnp.zeros((d_model, p_pad), jnp.float32)
                 .at[:, :polarities_dim].set(dense_w).astype(bf),
        dense_b=jnp.zeros((1, p_pad), jnp.float32).at[:, :polarities_dim].set(dense_b),
    )


# ----------------------------------------------------------------------------
# Host wrapper
# ----------------------------------------------------------------------------
def transformer_inter_encoder_forward(params, out_name, top_vecs, mask, *, heads, polarities_dim):
    B, S, D = top_vecs.shape
    L = params['wqkv'].shape[0]
    QKVW = params['wqkv'].shape[-1]
    HP = params['wo'].shape[1]
    dh_pad = HP // heads
    dh = D // heads
    d_ff = params['w1'].shape[-1]
    p_pad = params['dense_w'].shape[-1]
    pe = params['pe'][:S]

    out_mode = out_name if out_name in ('pool', 'avg') else 'tokens'

    # batch tiling: >=2 "parallel" blocks when possible (v7x has 2 TensorCores); keep B % Bb == 0
    Bb = B if B < 2 else B // 2
    while B % Bb:
        Bb -= 1
    grid = (B // Bb, L)

    maskf = mask.astype(jnp.float32)
    mask_keys = maskf[:, None, :]          # (B, 1, S)  -> additive attention bias
    mask_cols = maskf[:, :, None]          # (B, S, 1)  -> input masking at layer 0

    kernel = functools.partial(transformer_inter_encoder_kernel,
                               heads=heads, dh=dh, dh_pad=dh_pad, out_mode=out_mode)

    def layer_spec(a):
        nd = a.ndim
        return pl.BlockSpec((1,) + a.shape[1:], lambda b, l, nd=nd: (l,) + (0,) * (nd - 1))

    def const_spec(a):
        nd = a.ndim
        return pl.BlockSpec(a.shape, lambda b, l, nd=nd: (0,) * nd)

    layer_weights = [params[n] for n in LAYER_WEIGHT_NAMES]
    final_weights = [params[n] for n in FINAL_WEIGHT_NAMES]

    in_specs = ([pl.BlockSpec((Bb, S, D), lambda b, l: (b, 0, 0)),
                 pl.BlockSpec((Bb, 1, S), lambda b, l: (b, 0, 0)),
                 pl.BlockSpec((Bb, S, 1), lambda b, l: (b, 0, 0)),
                 const_spec(pe)]
                + [layer_spec(w) for w in layer_weights]
                + [const_spec(w) for w in final_weights])

    if out_mode == 'tokens':
        out_shape = jax.ShapeDtypeStruct((B, S, p_pad), jnp.float32)
        out_spec = pl.BlockSpec((Bb, S, p_pad), lambda b, l: (b, 0, 0))
        out_block_elems = Bb * S * p_pad
    else:
        out_shape = jax.ShapeDtypeStruct((B, 1, p_pad), jnp.float32)
        out_spec = pl.BlockSpec((Bb, 1, p_pad), lambda b, l: (b, 0, 0))
        out_block_elems = Bb * p_pad

    # ---- explicit VMEM budget: one layer double-buffered + constants + activations ----
    layer_bytes = sum(math.prod(w.shape[1:]) * w.dtype.itemsize for w in layer_weights)
    const_bytes = (sum(math.prod(w.shape) * w.dtype.itemsize for w in final_weights)
                   + math.prod(pe.shape) * 4)
    io_bytes = Bb * S * D * 4 + 2 * Bb * S * 4 + out_block_elems * 4
    act_bytes = 4 * Bb * S * max(QKVW, d_ff, 2 * D) * 4 + 3 * Bb * S * S * 4
    scratch_bytes = Bb * S * D * 4
    vmem_limit = int(1.3 * (2 * layer_bytes + 2 * const_bytes + 2 * io_bytes
                            + scratch_bytes + act_bytes))
    vmem_limit = min(max(vmem_limit, 32 << 20), 100 << 20)

    # ---- advisory cost estimate ----
    tokens = B * S
    flops = (2 * tokens * L * (D * QKVW + HP * D + 2 * D * d_ff)
             + 4 * B * heads * S * S * dh_pad * L
             + 2 * B * (D * D + D * p_pad))
    transcendentals = L * (B * heads * S * S + tokens * d_ff) + B * D
    bytes_accessed = (sum(math.prod(params[n].shape) * params[n].dtype.itemsize for n in params)
                      + top_vecs.size * 4 + mask.size * 4 + math.prod(out_shape.shape) * 4)

    out = pl.pallas_call(
        kernel,
        out_shape=out_shape,
        grid=grid,
        in_specs=in_specs,
        out_specs=out_spec,
        scratch_shapes=[pltpu.VMEM((Bb * S, D), jnp.float32)],   # residual stream, carried over l
        compiler_params=pltpu.CompilerParams(
            dimension_semantics=("parallel", "arbitrary"),
            vmem_limit_bytes=vmem_limit),
        cost_estimate=pl.CostEstimate(flops=int(flops),
                                      transcendentals=int(transcendentals),
                                      bytes_accessed=int(bytes_accessed)),
    )(top_vecs, mask_keys, mask_cols, pe, *layer_weights, *final_weights)

    if out_mode == 'tokens':
        return out[..., :polarities_dim]
    return out[:, 0, :polarities_dim]                            # un-pad classifier output


if __name__ == "__main__":
    B, S = 2, 8
    D_MODEL, D_FF, HEADS = 128, 256, 4
    NUM_LAYERS = 2
    POLARITIES = 3

    key = jax.random.PRNGKey(0)
    kp, kx = jax.random.split(key)
    params = init_params(kp, D_MODEL, D_FF, HEADS, NUM_LAYERS, POLARITIES)

    top_vecs = jax.random.normal(kx, (B, S, D_MODEL), dtype=jnp.float32)
    mask = jnp.ones((B, S), jnp.float32).at[1, 6:].set(0.0)      # last 2 sentences of sample 1 padded

    logits = transformer_inter_encoder_forward(params, 'pool', top_vecs, mask,
                                               heads=HEADS, polarities_dim=POLARITIES)
    logits = jax.block_until_ready(logits)
    assert logits.shape == (B, POLARITIES)
    assert bool(jnp.all(jnp.isfinite(logits)))
    print("KERNEL_OK")
</pallas_src>

<mosaic_0001>
module attributes {stable_mosaic.version = 11 : i64} {
  func.func @transformer_inter_encoder_kernel(%arg0: i32, %arg1: i32, %arg2: memref<1x8x128xf32, #tpu.memory_space<vmem>>, %arg3: memref<1x1x8xf32, #tpu.memory_space<vmem>>, %arg4: memref<1x8x1xf32, #tpu.memory_space<vmem>>, %arg5: memref<8x128xf32, #tpu.memory_space<vmem>>, %arg6: memref<1x1x128xf32, #tpu.memory_space<vmem>>, %arg7: memref<1x1x128xf32, #tpu.memory_space<vmem>>, %arg8: memref<1x128x1536xbf16, #tpu.memory_space<vmem>>, %arg9: memref<1x1x1536xf32, #tpu.memory_space<vmem>>, %arg10: memref<1x512x128xbf16, #tpu.memory_space<vmem>>, %arg11: memref<1x1x128xf32, #tpu.memory_space<vmem>>, %arg12: memref<1x1x128xf32, #tpu.memory_space<vmem>>, %arg13: memref<1x1x128xf32, #tpu.memory_space<vmem>>, %arg14: memref<1x128x256xbf16, #tpu.memory_space<vmem>>, %arg15: memref<1x1x256xf32, #tpu.memory_space<vmem>>, %arg16: memref<1x256x128xbf16, #tpu.memory_space<vmem>>, %arg17: memref<1x1x128xf32, #tpu.memory_space<vmem>>, %arg18: memref<1x128xf32, #tpu.memory_space<vmem>>, %arg19: memref<1x128xf32, #tpu.memory_space<vmem>>, %arg20: memref<128x128xbf16, #tpu.memory_space<vmem>>, %arg21: memref<1x128xf32, #tpu.memory_space<vmem>>, %arg22: memref<128x128xbf16, #tpu.memory_space<vmem>>, %arg23: memref<1x128xf32, #tpu.memory_space<vmem>>, %arg24: memref<1x1x128xf32, #tpu.memory_space<vmem>>, %arg25: memref<8x128xf32, #tpu.memory_space<vmem>>) attributes {dimension_semantics = [#tpu.dimension_semantics<parallel>, #tpu.dimension_semantics<arbitrary>], iteration_bounds = array<i64: 2, 2>, scalar_prefetch = 0 : i64, scratch_operands = 1 : i64, tpu.core_type = #tpu.core_type<tc>, window_params = [{transform_indices = @transform_0, window_bounds = array<i64: 1, 8, 128>}, {transform_indices = @transform_1, window_bounds = array<i64: 1, 1, 8>}, {transform_indices = @transform_2, window_bounds = array<i64: 1, 8, 1>}, {pipeline_mode = #tpu.pipeline_mode<synchronous>, transform_indices = @transform_3, window_bounds = array<i64: 8, 128>}, {transform_indices = @transform_4, window_bounds = array<i64: 1, 1, 128>}, {transform_indices = @transform_5, window_bounds = array<i64: 1, 1, 128>}, {transform_indices = @transform_6, window_bounds = array<i64: 1, 128, 1536>}, {transform_indices = @transform_7, window_bounds = array<i64: 1, 1, 1536>}, {transform_indices = @transform_8, window_bounds = array<i64: 1, 512, 128>}, {transform_indices = @transform_9, window_bounds = array<i64: 1, 1, 128>}, {transform_indices = @transform_10, window_bounds = array<i64: 1, 1, 128>}, {transform_indices = @transform_11, window_bounds = array<i64: 1, 1, 128>}, {transform_indices = @transform_12, window_bounds = array<i64: 1, 128, 256>}, {transform_indices = @transform_13, window_bounds = array<i64: 1, 1, 256>}, {transform_indices = @transform_14, window_bounds = array<i64: 1, 256, 128>}, {transform_indices = @transform_15, window_bounds = array<i64: 1, 1, 128>}, {pipeline_mode = #tpu.pipeline_mode<synchronous>, transform_indices = @transform_16, window_bounds = array<i64: 1, 128>}, {pipeline_mode = #tpu.pipeline_mode<synchronous>, transform_indices = @transform_17, window_bounds = array<i64: 1, 128>}, {pipeline_mode = #tpu.pipeline_mode<synchronous>, transform_indices = @transform_18, window_bounds = array<i64: 128, 128>}, {pipeline_mode = #tpu.pipeline_mode<synchronous>, transform_indices = @transform_19, window_bounds = array<i64: 1, 128>}, {pipeline_mode = #tpu.pipeline_mode<synchronous>, transform_indices = @transform_20, window_bounds = array<i64: 128, 128>}, {pipeline_mode = #tpu.pipeline_mode<synchronous>, transform_indices = @transform_21, window_bounds = array<i64: 1, 128>}, {transform_indices = @transform_22, window_bounds = array<i64: 1, 1, 128>}]} {
    %c0_i32 = arith.constant 0 : i32
    %0 = arith.cmpi eq, %arg1, %c0_i32 : i32
    %1 = arith.extui %0 : i1 to i32
    %c0_i32_0 = arith.constant 0 : i32
    %2 = arith.cmpi ne, %1, %c0_i32_0 : i32
    scf.if %2 {
      %c0_94 = arith.constant 0 : index
      %c0_95 = arith.constant 0 : index
      %c0_96 = arith.constant 0 : index
      %225 = vector.load %arg2[%c0_94, %c0_95, %c0_96] : memref<1x8x128xf32, #tpu.memory_space<vmem>>, vector<1x8x128xf32>
      %c0_97 = arith.constant 0 : index
      %c0_98 = arith.constant 0 : index
      %c0_99 = arith.constant 0 : index
      %226 = vector.load %arg4[%c0_97, %c0_98, %c0_99] : memref<1x8x1xf32, #tpu.memory_space<vmem>>, vector<1x8x1xf32>
      %227 = vector.broadcast %226 : vector<1x8x1xf32> to vector<1x8x128xf32>
      %228 = arith.mulf %225, %227 : vector<1x8x128xf32>
      %c0_100 = arith.constant 0 : index
      %c0_101 = arith.constant 0 : index
      %229 = vector.load %arg5[%c0_100, %c0_101] : memref<8x128xf32, #tpu.memory_space<vmem>>, vector<8x128xf32>
      %230 = vector.shape_cast %229 : vector<8x128xf32> to vector<1x8x128xf32>
      %231 = arith.addf %228, %230 : vector<1x8x128xf32>
      %232 = vector.shape_cast %231 : vector<1x8x128xf32> to vector<8x128xf32>
      %c0_102 = arith.constant 0 : index
      %c0_103 = arith.constant 0 : index
      %233 = vector.load %arg25[%c0_102, %c0_103] : memref<8x128xf32, #tpu.memory_space<vmem>>, vector<8x128xf32>
      tpu.vector_store %arg25[%c0_102, %c0_103], %232 {strides = array<i32>} : memref<8x128xf32, #tpu.memory_space<vmem>>, vector<8x128xf32>,
    } else {
    }
    %c0 = arith.constant 0 : index
    %c0_1 = arith.constant 0 : index
    %3 = vector.load %arg25[%c0, %c0_1] : memref<8x128xf32, #tpu.memory_space<vmem>>, vector<8x128xf32>
    %c0_2 = arith.constant 0 : index
    %c0_3 = arith.constant 0 : index
    %c0_4 = arith.constant 0 : index
    %4 = vector.load %arg3[%c0_2, %c0_3, %c0_4] : memref<1x1x8xf32, #tpu.memory_space<vmem>>, vector<1x1x8xf32>
    %cst = arith.constant 1.000000e+00 : f32
    %5 = vector.broadcast %cst : f32 to vector<1x1x8xf32>
    %6 = arith.subf %4, %5 : vector<1x1x8xf32>
    %cst_5 = arith.constant 9.99999984E+17 : f32
    %7 = vector.broadcast %cst_5 : f32 to vector<1x1x8xf32>
    %8 = arith.mulf %6, %7 : vector<1x1x8xf32>
    %c0_6 = arith.constant 0 : index
    %c0_7 = arith.constant 0 : index
    %c0_8 = arith.constant 0 : index
    %9 = vector.load %arg6[%c0_6, %c0_7, %c0_8] : memref<1x1x128xf32, #tpu.memory_space<vmem>>, vector<1x1x128xf32>
    %10 = vector.shape_cast %9 : vector<1x1x128xf32> to vector<1x128xf32>
    %c0_9 = arith.constant 0 : index
    %c0_10 = arith.constant 0 : index
    %c0_11 = arith.constant 0 : index
    %11 = vector.load %arg7[%c0_9, %c0_10, %c0_11] : memref<1x1x128xf32, #tpu.memory_space<vmem>>, vector<1x1x128xf32>
    %12 = vector.shape_cast %11 : vector<1x1x128xf32> to vector<1x128xf32>
    %cst_12 = arith.constant dense<0.000000e+00> : vector<8xf32>
    %13 = vector.multi_reduction <add>, %3, %cst_12 [1] : vector<8x128xf32> to vector<8xf32>
    %14 = vector.shape_cast %13 : vector<8xf32> to vector<8x1xf32>
    %cst_13 = arith.constant 1.280000e+02 : f32
    %15 = vector.broadcast %cst_13 : f32 to vector<8x1xf32>
    %16 = arith.divf %14, %15 : vector<8x1xf32>
    %17 = vector.broadcast %16 : vector<8x1xf32> to vector<8x128xf32>
    %18 = arith.subf %3, %17 : vector<8x128xf32>
    %19 = arith.mulf %18, %18 : vector<8x128xf32>
    %cst_14 = arith.constant dense<0.000000e+00> : vector<8xf32>
    %20 = vector.multi_reduction <add>, %19, %cst_14 [1] : vector<8x128xf32> to vector<8xf32>
    %21 = vector.shape_cast %20 : vector<8xf32> to vector<8x1xf32>
    %cst_15 = arith.constant 1.280000e+02 : f32
    %22 = vector.broadcast %cst_15 : f32 to vector<8x1xf32>
    %23 = arith.divf %21, %22 : vector<8x1xf32>
    %cst_16 = arith.constant 9.99999997E-7 : f32
    %24 = vector.broadcast %cst_16 : f32 to vector<8x1xf32>
    %25 = arith.addf %23, %24 : vector<8x1xf32>
    %26 = math.rsqrt %25 : vector<8x1xf32>
    %27 = vector.broadcast %26 : vector<8x1xf32> to vector<8x128xf32>
    %28 = arith.mulf %18, %27 : vector<8x128xf32>
    %29 = vector.broadcast %10 : vector<1x128xf32> to vector<8x128xf32>
    %30 = arith.mulf %28, %29 : vector<8x128xf32>
    %31 = vector.broadcast %12 : vector<1x128xf32> to vector<8x128xf32>
    %32 = arith.addf %30, %31 : vector<8x128xf32>
    %c0_i32_17 = arith.constant 0 : i32
    %33 = arith.cmpi sgt, %arg1, %c0_i32_17 : i32
    %34 = arith.extui %33 : i1 to i32
    %35 = arith.sitofp %34 : i32 to f32
    %36 = arith.subf %32, %3 : vector<8x128xf32>
    %37 = vector.broadcast %35 : f32 to vector<8x128xf32>
    %38 = arith.mulf %37, %36 : vector<8x128xf32>
    %39 = arith.addf %3, %38 : vector<8x128xf32>
    %40 = arith.truncf %39 : vector<8x128xf32> to vector<8x128xbf16>
    %c0_18 = arith.constant 0 : index
    %c0_19 = arith.constant 0 : index
    %c0_20 = arith.constant 0 : index
    %41 = vector.load %arg8[%c0_18, %c0_19, %c0_20] : memref<1x128x1536xbf16, #tpu.memory_space<vmem>>, vector<1x128x1536xbf16>
    %42 = vector.shape_cast %41 : vector<1x128x1536xbf16> to vector<128x1536xbf16>
    %cst_21 = arith.constant dense<0.000000e+00> : vector<8x1536xf32>
    %43 = tpu.matmul %40, %42, %cst_21 {dimension_numbers = #tpu.dot_dimension_numbers<[1], [0], [0], [1], [0, 0, 1, 1], [], []>} : vector<8x128xbf16>, vector<128x1536xbf16>, vector<8x1536xf32> -> vector<8x1536xf32>
    %c0_22 = arith.constant 0 : index
    %c0_23 = arith.constant 0 : index
    %c0_24 = arith.constant 0 : index
    %44 = vector.load %arg9[%c0_22, %c0_23, %c0_24] : memref<1x1x1536xf32, #tpu.memory_space<vmem>>, vector<1x1x1536xf32>
    %45 = vector.shape_cast %44 : vector<1x1x1536xf32> to vector<1x1536xf32>
    %46 = vector.broadcast %45 : vector<1x1536xf32> to vector<8x1536xf32>
    %47 = arith.addf %43, %46 : vector<8x1536xf32>
    %48 = vector.shape_cast %47 : vector<8x1536xf32> to vector<1x8x1536xf32>
    %cst_25 = arith.constant 0.000000e+00 : f32
    %49 = vector.broadcast %cst_25 : f32 to vector<8x128xf32>
    %50 = vector.extract_strided_slice %48 {offsets = [0, 0, 0], sizes = [1, 8, 128], strides = [1, 1, 1]} : vector<1x8x1536xf32> to vector<1x8x128xf32>
    %cst_26 = arith.constant 0.176776692 : f32
    %51 = vector.broadcast %cst_26 : f32 to vector<1x8x128xf32>
    %52 = arith.mulf %50, %51 : vector<1x8x128xf32>
    %53 = arith.truncf %52 : vector<1x8x128xf32> to vector<1x8x128xbf16>
    %54 = vector.extract_strided_slice %48 {offsets = [0, 0, 512], sizes = [1, 8, 128], strides = [1, 1, 1]} : vector<1x8x1536xf32> to vector<1x8x128xf32>
    %55 = arith.truncf %54 : vector<1x8x128xf32> to vector<1x8x128xbf16>
    %56 = vector.extract_strided_slice %48 {offsets = [0, 0, 1024], sizes = [1, 8, 128], strides = [1, 1, 1]} : vector<1x8x1536xf32> to vector<1x8x128xf32>
    %57 = arith.truncf %56 : vector<1x8x128xf32> to vector<1x8x128xbf16>
    "tpu.trace_start"() <{level = 10 : i32, message = "bqd,bkd->bqk"}> : () -> ()
    %cst_27 = arith.constant dense<0.000000e+00> : vector<1x8x8xf32>
    %58 = tpu.matmul %53, %55, %cst_27 {dimension_numbers = #tpu.dot_dimension_numbers<[2], [2], [1], [1], [0, 0, 0, 1, 1, 1], [0], [0]>} : vector<1x8x128xbf16>, vector<1x8x128xbf16>, vector<1x8x8xf32> -> vector<1x8x8xf32>
    "tpu.trace_stop"() : () -> ()
    %59 = vector.broadcast %8 : vector<1x1x8xf32> to vector<1x8x8xf32>
    %60 = arith.addf %58, %59 : vector<1x8x8xf32>
    %cst_28 = arith.constant dense<0xFF800000> : vector<1x8xf32>
    %61 = vector.multi_reduction <maximumf>, %60, %cst_28 [2] : vector<1x8x8xf32> to vector<1x8xf32>
    %62 = vector.shape_cast %61 : vector<1x8xf32> to vector<1x8x1xf32>
    %63 = vector.broadcast %62 : vector<1x8x1xf32> to vector<1x8x8xf32>
    %64 = arith.subf %60, %63 : vector<1x8x8xf32>
    %65 = math.exp %64 : vector<1x8x8xf32>
    %cst_29 = arith.constant dense<0.000000e+00> : vector<1x8xf32>
    %66 = vector.multi_reduction <add>, %65, %cst_29 [2] : vector<1x8x8xf32> to vector<1x8xf32>
    %67 = vector.shape_cast %66 : vector<1x8xf32> to vector<1x8x1xf32>
    %68 = vector.broadcast %67 : vector<1x8x1xf32> to vector<1x8x8xf32>
    %69 = arith.divf %65, %68 : vector<1x8x8xf32>
    %70 = arith.truncf %69 : vector<1x8x8xf32> to vector<1x8x8xbf16>
    "tpu.trace_start"() <{level = 10 : i32, message = "bqk,bkd->bqd"}> : () -> ()
    %cst_30 = arith.constant dense<0.000000e+00> : vector<1x8x128xf32>
    %71 = tpu.matmul %70, %57, %cst_30 {dimension_numbers = #tpu.dot_dimension_numbers<[2], [1], [1], [2], [0, 0, 0, 1, 1, 2], [0], [0]>} : vector<1x8x8xbf16>, vector<1x8x128xbf16>, vector<1x8x128xf32> -> vector<1x8x128xf32>
    "tpu.trace_stop"() : () -> ()
    %72 = vector.shape_cast %71 : vector<1x8x128xf32> to vector<8x128xf32>
    %73 = arith.truncf %72 : vector<8x128xf32> to vector<8x128xbf16>
    %c0_31 = arith.constant 0 : index
    %c0_32 = arith.constant 0 : index
    %c0_33 = arith.constant 0 : index
    %74 = vector.load %arg10[%c0_31, %c0_32, %c0_33] : memref<1x512x128xbf16, #tpu.memory_space<vmem>>, vector<1x128x128xbf16>
    %75 = vector.shape_cast %74 : vector<1x128x128xbf16> to vector<128x128xbf16>
    %cst_34 = arith.constant dense<0.000000e+00> : vector<8x128xf32>
    %76 = tpu.matmul %73, %75, %cst_34 {dimension_numbers = #tpu.dot_dimension_numbers<[1], [0], [0], [1], [0, 0, 1, 1], [], []>} : vector<8x128xbf16>, vector<128x128xbf16>, vector<8x128xf32> -> vector<8x128xf32>
    %77 = arith.addf %49, %76 : vector<8x128xf32>
    %78 = vector.extract_strided_slice %48 {offsets = [0, 0, 128], sizes = [1, 8, 128], strides = [1, 1, 1]} : vector<1x8x1536xf32> to vector<1x8x128xf32>
    %cst_35 = arith.constant 0.176776692 : f32
    %79 = vector.broadcast %cst_35 : f32 to vector<1x8x128xf32>
    %80 = arith.mulf %78, %79 : vector<1x8x128xf32>
    %81 = arith.truncf %80 : vector<1x8x128xf32> to vector<1x8x128xbf16>
    %82 = vector.extract_strided_slice %48 {offsets = [0, 0, 640], sizes = [1, 8, 128], strides = [1, 1, 1]} : vector<1x8x1536xf32> to vector<1x8x128xf32>
    %83 = arith.truncf %82 : vector<1x8x128xf32> to vector<1x8x128xbf16>
    %84 = vector.extract_strided_slice %48 {offsets = [0, 0, 1152], sizes = [1, 8, 128], strides = [1, 1, 1]} : vector<1x8x1536xf32> to vector<1x8x128xf32>
    %85 = arith.truncf %84 : vector<1x8x128xf32> to vector<1x8x128xbf16>
    "tpu.trace_start"() <{level = 10 : i32, message = "bqd,bkd->bqk"}> : () -> ()
    %cst_36 = arith.constant dense<0.000000e+00> : vector<1x8x8xf32>
    %86 = tpu.matmul %81, %83, %cst_36 {dimension_numbers = #tpu.dot_dimension_numbers<[2], [2], [1], [1], [0, 0, 0, 1, 1, 1], [0], [0]>} : vector<1x8x128xbf16>, vector<1x8x128xbf16>, vector<1x8x8xf32> -> vector<1x8x8xf32>
    "tpu.trace_stop"() : () -> ()
    %87 = vector.broadcast %8 : vector<1x1x8xf32> to vector<1x8x8xf32>
    %88 = arith.addf %86, %87 : vector<1x8x8xf32>
    %cst_37 = arith.constant dense<0xFF800000> : vector<1x8xf32>
    %89 = vector.multi_reduction <maximumf>, %88, %cst_37 [2] : vector<1x8x8xf32> to vector<1x8xf32>
    %90 = vector.shape_cast %89 : vector<1x8xf32> to vector<1x8x1xf32>
    %91 = vector.broadcast %90 : vector<1x8x1xf32> to vector<1x8x8xf32>
    %92 = arith.subf %88, %91 : vector<1x8x8xf32>
    %93 = math.exp %92 : vector<1x8x8xf32>
    %cst_38 = arith.constant dense<0.000000e+00> : vector<1x8xf32>
    %94 = vector.multi_reduction <add>, %93, %cst_38 [2] : vector<1x8x8xf32> to vector<1x8xf32>
    %95 = vector.shape_cast %94 : vector<1x8xf32> to vector<1x8x1xf32>
    %96 = vector.broadcast %95 : vector<1x8x1xf32> to vector<1x8x8xf32>
    %97 = arith.divf %93, %96 : vector<1x8x8xf32>
    %98 = arith.truncf %97 : vector<1x8x8xf32> to vector<1x8x8xbf16>
    "tpu.trace_start"() <{level = 10 : i32, message = "bqk,bkd->bqd"}> : () -> ()
    %cst_39 = arith.constant dense<0.000000e+00> : vector<1x8x128xf32>
    %99 = tpu.matmul %98, %85, %cst_39 {dimension_numbers = #tpu.dot_dimension_numbers<[2], [1], [1], [2], [0, 0, 0, 1, 1, 2], [0], [0]>} : vector<1x8x8xbf16>, vector<1x8x128xbf16>, vector<1x8x128xf32> -> vector<1x8x128xf32>
    "tpu.trace_stop"() : () -> ()
    %100 = vector.shape_cast %99 : vector<1x8x128xf32> to vector<8x128xf32>
    %101 = arith.truncf %100 : vector<8x128xf32> to vector<8x128xbf16>
    %c0_40 = arith.constant 0 : index
    %c128 = arith.constant 128 : index
    %c0_41 = arith.constant 0 : index
    %102 = vector.load %arg10[%c0_40, %c128, %c0_41] : memref<1x512x128xbf16, #tpu.memory_space<vmem>>, vector<1x128x128xbf16>
    %103 = vector.shape_cast %102 : vector<1x128x128xbf16> to vector<128x128xbf16>
    %cst_42 = arith.constant dense<0.000000e+00> : vector<8x128xf32>
    %104 = tpu.matmul %101, %103, %cst_42 {dimension_numbers = #tpu.dot_dimension_numbers<[1], [0], [0], [1], [0, 0, 1, 1], [], []>} : vector<8x128xbf16>, vector<128x128xbf16>, vector<8x128xf32> -> vector<8x128xf32>
    %105 = arith.addf %77, %104 : vector<8x128xf32>
    %106 = vector.extract_strided_slice %48 {offsets = [0, 0, 256], sizes = [1, 8, 128], strides = [1, 1, 1]} : vector<1x8x1536xf32> to vector<1x8x128xf32>
    %cst_43 = arith.constant 0.176776692 : f32
    %107 = vector.broadcast %cst_43 : f32 to vector<1x8x128xf32>
    %108 = arith.mulf %106, %107 : vector<1x8x128xf32>
    %109 = arith.truncf %108 : vector<1x8x128xf32> to vector<1x8x128xbf16>
    %110 = vector.extract_strided_slice %48 {offsets = [0, 0, 768], sizes = [1, 8, 128], strides = [1, 1, 1]} : vector<1x8x1536xf32> to vector<1x8x128xf32>
    %111 = arith.truncf %110 : vector<1x8x128xf32> to vector<1x8x128xbf16>
    %112 = vector.extract_strided_slice %48 {offsets = [0, 0, 1280], sizes = [1, 8, 128], strides = [1, 1, 1]} : vector<1x8x1536xf32> to vector<1x8x128xf32>
    %113 = arith.truncf %112 : vector<1x8x128xf32> to vector<1x8x128xbf16>
    "tpu.trace_start"() <{level = 10 : i32, message = "bqd,bkd->bqk"}> : () -> ()
    %cst_44 = arith.constant dense<0.000000e+00> : vector<1x8x8xf32>
    %114 = tpu.matmul %109, %111, %cst_44 {dimension_numbers = #tpu.dot_dimension_numbers<[2], [2], [1], [1], [0, 0, 0, 1, 1, 1], [0], [0]>} : vector<1x8x128xbf16>, vector<1x8x128xbf16>, vector<1x8x8xf32> -> vector<1x8x8xf32>
    "tpu.trace_stop"() : () -> ()
    %115 = vector.broadcast %8 : vector<1x1x8xf32> to vector<1x8x8xf32>
    %116 = arith.addf %114, %115 : vector<1x8x8xf32>
    %cst_45 = arith.constant dense<0xFF800000> : vector<1x8xf32>
    %117 = vector.multi_reduction <maximumf>, %116, %cst_45 [2] : vector<1x8x8xf32> to vector<1x8xf32>
    %118 = vector.shape_cast %117 : vector<1x8xf32> to vector<1x8x1xf32>
    %119 = vector.broadcast %118 : vector<1x8x1xf32> to vector<1x8x8xf32>
    %120 = arith.subf %116, %119 : vector<1x8x8xf32>
    %121 = math.exp %120 : vector<1x8x8xf32>
    %cst_46 = arith.constant dense<0.000000e+00> : vector<1x8xf32>
    %122 = vector.multi_reduction <add>, %121, %cst_46 [2] : vector<1x8x8xf32> to vector<1x8xf32>
    %123 = vector.shape_cast %122 : vector<1x8xf32> to vector<1x8x1xf32>
    %124 = vector.broadcast %123 : vector<1x8x1xf32> to vector<1x8x8xf32>
    %125 = arith.divf %121, %124 : vector<1x8x8xf32>
    %126 = arith.truncf %125 : vector<1x8x8xf32> to vector<1x8x8xbf16>
    "tpu.trace_start"() <{level = 10 : i32, message = "bqk,bkd->bqd"}> : () -> ()
    %cst_47 = arith.constant dense<0.000000e+00> : vector<1x8x128xf32>
    %127 = tpu.matmul %126, %113, %cst_47 {dimension_numbers = #tpu.dot_dimension_numbers<[2], [1], [1], [2], [0, 0, 0, 1, 1, 2], [0], [0]>} : vector<1x8x8xbf16>, vector<1x8x128xbf16>, vector<1x8x128xf32> -> vector<1x8x128xf32>
    "tpu.trace_stop"() : () -> ()
    %128 = vector.shape_cast %127 : vector<1x8x128xf32> to vector<8x128xf32>
    %129 = arith.truncf %128 : vector<8x128xf32> to vector<8x128xbf16>
    %c0_48 = arith.constant 0 : index
    %c256 = arith.constant 256 : index
    %c0_49 = arith.constant 0 : index
    %130 = vector.load %arg10[%c0_48, %c256, %c0_49] : memref<1x512x128xbf16, #tpu.memory_space<vmem>>, vector<1x128x128xbf16>
    %131 = vector.shape_cast %130 : vector<1x128x128xbf16> to vector<128x128xbf16>
    %cst_50 = arith.constant dense<0.000000e+00> : vector<8x128xf32>
    %132 = tpu.matmul %129, %131, %cst_50 {dimension_numbers = #tpu.dot_dimension_numbers<[1], [0], [0], [1], [0, 0, 1, 1], [], []>} : vector<8x128xbf16>, vector<128x128xbf16>, vector<8x128xf32> -> vector<8x128xf32>
    %133 = arith.addf %105, %132 : vector<8x128xf32>
    %134 = vector.extract_strided_slice %48 {offsets = [0, 0, 384], sizes = [1, 8, 128], strides = [1, 1, 1]} : vector<1x8x1536xf32> to vector<1x8x128xf32>
    %cst_51 = arith.constant 0.176776692 : f32
    %135 = vector.broadcast %cst_51 : f32 to vector<1x8x128xf32>
    %136 = arith.mulf %134, %135 : vector<1x8x128xf32>
    %137 = arith.truncf %136 : vector<1x8x128xf32> to vector<1x8x128xbf16>
    %138 = vector.extract_strided_slice %48 {offsets = [0, 0, 896], sizes = [1, 8, 128], strides = [1, 1, 1]} : vector<1x8x1536xf32> to vector<1x8x128xf32>
    %139 = arith.truncf %138 : vector<1x8x128xf32> to vector<1x8x128xbf16>
    %140 = vector.extract_strided_slice %48 {offsets = [0, 0, 1408], sizes = [1, 8, 128], strides = [1, 1, 1]} : vector<1x8x1536xf32> to vector<1x8x128xf32>
    %141 = arith.truncf %140 : vector<1x8x128xf32> to vector<1x8x128xbf16>
    "tpu.trace_start"() <{level = 10 : i32, message = "bqd,bkd->bqk"}> : () -> ()
    %cst_52 = arith.constant dense<0.000000e+00> : vector<1x8x8xf32>
    %142 = tpu.matmul %137, %139, %cst_52 {dimension_numbers = #tpu.dot_dimension_numbers<[2], [2], [1], [1], [0, 0, 0, 1, 1, 1], [0], [0]>} : vector<1x8x128xbf16>, vector<1x8x128xbf16>, vector<1x8x8xf32> -> vector<1x8x8xf32>
    "tpu.trace_stop"() : () -> ()
    %143 = vector.broadcast %8 : vector<1x1x8xf32> to vector<1x8x8xf32>
    %144 = arith.addf %142, %143 : vector<1x8x8xf32>
    %cst_53 = arith.constant dense<0xFF800000> : vector<1x8xf32>
    %145 = vector.multi_reduction <maximumf>, %144, %cst_53 [2] : vector<1x8x8xf32> to vector<1x8xf32>
    %146 = vector.shape_cast %145 : vector<1x8xf32> to vector<1x8x1xf32>
    %147 = vector.broadcast %146 : vector<1x8x1xf32> to vector<1x8x8xf32>
    %148 = arith.subf %144, %147 : vector<1x8x8xf32>
    %149 = math.exp %148 : vector<1x8x8xf32>
    %cst_54 = arith.constant dense<0.000000e+00> : vector<1x8xf32>
    %150 = vector.multi_reduction <add>, %149, %cst_54 [2] : vector<1x8x8xf32> to vector<1x8xf32>
    %151 = vector.shape_cast %150 : vector<1x8xf32> to vector<1x8x1xf32>
    %152 = vector.broadcast %151 : vector<1x8x1xf32> to vector<1x8x8xf32>
    %153 = arith.divf %149, %152 : vector<1x8x8xf32>
    %154 = arith.truncf %153 : vector<1x8x8xf32> to vector<1x8x8xbf16>
    "tpu.trace_start"() <{level = 10 : i32, message = "bqk,bkd->bqd"}> : () -> ()
    %cst_55 = arith.constant dense<0.000000e+00> : vector<1x8x128xf32>
    %155 = tpu.matmul %154, %141, %cst_55 {dimension_numbers = #tpu.dot_dimension_numbers<[2], [1], [1], [2], [0, 0, 0, 1, 1, 2], [0], [0]>} : vector<1x8x8xbf16>, vector<1x8x128xbf16>, vector<1x8x128xf32> -> vector<1x8x128xf32>
    "tpu.trace_stop"() : () -> ()
    %156 = vector.shape_cast %155 : vector<1x8x128xf32> to vector<8x128xf32>
    %157 = arith.truncf %156 : vector<8x128xf32> to vector<8x128xbf16>
    %c0_56 = arith.constant 0 : index
    %c384 = arith.constant 384 : index
    %c0_57 = arith.constant 0 : index
    %158 = vector.load %arg10[%c0_56, %c384, %c0_57] : memref<1x512x128xbf16, #tpu.memory_space<vmem>>, vector<1x128x128xbf16>
    %159 = vector.shape_cast %158 : vector<1x128x128xbf16> to vector<128x128xbf16>
    %cst_58 = arith.constant dense<0.000000e+00> : vector<8x128xf32>
    %160 = tpu.matmul %157, %159, %cst_58 {dimension_numbers = #tpu.dot_dimension_numbers<[1], [0], [0], [1], [0, 0, 1, 1], [], []>} : vector<8x128xbf16>, vector<128x128xbf16>, vector<8x128xf32> -> vector<8x128xf32>
    %161 = arith.addf %133, %160 : vector<8x128xf32>
    %c0_59 = arith.constant 0 : index
    %c0_60 = arith.constant 0 : index
    %c0_61 = arith.constant 0 : index
    %162 = vector.load %arg11[%c0_59, %c0_60, %c0_61] : memref<1x1x128xf32, #tpu.memory_space<vmem>>, vector<1x1x128xf32>
    %163 = vector.shape_cast %162 : vector<1x1x128xf32> to vector<1x128xf32>
    %164 = vector.broadcast %163 : vector<1x128xf32> to vector<8x128xf32>
    %165 = arith.addf %161, %164 : vector<8x128xf32>
    %166 = arith.addf %165, %3 : vector<8x128xf32>
    %c0_62 = arith.constant 0 : index
    %c0_63 = arith.constant 0 : index
    %c0_64 = arith.constant 0 : index
    %167 = vector.load %arg12[%c0_62, %c0_63, %c0_64] : memref<1x1x128xf32, #tpu.memory_space<vmem>>, vector<1x1x128xf32>
    %168 = vector.shape_cast %167 : vector<1x1x128xf32> to vector<1x128xf32>
    %c0_65 = arith.constant 0 : index
    %c0_66 = arith.constant 0 : index
    %c0_67 = arith.constant 0 : index
    %169 = vector.load %arg13[%c0_65, %c0_66, %c0_67] : memref<1x1x128xf32, #tpu.memory_space<vmem>>, vector<1x1x128xf32>
    %170 = vector.shape_cast %169 : vector<1x1x128xf32> to vector<1x128xf32>
    %cst_68 = arith.constant dense<0.000000e+00> : vector<8xf32>
    %171 = vector.multi_reduction <add>, %166, %cst_68 [1] : vector<8x128xf32> to vector<8xf32>
    %172 = vector.shape_cast %171 : vector<8xf32> to vector<8x1xf32>
    %cst_69 = arith.constant 1.280000e+02 : f32
    %173 = vector.broadcast %cst_69 : f32 to vector<8x1xf32>
    %174 = arith.divf %172, %173 : vector<8x1xf32>
    %175 = vector.broadcast %174 : vector<8x1xf32> to vector<8x128xf32>
    %176 = arith.subf %166, %175 : vector<8x128xf32>
    %177 = arith.mulf %176, %176 : vector<8x128xf32>
    %cst_70 = arith.constant dense<0.000000e+00> : vector<8xf32>
    %178 = vector.multi_reduction <add>, %177, %cst_70 [1] : vector<8x128xf32> to vector<8xf32>
    %179 = vector.shape_cast %178 : vector<8xf32> to vector<8x1xf32>
    %cst_71 = arith.constant 1.280000e+02 : f32
    %180 = vector.broadcast %cst_71 : f32 to vector<8x1xf32>
    %181 = arith.divf %179, %180 : vector<8x1xf32>
    %cst_72 = arith.constant 9.99999997E-7 : f32
    %182 = vector.broadcast %cst_72 : f32 to vector<8x1xf32>
    %183 = arith.addf %181, %182 : vector<8x1xf32>
    %184 = math.rsqrt %183 : vector<8x1xf32>
    %185 = vector.broadcast %184 : vector<8x1xf32> to vector<8x128xf32>
    %186 = arith.mulf %176, %185 : vector<8x128xf32>
    %187 = vector.broadcast %168 : vector<1x128xf32> to vector<8x128xf32>
    %188 = arith.mulf %186, %187 : vector<8x128xf32>
    %189 = vector.broadcast %170 : vector<1x128xf32> to vector<8x128xf32>
    %190 = arith.addf %188, %189 : vector<8x128xf32>
    %191 = arith.truncf %190 : vector<8x128xf32> to vector<8x128xbf16>
    %c0_73 = arith.constant 0 : index
    %c0_74 = arith.constant 0 : index
    %c0_75 = arith.constant 0 : index
    %192 = vector.load %arg14[%c0_73, %c0_74, %c0_75] : memref<1x128x256xbf16, #tpu.memory_space<vmem>>, vector<1x128x256xbf16>
    %193 = vector.shape_cast %192 : vector<1x128x256xbf16> to vector<128x256xbf16>
    %cst_76 = arith.constant dense<0.000000e+00> : vector<8x256xf32>
    %194 = tpu.matmul %191, %193, %cst_76 {dimension_numbers = #tpu.dot_dimension_numbers<[1], [0], [0], [1], [0, 0, 1, 1], [], []>} : vector<8x128xbf16>, vector<128x256xbf16>, vector<8x256xf32> -> vector<8x256xf32>
    %c0_77 = arith.constant 0 : index
    %c0_78 = arith.constant 0 : index
    %c0_79 = arith.constant 0 : index
    %195 = vector.load %arg15[%c0_77, %c0_78, %c0_79] : memref<1x1x256xf32, #tpu.memory_space<vmem>>, vector<1x1x256xf32>
    %196 = vector.shape_cast %195 : vector<1x1x256xf32> to vector<1x256xf32>
    %197 = vector.broadcast %196 : vector<1x256xf32> to vector<8x256xf32>
    %198 = arith.addf %194, %197 : vector<8x256xf32>
    %199 = arith.mulf %198, %198 : vector<8x256xf32>
    %200 = arith.mulf %198, %199 : vector<8x256xf32>
    %cst_80 = arith.constant 4.471500e-02 : f32
    %201 = vector.broadcast %cst_80 : f32 to vector<8x256xf32>
    %202 = arith.mulf %201, %200 : vector<8x256xf32>
    %203 = arith.addf %198, %202 : vector<8x256xf32>
    %cst_81 = arith.constant 0.797884583 : f32
    %204 = vector.broadcast %cst_81 : f32 to vector<8x256xf32>
    %205 = arith.mulf %204, %203 : vector<8x256xf32>
    %206 = math.tanh %205 : vector<8x256xf32>
    %cst_82 = arith.constant 1.000000e+00 : f32
    %207 = vector.broadcast %cst_82 : f32 to vector<8x256xf32>
    %208 = arith.addf %207, %206 : vector<8x256xf32>
    %cst_83 = arith.constant 5.000000e-01 : f32
    %209 = vector.broadcast %cst_83 : f32 to vector<8x256xf32>
    %210 = arith.mulf %209, %208 : vector<8x256xf32>
    %211 = arith.mulf %198, %210 : vector<8x256xf32>
    %212 = arith.truncf %211 : vector<8x256xf32> to vector<8x256xbf16>
    %c0_84 = arith.constant 0 : index
    %c0_85 = arith.constant 0 : index
    %c0_86 = arith.constant 0 : index
    %213 = vector.load %arg16[%c0_84, %c0_85, %c0_86] : memref<1x256x128xbf16, #tpu.memory_space<vmem>>, vector<1x256x128xbf16>
    %214 = vector.shape_cast %213 : vector<1x256x128xbf16> to vector<256x128xbf16>
    %cst_87 = arith.constant dense<0.000000e+00> : vector<8x128xf32>
    %215 = tpu.matmul %212, %214, %cst_87 {dimension_numbers = #tpu.dot_dimension_numbers<[1], [0], [0], [1], [0, 0, 1, 1], [], []>} : vector<8x256xbf16>, vector<256x128xbf16>, vector<8x128xf32> -> vector<8x128xf32>
    %c0_88 = arith.constant 0 : index
    %c0_89 = arith.constant 0 : index
    %c0_90 = arith.constant 0 : index
    %216 = vector.load %arg17[%c0_88, %c0_89, %c0_90] : memref<1x1x128xf32, #tpu.memory_space<vmem>>, vector<1x1x128xf32>
    %217 = vector.shape_cast %216 : vector<1x1x128xf32> to vector<1x128xf32>
    %218 = vector.broadcast %217 : vector<1x128xf32> to vector<8x128xf32>
    %219 = arith.addf %215, %218 : vector<8x128xf32>
    %220 = arith.addf %219, %166 : vector<8x128xf32>
    %c0_91 = arith.constant 0 : index
    %c0_92 = arith.constant 0 : index
    %221 = vector.load %arg25[%c0_91, %c0_92] : memref<8x128xf32, #tpu.memory_space<vmem>>, vector<8x128xf32>
    tpu.vector_store %arg25[%c0_91, %c0_92], %220 {strides = array<i32>} : memref<8x128xf32, #tpu.memory_space<vmem>>, vector<8x128xf32>,
    %c1_i32 = arith.constant 1 : i32
    %222 = arith.cmpi eq, %arg1, %c1_i32 : i32
    %223 = arith.extui %222 : i1 to i32
    %c0_i32_93 = arith.constant 0 : i32
    %224 = arith.cmpi ne, %223, %c0_i32_93 : i32
    scf.if %224 {
      %c0_94 = arith.constant 0 : index
      %c0_95 = arith.constant 0 : index
      %225 = vector.load %arg18[%c0_94, %c0_95] : memref<1x128xf32, #tpu.memory_space<vmem>>, vector<1x128xf32>
      %c0_96 = arith.constant 0 : index
      %c0_97 = arith.constant 0 : index
      %226 = vector.load %arg19[%c0_96, %c0_97] : memref<1x128xf32, #tpu.memory_space<vmem>>, vector<1x128xf32>
      %cst_98 = arith.constant dense<0.000000e+00> : vector<8xf32>
      %227 = vector.multi_reduction <add>, %220, %cst_98 [1] : vector<8x128xf32> to vector<8xf32>
      %228 = vector.shape_cast %227 : vector<8xf32> to vector<8x1xf32>
      %cst_99 = arith.constant 1.280000e+02 : f32
      %229 = vector.broadcast %cst_99 : f32 to vector<8x1xf32>
      %230 = arith.divf %228, %229 : vector<8x1xf32>
      %231 = vector.broadcast %230 : vector<8x1xf32> to vector<8x128xf32>
      %232 = arith.subf %220, %231 : vector<8x128xf32>
      %233 = arith.mulf %232, %232 : vector<8x128xf32>
      %cst_100 = arith.constant dense<0.000000e+00> : vector<8xf32>
      %234 = vector.multi_reduction <add>, %233, %cst_100 [1] : vector<8x128xf32> to vector<8xf32>
      %235 = vector.shape_cast %234 : vector<8xf32> to vector<8x1xf32>
      %cst_101 = arith.constant 1.280000e+02 : f32
      %236 = vector.broadcast %cst_101 : f32 to vector<8x1xf32>
      %237 = arith.divf %235, %236 : vector<8x1xf32>
      %cst_102 = arith.constant 9.99999997E-7 : f32
      %238 = vector.broadcast %cst_102 : f32 to vector<8x1xf32>
      %239 = arith.addf %237, %238 : vector<8x1xf32>
      %240 = math.rsqrt %239 : vector<8x1xf32>
      %241 = vector.broadcast %240 : vector<8x1xf32> to vector<8x128xf32>
      %242 = arith.mulf %232, %241 : vector<8x128xf32>
      %243 = vector.broadcast %225 : vector<1x128xf32> to vector<8x128xf32>
      %244 = arith.mulf %242, %243 : vector<8x128xf32>
      %245 = vector.broadcast %226 : vector<1x128xf32> to vector<8x128xf32>
      %246 = arith.addf %244, %245 : vector<8x128xf32>
      %247 = vector.shape_cast %246 : vector<8x128xf32> to vector<1x8x128xf32>
      %248 = vector.extract_strided_slice %247 {offsets = [0, 0, 0], sizes = [1, 1, 128], strides = [1, 1, 1]} : vector<1x8x128xf32> to vector<1x1x128xf32>
      %249 = vector.shape_cast %248 : vector<1x1x128xf32> to vector<1x128xf32>
      %250 = arith.truncf %249 : vector<1x128xf32> to vector<1x128xbf16>
      %c0_103 = arith.constant 0 : index
      %c0_104 = arith.constant 0 : index
      %251 = vector.load %arg20[%c0_103, %c0_104] : memref<128x128xbf16, #tpu.memory_space<vmem>>, vector<128x128xbf16>
      %cst_105 = arith.constant dense<0.000000e+00> : vector<1x128xf32>
      %252 = tpu.matmul %250, %251, %cst_105 {dimension_numbers = #tpu.dot_dimension_numbers<[1], [0], [0], [1], [0, 0, 1, 1], [], []>} : vector<1x128xbf16>, vector<128x128xbf16>, vector<1x128xf32> -> vector<1x128xf32>
      %c0_106 = arith.constant 0 : index
      %c0_107 = arith.constant 0 : index
      %253 = vector.load %arg21[%c0_106, %c0_107] : memref<1x128xf32, #tpu.memory_space<vmem>>, vector<1x128xf32>
      %254 = arith.addf %252, %253 : vector<1x128xf32>
      %255 = math.tanh %254 : vector<1x128xf32>
      %256 = arith.truncf %255 : vector<1x128xf32> to vector<1x128xbf16>
      %c0_108 = arith.constant 0 : index
      %c0_109 = arith.constant 0 : index
      %257 = vector.load %arg22[%c0_108, %c0_109] : memref<128x128xbf16, #tpu.memory_space<vmem>>, vector<128x128xbf16>
      %cst_110 = arith.constant dense<0.000000e+00> : vector<1x128xf32>
      %258 = tpu.matmul %256, %257, %cst_110 {dimension_numbers = #tpu.dot_dimension_numbers<[1], [0], [0], [1], [0, 0, 1, 1], [], []>} : vector<1x128xbf16>, vector<128x128xbf16>, vector<1x128xf32> -> vector<1x128xf32>
      %c0_111 = arith.constant 0 : index
      %c0_112 = arith.constant 0 : index
      %259 = vector.load %arg23[%c0_111, %c0_112] : memref<1x128xf32, #tpu.memory_space<vmem>>, vector<1x128xf32>
      %260 = arith.addf %258, %259 : vector<1x128xf32>
      %261 = vector.shape_cast %260 : vector<1x128xf32> to vector<1x1x128xf32>
      %c0_113 = arith.constant 0 : index
      %c0_114 = arith.constant 0 : index
      %c0_115 = arith.constant 0 : index
      %262 = vector.load %arg24[%c0_113, %c0_114, %c0_115] : memref<1x1x128xf32, #tpu.memory_space<vmem>>, vector<1x1x128xf32>
      tpu.vector_store %arg24[%c0_113, %c0_114, %c0_115], %261 {strides = array<i32>} : memref<1x1x128xf32, #tpu.memory_space<vmem>>, vector<1x1x128xf32>,
    } else {
    }
    return
  }
  func.func @transform_0(%arg0: i32, %arg1: i32) -> (i32, i32, i32) {
    %c0_i32 = arith.constant 0 : i32
    %c0_i32_0 = arith.constant 0 : i32
    %c0_i32_1 = arith.constant 0 : i32
    return %arg0, %c0_i32, %c0_i32_0 : i32, i32, i32
  }
  func.func @transform_1(%arg0: i32, %arg1: i32) -> (i32, i32, i32) {
    %c0_i32 = arith.constant 0 : i32
    %c0_i32_0 = arith.constant 0 : i32
    %c0_i32_1 = arith.constant 0 : i32
    return %arg0, %c0_i32, %c0_i32_0 : i32, i32, i32
  }
  func.func @transform_2(%arg0: i32, %arg1: i32) -> (i32, i32, i32) {
    %c0_i32 = arith.constant 0 : i32
    %c0_i32_0 = arith.constant 0 : i32
    %c0_i32_1 = arith.constant 0 : i32
    return %arg0, %c0_i32, %c0_i32_0 : i32, i32, i32
  }
  func.func @transform_3(%arg0: i32, %arg1: i32) -> (i32, i32) {
    %c0_i32 = arith.constant 0 : i32
    %c0_i32_0 = arith.constant 0 : i32
    %c0_i32_1 = arith.constant 0 : i32
    return %c0_i32, %c0_i32_0 : i32, i32
  }
  func.func @transform_4(%arg0: i32, %arg1: i32) -> (i32, i32, i32) {
    %c0_i32 = arith.constant 0 : i32
    %c0_i32_0 = arith.constant 0 : i32
    %c0_i32_1 = arith.constant 0 : i32
    return %arg1, %c0_i32, %c0_i32_0 : i32, i32, i32
  }
  func.func @transform_5(%arg0: i32, %arg1: i32) -> (i32, i32, i32) {
    %c0_i32 = arith.constant 0 : i32
    %c0_i32_0 = arith.constant 0 : i32
    %c0_i32_1 = arith.constant 0 : i32
    return %arg1, %c0_i32, %c0_i32_0 : i32, i32, i32
  }
  func.func @transform_6(%arg0: i32, %arg1: i32) -> (i32, i32, i32) {
    %c0_i32 = arith.constant 0 : i32
    %c0_i32_0 = arith.constant 0 : i32
    %c0_i32_1 = arith.constant 0 : i32
    return %arg1, %c0_i32, %c0_i32_0 : i32, i32, i32
  }
  func.func @transform_7(%arg0: i32, %arg1: i32) -> (i32, i32, i32) {
    %c0_i32 = arith.constant 0 : i32
    %c0_i32_0 = arith.constant 0 : i32
    %c0_i32_1 = arith.constant 0 : i32
    return %arg1, %c0_i32, %c0_i32_0 : i32, i32, i32
  }
  func.func @transform_8(%arg0: i32, %arg1: i32) -> (i32, i32, i32) {
    %c0_i32 = arith.constant 0 : i32
    %c0_i32_0 = arith.constant 0 : i32
    %c0_i32_1 = arith.constant 0 : i32
    return %arg1, %c0_i32, %c0_i32_0 : i32, i32, i32
  }
  func.func @transform_9(%arg0: i32, %arg1: i32) -> (i32, i32, i32) {
    %c0_i32 = arith.constant 0 : i32
    %c0_i32_0 = arith.constant 0 : i32
    %c0_i32_1 = arith.constant 0 : i32
    return %arg1, %c0_i32, %c0_i32_0 : i32, i32, i32
  }
  func.func @transform_10(%arg0: i32, %arg1: i32) -> (i32, i32, i32) {
    %c0_i32 = arith.constant 0 : i32
    %c0_i32_0 = arith.constant 0 : i32
    %c0_i32_1 = arith.constant 0 : i32
    return %arg1, %c0_i32, %c0_i32_0 : i32, i32, i32
  }
  func.func @transform_11(%arg0: i32, %arg1: i32) -> (i32, i32, i32) {
    %c0_i32 = arith.constant 0 : i32
    %c0_i32_0 = arith.constant 0 : i32
    %c0_i32_1 = arith.constant 0 : i32
    return %arg1, %c0_i32, %c0_i32_0 : i32, i32, i32
  }
  func.func @transform_12(%arg0: i32, %arg1: i32) -> (i32, i32, i32) {
    %c0_i32 = arith.constant 0 : i32
    %c0_i32_0 = arith.constant 0 : i32
    %c0_i32_1 = arith.constant 0 : i32
    return %arg1, %c0_i32, %c0_i32_0 : i32, i32, i32
  }
  func.func @transform_13(%arg0: i32, %arg1: i32) -> (i32, i32, i32) {
    %c0_i32 = arith.constant 0 : i32
    %c0_i32_0 = arith.constant 0 : i32
    %c0_i32_1 = arith.constant 0 : i32
    return %arg1, %c0_i32, %c0_i32_0 : i32, i32, i32
  }
  func.func @transform_14(%arg0: i32, %arg1: i32) -> (i32, i32, i32) {
    %c0_i32 = arith.constant 0 : i32
    %c0_i32_0 = arith.constant 0 : i32
    %c0_i32_1 = arith.constant 0 : i32
    return %arg1, %c0_i32, %c0_i32_0 : i32, i32, i32
  }
  func.func @transform_15(%arg0: i32, %arg1: i32) -> (i32, i32, i32) {
    %c0_i32 = arith.constant 0 : i32
    %c0_i32_0 = arith.constant 0 : i32
    %c0_i32_1 = arith.constant 0 : i32
    return %arg1, %c0_i32, %c0_i32_0 : i32, i32, i32
  }
  func.func @transform_16(%arg0: i32, %arg1: i32) -> (i32, i32) {
    %c0_i32 = arith.constant 0 : i32
    %c0_i32_0 = arith.constant 0 : i32
    %c0_i32_1 = arith.constant 0 : i32
    return %c0_i32, %c0_i32_0 : i32, i32
  }
  func.func @transform_17(%arg0: i32, %arg1: i32) -> (i32, i32) {
    %c0_i32 = arith.constant 0 : i32
    %c0_i32_0 = arith.constant 0 : i32
    %c0_i32_1 = arith.constant 0 : i32
    return %c0_i32, %c0_i32_0 : i32, i32
  }
  func.func @transform_18(%arg0: i32, %arg1: i32) -> (i32, i32) {
    %c0_i32 = arith.constant 0 : i32
    %c0_i32_0 = arith.constant 0 : i32
    %c0_i32_1 = arith.constant 0 : i32
    return %c0_i32, %c0_i32_0 : i32, i32
  }
  func.func @transform_19(%arg0: i32, %arg1: i32) -> (i32, i32) {
    %c0_i32 = arith.constant 0 : i32
    %c0_i32_0 = arith.constant 0 : i32
    %c0_i32_1 = arith.constant 0 : i32
    return %c0_i32, %c0_i32_0 : i32, i32
  }
  func.func @transform_20(%arg0: i32, %arg1: i32) -> (i32, i32) {
    %c0_i32 = arith.constant 0 : i32
    %c0_i32_0 = arith.constant 0 : i32
    %c0_i32_1 = arith.constant 0 : i32
    return %c0_i32, %c0_i32_0 : i32, i32
  }
  func.func @transform_21(%arg0: i32, %arg1: i32) -> (i32, i32) {
    %c0_i32 = arith.constant 0 : i32
    %c0_i32_0 = arith.constant 0 : i32
    %c0_i32_1 = arith.constant 0 : i32
    return %c0_i32, %c0_i32_0 : i32, i32
  }
  func.func @transform_22(%arg0: i32, %arg1: i32) -> (i32, i32, i32) {
    %c0_i32 = arith.constant 0 : i32
    %c0_i32_0 = arith.constant 0 : i32
    %c0_i32_1 = arith.constant 0 : i32
    return %arg0, %c0_i32, %c0_i32_0 : i32, i32, i32
  }
}

</mosaic_0001>

<llo_original>
// kernel: tpu_custom_call.1
$region0: #{tpu_custom_call.1}
  #allocation0 [shape = 'u32[]', space=smem, size = 0x4, offset = 0x4, fixed_abs, tag = 'smem constant byte address 0x4 - core index']
  #allocation1 [shape = 'u32[72,128]{1,0:T(1,128)}', space=vmem, size = 0x9000, scoped, tag = 'internal scratch']
  #allocation2 [shape = 'f32[8,128]{1,0:T(8,128)}', space=vmem, size = 0x1000, scoped, tag = 'scratch operand']
  %s0 = inlined_call_operand.hbm [shape: f32[2,8,128], index: 0, kind: input, shape index: {}]
  %s1 = inlined_call_operand.hbm [shape: f32[2,1,8], index: 1, kind: input, shape index: {}]
  %s2 = inlined_call_operand.vmem [shape: f32[2,8,1], index: 2, kind: input, shape index: {}]
  %s3 = inlined_call_operand.hbm [shape: f32[8,128], index: 3, kind: input, shape index: {}]
  %s4 = inlined_call_operand.hbm [shape: f32[2,1,128], index: 4, kind: input, shape index: {}]
  %s5 = inlined_call_operand.hbm [shape: f32[2,1,128], index: 5, kind: input, shape index: {}]
  %s6 = inlined_call_operand.hbm [shape: bf16[2,128,1536], index: 6, kind: input, shape index: {}]
  %s7 = inlined_call_operand.vmem [shape: f32[2,1,1536], index: 7, kind: input, shape index: {}]
  %s8 = inlined_call_operand.hbm [shape: bf16[2,512,128], index: 8, kind: input, shape index: {}]
  %s9 = inlined_call_operand.hbm [shape: f32[2,1,128], index: 9, kind: input, shape index: {}]
  %s10 = inlined_call_operand.hbm [shape: f32[2,1,128], index: 10, kind: input, shape index: {}]
  %s11 = inlined_call_operand.hbm [shape: f32[2,1,128], index: 11, kind: input, shape index: {}]
  %s12 = inlined_call_operand.hbm [shape: bf16[2,128,256], index: 12, kind: input, shape index: {}]
  %s13 = inlined_call_operand.vmem [shape: f32[2,1,256], index: 13, kind: input, shape index: {}]
  %s14 = inlined_call_operand.hbm [shape: bf16[2,256,128], index: 14, kind: input, shape index: {}]
  %s15 = inlined_call_operand.vmem [shape: f32[2,1,128], index: 15, kind: input, shape index: {}]
  %s16 = inlined_call_operand.vmem [shape: f32[1,128], index: 16, kind: input, shape index: {}]
  %s17 = inlined_call_operand.vmem [shape: f32[1,128], index: 17, kind: input, shape index: {}]
  %s18 = inlined_call_operand.hbm [shape: bf16[128,128], index: 18, kind: input, shape index: {}]
  %s19 = inlined_call_operand.vmem [shape: f32[1,128], index: 19, kind: input, shape index: {}]
  %s20 = inlined_call_operand.hbm [shape: bf16[128,128], index: 20, kind: input, shape index: {}]
  %s21 = inlined_call_operand.vmem [shape: f32[1,128], index: 21, kind: input, shape index: {}]
  %s22 = inlined_call_operand.hbm [shape: f32[2,1,128], index: 22, kind: output, shape index: {}]
  %s23 = sld [smem:[#allocation0]]
  $region185: #{tpu_custom_call.1} parent=0
    _
  %s25 = ssub.s32 1, %s23
  %s26 = scalar_select 0, %s25, %s23
  $region1: #{tpu_custom_call.1} parent=0
    #allocation3 [shape = 'u8[8192]{0}', space=vmem, size = 0x2000, scoped, tag = 'input window, operand 0']
    #allocation4 [shape = 's32[2]{0}', space=sflag, size = 0x8, scoped, tag = 'scoped memory for tpu_custom_call.1']
    #allocation5 [shape = 's32[2]{0}', space=sflag, size = 0x8, scoped, tag = 'scoped memory for tpu_custom_call.1']
    #allocation6 [shape = 'u8[1024]{0}', space=vmem, size = 0x400, scoped, tag = 'input window, operand 1']
    #allocation7 [shape = 's32[2]{0}', space=sflag, size = 0x8, scoped, tag = 'scoped memory for tpu_custom_call.1']
    #allocation8 [shape = 'u8[4096]{0}', space=vmem, size = 0x1000, scoped, tag = 'input window, operand 3, single buffered']
    #allocation9 [shape = 'u8[1024]{0}', space=vmem, size = 0x400, scoped, tag = 'input window, operand 4']
    #allocation10 [shape = 's32[2]{0}', space=sflag, size = 0x8, scoped, tag = 'scoped memory for tpu_custom_call.1']
    #allocation11 [shape = 'u8[1024]{0}', space=vmem, size = 0x400, scoped, tag = 'input window, operand 5']
    #allocation12 [shape = 'u8[786432]{0}', space=vmem, size = 0xc0000, scoped, tag = 'input window, operand 6']
    #allocation13 [shape = 's32[2]{0}', space=sflag, size = 0x8, scoped, tag = 'scoped memory for tpu_custom_call.1']
    #allocation14 [shape = 'u8[262144]{0}', space=vmem, size = 0x40000, scoped, tag = 'input window, operand 8']
    #allocation15 [shape = 'u8[1024]{0}', space=vmem, size = 0x400, scoped, tag = 'input window, operand 9']
    #allocation16 [shape = 's32[2]{0}', space=sflag, size = 0x8, scoped, tag = 'scoped memory for tpu_custom_call.1']
    #allocation17 [shape = 'u8[1024]{0}', space=vmem, size = 0x400, scoped, tag = 'input window, operand 10']
    #allocation18 [shape = 'u8[1024]{0}', space=vmem, size = 0x400, scoped, tag = 'input window, operand 11']
    #allocation19 [shape = 's32[2]{0}', space=sflag, size = 0x8, scoped, tag = 'scoped memory for tpu_custom_call.1']
    #allocation20 [shape = 'u8[131072]{0}', space=vmem, size = 0x20000, scoped, tag = 'input window, operand 12']
    #allocation21 [shape = 'u8[131072]{0}', space=vmem, size = 0x20000, scoped, tag = 'input window, operand 14']
    #allocation22 [shape = 's32[2]{0}', space=sflag, size = 0x8, scoped, tag = 'scoped memory for tpu_custom_call.1']
    #allocation23 [shape = 'u8[32768]{0}', space=vmem, size = 0x8000, scoped, tag = 'input window, operand 18, single buffered']
    #allocation24 [shape = 'u8[32768]{0}', space=vmem, size = 0x8000, scoped, tag = 'input window, operand 20, single buffered']
    #allocation25 [shape = 's32[1]{0}', space=sflag, size = 0x4, scoped, tag = 'scoped memory for tpu_custom_call.1']
    #allocation26 [shape = 'u8[1024]{0}', space=vmem, size = 0x400, scoped, tag = 'output window, operand 0']
    %27 = vsyncpa [#allocation4], 0
    %s28 = scalar_lea.sflag [#allocation4], 1
    %29 = vsyncpa %s28, 0
    %30 = vsyncpa [#allocation7], 0
    %s31 = scalar_lea.sflag [#allocation7], 1
    %32 = vsyncpa %s31, 0
    %33 = vsyncpa [#allocation10], 0
    %s34 = scalar_lea.sflag [#allocation10], 1
    %35 = vsyncpa %s34, 0
    %36 = vsyncpa [#allocation13], 0
    %s37 = scalar_lea.sflag [#allocation13], 1
    %38 = vsyncpa %s37, 0
    %39 = vsyncpa [#allocation16], 0
    %s40 = scalar_lea.sflag [#allocation16], 1
    %41 = vsyncpa %s40, 0
    %42 = vsyncpa [#allocation19], 0
    %s43 = scalar_lea.sflag [#allocation19], 1
    %44 = vsyncpa %s43, 0
    %45 = vsyncpa [#allocation22], 0
    %s46 = scalar_lea.sflag [#allocation22], 1
    %47 = vsyncpa %s46, 0
    %48 = vsyncpa [#allocation25], 0
    %49 = vsyncpa [#allocation5], 0
    %s50 = scalar_lea.sflag [#allocation5], 1
    %51 = vsyncpa %s50, 0
    loop: start=0, step=1, limit=6
    $region2: #{tpu_custom_call.1} parent=1 // loop_pre_header
      _
    $region3: #{tpu_custom_call.1} parent=1 // loop_header
      %s53 = sphi 0, %s57
      %p54 = scmp.ge.s32.totalorder %s53, 6
      %s60 = sphi 0, %s72
      %s61 = sphi 0, %s68
      %s62 = sphi 0, %s60
      %s63 = sphi 0, %s61
      %s64 = sphi 0, %s62
      %s65 = sphi 0, %s63
      %s75 = sphi 0, %s77
      %s78 = sphi 0, %s75
      %s79 = sphi 0, %s78
      %s95 = sphi 0, %s79
      %s101 = sphi 0, %s103
      %s104 = sphi 0, %s101
      %s105 = sphi 0, %s104
      %s121 = sphi 0, %s105
      %s127 = sphi 0, %s129
      %s130 = sphi 0, %s127
      %s131 = sphi 0, %s130
      %s147 = sphi 0, %s131
      %s151 = sphi 0, %s151
      %s153 = sphi 0, %s151
      %s154 = sphi 0, %s153
      %s168 = sphi 0, %s154
      %s174 = sphi 0, %s176
      %s177 = sphi 0, %s174
      %s178 = sphi 0, %s177
      %s194 = sphi 0, %s178
      %s200 = sphi 0, %s202
      %s203 = sphi 0, %s200
      %s204 = sphi 0, %s203
      %s220 = sphi 0, %s204
      %s226 = sphi 0, %s228
      %s229 = sphi 0, %s226
      %s230 = sphi 0, %s229
      %s246 = sphi 0, %s230
      %s252 = sphi 0, %s254
      %s255 = sphi 0, %s252
      %s256 = sphi 0, %s255
      %s272 = sphi 0, %s256
      %s278 = sphi 0, %s280
      %s281 = sphi 0, %s278
      %s282 = sphi 0, %s281
      %s298 = sphi 0, %s282
      %s304 = sphi 0, %s306
      %s307 = sphi 0, %s304
      %s308 = sphi 0, %s307
      %s324 = sphi 0, %s308
      %s330 = sphi 0, %s332
      %s333 = sphi 0, %s330
      %s334 = sphi 0, %s333
      %s350 = sphi 0, %s334
      %s356 = sphi 0, %s358
      %s359 = sphi 0, %s356
      %s360 = sphi 0, %s359
      %s376 = sphi 0, %s360
      %s382 = sphi 0, %s384
      %s385 = sphi 0, %s382
      %s386 = sphi 0, %s385
      %s402 = sphi 0, %s386
      %s408 = sphi 0, %s410
      %s411 = sphi 0, %s408
      %s412 = sphi 0, %s411
      %s428 = sphi 0, %s412
      %s434 = sphi 0, %s436
      %s437 = sphi 0, %s434
      %s438 = sphi 0, %s437
      %s454 = sphi 0, %s438
      %s460 = sphi 0, %s462
      %s463 = sphi 0, %s460
      %s464 = sphi 0, %s463
      %s480 = sphi 0, %s464
      %s484 = sphi 0, %s484
      %s486 = sphi 0, %s484
      %s487 = sphi 0, %s486
      %s501 = sphi 0, %s487
      %s505 = sphi 0, %s505
      %s507 = sphi 0, %s505
      %s508 = sphi 0, %s507
      %s522 = sphi 0, %s508
      %s526 = sphi 0, %s526
      %s528 = sphi 0, %s526
      %s529 = sphi 0, %s528
      %s543 = sphi 0, %s529
      %s547 = sphi 0, %s547
      %s549 = sphi 0, %s547
      %s550 = sphi 0, %s549
      %s564 = sphi 0, %s550
      %s568 = sphi 0, %s568
      %s570 = sphi 0, %s568
      %s571 = sphi 0, %s570
      %s585 = sphi 0, %s571
      %s589 = sphi 0, %s589
      %s591 = sphi 0, %s589
      %s592 = sphi 0, %s591
      %s606 = sphi 0, %s592
      %s612 = sphi 0, %s614
      %s615 = sphi 0, %s612
      %s616 = sphi 0, %s615
      %s632 = sphi 0, %s616
    $region4: #{tpu_custom_call.1} parent=1 // loop_header_branch
      %56 = sbr.rel (%p54) target = $region8
    $region5: #{tpu_custom_call.1} parent=1 // loop_body
      %s58 = ssub.s32 %s53, 1
      %s59 = ssub.s32 %s53, 2
      %s66 = sadd.s32 1, %s61
      %p67 = scmp.ge.s32.totalorder %s66, 2
      %s68 = scalar_select %p67, 0, %s66
      %s69 = sadd.s32 1, %s60
      %s70 = scalar_select %p67, %s69, %s60
      %p71 = scmp.ge.s32.totalorder %s70, 2
      %s72 = scalar_select %p71, 0, %s70
      %s73 = ssub.s32 %s60, %s72
      %p74 = scmp.eq.s32.totalorder %s73, 0
      %s76 = sadd.s32 %s75, 1
      %s77 = scalar_select %p74, %s75, %s76
      %p80 = pneg %p74
      %p81 = scmp.eq.s32.totalorder %s53, 3
      %p82 = por %p80, %p81
      %p83 = scmp.ne.s32.totalorder %s75, %s78
      %p84 = scmp.eq.s32.totalorder %s53, 0
      %p85 = por %p83, %p84
      %p86 = scmp.ne.s32.totalorder %s75, %s78
      %p87 = scmp.eq.s32.totalorder %s58, 3
      %p88 = por %p86, %p87
      %p89 = scmp.ne.s32.totalorder %s78, %s79
      %p90 = scmp.eq.s32.totalorder %s58, 0
      %p91 = por %p89, %p90
      %p92 = scmp.ne.s32.totalorder %s78, %s79
      %p93 = scmp.eq.s32.totalorder %s59, 3
      %p94 = por %p92, %p93
      %p96 = scmp.ne.s32.totalorder %s79, %s95
      %p97 = scmp.eq.s32.totalorder %s59, 0
      %p98 = por %p96, %p97
      %s99 = ssub.s32 %s60, %s72
      %p100 = scmp.eq.s32.totalorder %s99, 0
      %s102 = sadd.s32 %s101, 1
      %s103 = scalar_select %p100, %s101, %s102
      %p106 = pneg %p100
      %p107 = scmp.eq.s32.totalorder %s53, 3
      %p108 = por %p106, %p107
      %p109 = scmp.ne.s32.totalorder %s101, %s104
      %p110 = scmp.eq.s32.totalorder %s53, 0
      %p111 = por %p109, %p110
      %p112 = scmp.ne.s32.totalorder %s101, %s104
      %p113 = scmp.eq.s32.totalorder %s58, 3
      %p114 = por %p112, %p113
      %p115 = scmp.ne.s32.totalorder %s104, %s105
      %p116 = scmp.eq.s32.totalorder %s58, 0
      %p117 = por %p115, %p116
      %p118 = scmp.ne.s32.totalorder %s104, %s105
      %p119 = scmp.eq.s32.totalorder %s59, 3
      %p120 = por %p118, %p119
      %p122 = scmp.ne.s32.totalorder %s105, %s121
      %p123 = scmp.eq.s32.totalorder %s59, 0
      %p124 = por %p122, %p123
      %s125 = ssub.s32 %s60, %s72
      %p126 = scmp.eq.s32.totalorder %s125, 0
      %s128 = sadd.s32 %s127, 1
      %s129 = scalar_select %p126, %s127, %s128
      %p132 = pneg %p126
      %p133 = scmp.eq.s32.totalorder %s53, 3
      %p134 = por %p132, %p133
      %p135 = scmp.ne.s32.totalorder %s127, %s130
      %p136 = scmp.eq.s32.totalorder %s53, 0
      %p137 = por %p135, %p136
      %p138 = scmp.ne.s32.totalorder %s127, %s130
      %p139 = scmp.eq.s32.totalorder %s58, 3
      %p140 = por %p138, %p139
      %p141 = scmp.ne.s32.totalorder %s130, %s131
      %p142 = scmp.eq.s32.totalorder %s58, 0
      %p143 = por %p141, %p142
      %p144 = scmp.ne.s32.totalorder %s130, %s131
      %p145 = scmp.eq.s32.totalorder %s59, 3
      %p146 = por %p144, %p145
      %p148 = scmp.ne.s32.totalorder %s131, %s147
      %p149 = scmp.eq.s32.totalorder %s59, 0
      %p150 = por %p148, %p149
      %s152 = sadd.s32 %s151, 1
      %p155 = scmp.eq.s32.totalorder %s53, 3
      %p156 = scmp.ne.s32.totalorder %s151, %s153
      %p157 = scmp.eq.s32.totalorder %s53, 0
      %p158 = por %p156, %p157
      %p159 = scmp.ne.s32.totalorder %s151, %s153
      %p160 = scmp.eq.s32.totalorder %s58, 3
      %p161 = por %p159, %p160
      %p162 = scmp.ne.s32.totalorder %s153, %s154
      %p163 = scmp.eq.s32.totalorder %s58, 0
      %p164 = por %p162, %p163
      %p165 = scmp.ne.s32.totalorder %s153, %s154
      %p166 = scmp.eq.s32.totalorder %s59, 3
      %p167 = por %p165, %p166
      %p169 = scmp.ne.s32.totalorder %s154, %s168
      %p170 = scmp.eq.s32.totalorder %s59, 0
      %p171 = por %p169, %p170
      %s172 = ssub.s32 %s61, %s68
      %p173 = scmp.eq.s32.totalorder %s172, 0
      %s175 = sadd.s32 %s174, 1
      %s176 = scalar_select %p173, %s174, %s175
      %p179 = pneg %p173
      %p180 = scmp.eq.s32.totalorder %s53, 3
      %p181 = por %p179, %p180
      %p182 = scmp.ne.s32.totalorder %s174, %s177
      %p183 = scmp.eq.s32.totalorder %s53, 0
      %p184 = por %p182, %p183
      %p185 = scmp.ne.s32.totalorder %s174, %s177
      %p186 = scmp.eq.s32.totalorder %s58, 3
      %p187 = por %p185, %p186
      %p188 = scmp.ne.s32.totalorder %s177, %s178
      %p189 = scmp.eq.s32.totalorder %s58, 0
      %p190 = por %p188, %p189
      %p191 = scmp.ne.s32.totalorder %s177, %s178
      %p192 = scmp.eq.s32.totalorder %s59, 3
      %p193 = por %p191, %p192
      %p195 = scmp.ne.s32.totalorder %s178, %s194
      %p196 = scmp.eq.s32.totalorder %s59, 0
      %p197 = por %p195, %p196
      %s198 = ssub.s32 %s61, %s68
      %p199 = scmp.eq.s32.totalorder %s198, 0
      %s201 = sadd.s32 %s200, 1
      %s202 = scalar_select %p199, %s200, %s201
      %p205 = pneg %p199
      %p206 = scmp.eq.s32.totalorder %s53, 3
      %p207 = por %p205, %p206
      %p208 = scmp.ne.s32.totalorder %s200, %s203
      %p209 = scmp.eq.s32.totalorder %s53, 0
      %p210 = por %p208, %p209
      %p211 = scmp.ne.s32.totalorder %s200, %s203
      %p212 = scmp.eq.s32.totalorder %s58, 3
      %p213 = por %p211, %p212
      %p214 = scmp.ne.s32.totalorder %s203, %s204
      %p215 = scmp.eq.s32.totalorder %s58, 0
      %p216 = por %p214, %p215
      %p217 = scmp.ne.s32.totalorder %s203, %s204
      %p218 = scmp.eq.s32.totalorder %s59, 3
      %p219 = por %p217, %p218
      %p221 = scmp.ne.s32.totalorder %s204, %s220
      %p222 = scmp.eq.s32.totalorder %s59, 0
      %p223 = por %p221, %p222
      %s224 = ssub.s32 %s61, %s68
      %p225 = scmp.eq.s32.totalorder %s224, 0
      %s227 = sadd.s32 %s226, 1
      %s228 = scalar_select %p225, %s226, %s227
      %p231 = pneg %p225
      %p232 = scmp.eq.s32.totalorder %s53, 3
      %p233 = por %p231, %p232
      %p234 = scmp.ne.s32.totalorder %s226, %s229
      %p235 = scmp.eq.s32.totalorder %s53, 0
      %p236 = por %p234, %p235
      %p237 = scmp.ne.s32.totalorder %s226, %s229
      %p238 = scmp.eq.s32.totalorder %s58, 3
      %p239 = por %p237, %p238
      %p240 = scmp.ne.s32.totalorder %s229, %s230
      %p241 = scmp.eq.s32.totalorder %s58, 0
      %p242 = por %p240, %p241
      %p243 = scmp.ne.s32.totalorder %s229, %s230
      %p244 = scmp.eq.s32.totalorder %s59, 3
      %p245 = por %p243, %p244
      %p247 = scmp.ne.s32.totalorder %s230, %s246
      %p248 = scmp.eq.s32.totalorder %s59, 0
      %p249 = por %p247, %p248
      %s250 = ssub.s32 %s61, %s68
      %p251 = scmp.eq.s32.totalorder %s250, 0
      %s253 = sadd.s32 %s252, 1
      %s254 = scalar_select %p251, %s252, %s253
      %p257 = pneg %p251
      %p258 = scmp.eq.s32.totalorder %s53, 3
      %p259 = por %p257, %p258
      %p260 = scmp.ne.s32.totalorder %s252, %s255
      %p261 = scmp.eq.s32.totalorder %s53, 0
      %p262 = por %p260, %p261
      %p263 = scmp.ne.s32.totalorder %s252, %s255
      %p264 = scmp.eq.s32.totalorder %s58, 3
      %p265 = por %p263, %p264
      %p266 = scmp.ne.s32.totalorder %s255, %s256
      %p267 = scmp.eq.s32.totalorder %s58, 0
      %p268 = por %p266, %p267
      %p269 = scmp.ne.s32.totalorder %s255, %s256
      %p270 = scmp.eq.s32.totalorder %s59, 3
      %p271 = por %p269, %p270
      %p273 = scmp.ne.s32.totalorder %s256, %s272
      %p274 = scmp.eq.s32.totalorder %s59, 0
      %p275 = por %p273, %p274
      %s276 = ssub.s32 %s61, %s68
      %p277 = scmp.eq.s32.totalorder %s276, 0
      %s279 = sadd.s32 %s278, 1
      %s280 = scalar_select %p277, %s278, %s279
      %p283 = pneg %p277
      %p284 = scmp.eq.s32.totalorder %s53, 3
      %p285 = por %p283, %p284
      %p286 = scmp.ne.s32.totalorder %s278, %s281
      %p287 = scmp.eq.s32.totalorder %s53, 0
      %p288 = por %p286, %p287
      %p289 = scmp.ne.s32.totalorder %s278, %s281
      %p290 = scmp.eq.s32.totalorder %s58, 3
      %p291 = por %p289, %p290
      %p292 = scmp.ne.s32.totalorder %s281, %s282
      %p293 = scmp.eq.s32.totalorder %s58, 0
      %p294 = por %p292, %p293
      %p295 = scmp.ne.s32.totalorder %s281, %s282
      %p296 = scmp.eq.s32.totalorder %s59, 3
      %p297 = por %p295, %p296
      %p299 = scmp.ne.s32.totalorder %s282, %s298
      %p300 = scmp.eq.s32.totalorder %s59, 0
      %p301 = por %p299, %p300
      %s302 = ssub.s32 %s61, %s68
      %p303 = scmp.eq.s32.totalorder %s302, 0
      %s305 = sadd.s32 %s304, 1
      %s306 = scalar_select %p303, %s304, %s305
      %p309 = pneg %p303
      %p310 = scmp.eq.s32.totalorder %s53, 3
      %p311 = por %p309, %p310
      %p312 = scmp.ne.s32.totalorder %s304, %s307
      %p313 = scmp.eq.s32.totalorder %s53, 0
      %p314 = por %p312, %p313
      %p315 = scmp.ne.s32.totalorder %s304, %s307
      %p316 = scmp.eq.s32.totalorder %s58, 3
      %p317 = por %p315, %p316
      %p318 = scmp.ne.s32.totalorder %s307, %s308
      %p319 = scmp.eq.s32.totalorder %s58, 0
      %p320 = por %p318, %p319
      %p321 = scmp.ne.s32.totalorder %s307, %s308
      %p322 = scmp.eq.s32.totalorder %s59, 3
      %p323 = por %p321, %p322
      %p325 = scmp.ne.s32.totalorder %s308, %s324
      %p326 = scmp.eq.s32.totalorder %s59, 0
      %p327 = por %p325, %p326
      %s328 = ssub.s32 %s61, %s68
      %p329 = scmp.eq.s32.totalorder %s328, 0
      %s331 = sadd.s32 %s330, 1
      %s332 = scalar_select %p329, %s330, %s331
      %p335 = pneg %p329
      %p336 = scmp.eq.s32.totalorder %s53, 3
      %p337 = por %p335, %p336
      %p338 = scmp.ne.s32.totalorder %s330, %s333
      %p339 = scmp.eq.s32.totalorder %s53, 0
      %p340 = por %p338, %p339
      %p341 = scmp.ne.s32.totalorder %s330, %s333
      %p342 = scmp.eq.s32.totalorder %s58, 3
      %p343 = por %p341, %p342
      %p344 = scmp.ne.s32.totalorder %s333, %s334
      %p345 = scmp.eq.s32.totalorder %s58, 0
      %p346 = por %p344, %p345
      %p347 = scmp.ne.s32.totalorder %s333, %s334
      %p348 = scmp.eq.s32.totalorder %s59, 3
      %p349 = por %p347, %p348
      %p351 = scmp.ne.s32.totalorder %s334, %s350
      %p352 = scmp.eq.s32.totalorder %s59, 0
      %p353 = por %p351, %p352
      %s354 = ssub.s32 %s61, %s68
      %p355 = scmp.eq.s32.totalorder %s354, 0
      %s357 = sadd.s32 %s356, 1
      %s358 = scalar_select %p355, %s356, %s357
      %p361 = pneg %p355
      %p362 = scmp.eq.s32.totalorder %s53, 3
      %p363 = por %p361, %p362
      %p364 = scmp.ne.s32.totalorder %s356, %s359
      %p365 = scmp.eq.s32.totalorder %s53, 0
      %p366 = por %p364, %p365
      %p367 = scmp.ne.s32.totalorder %s356, %s359
      %p368 = scmp.eq.s32.totalorder %s58, 3
      %p369 = por %p367, %p368
      %p370 = scmp.ne.s32.totalorder %s359, %s360
      %p371 = scmp.eq.s32.totalorder %s58, 0
      %p372 = por %p370, %p371
      %p373 = scmp.ne.s32.totalorder %s359, %s360
      %p374 = scmp.eq.s32.totalorder %s59, 3
      %p375 = por %p373, %p374
      %p377 = scmp.ne.s32.totalorder %s360, %s376
      %p378 = scmp.eq.s32.totalorder %s59, 0
      %p379 = por %p377, %p378
      %s380 = ssub.s32 %s61, %s68
      %p381 = scmp.eq.s32.totalorder %s380, 0
      %s383 = sadd.s32 %s382, 1
      %s384 = scalar_select %p381, %s382, %s383
      %p387 = pneg %p381
      %p388 = scmp.eq.s32.totalorder %s53, 3
      %p389 = por %p387, %p388
      %p390 = scmp.ne.s32.totalorder %s382, %s385
      %p391 = scmp.eq.s32.totalorder %s53, 0
      %p392 = por %p390, %p391
      %p393 = scmp.ne.s32.totalorder %s382, %s385
      %p394 = scmp.eq.s32.totalorder %s58, 3
      %p395 = por %p393, %p394
      %p396 = scmp.ne.s32.totalorder %s385, %s386
      %p397 = scmp.eq.s32.totalorder %s58, 0
      %p398 = por %p396, %p397
      %p399 = scmp.ne.s32.totalorder %s385, %s386
      %p400 = scmp.eq.s32.totalorder %s59, 3
      %p401 = por %p399, %p400
      %p403 = scmp.ne.s32.totalorder %s386, %s402
      %p404 = scmp.eq.s32.totalorder %s59, 0
      %p405 = por %p403, %p404
      %s406 = ssub.s32 %s61, %s68
      %p407 = scmp.eq.s32.totalorder %s406, 0
      %s409 = sadd.s32 %s408, 1
      %s410 = scalar_select %p407, %s408, %s409
      %p413 = pneg %p407
      %p414 = scmp.eq.s32.totalorder %s53, 3
      %p415 = por %p413, %p414
      %p416 = scmp.ne.s32.totalorder %s408, %s411
      %p417 = scmp.eq.s32.totalorder %s53, 0
      %p418 = por %p416, %p417
      %p419 = scmp.ne.s32.totalorder %s408, %s411
      %p420 = scmp.eq.s32.totalorder %s58, 3
      %p421 = por %p419, %p420
      %p422 = scmp.ne.s32.totalorder %s411, %s412
      %p423 = scmp.eq.s32.totalorder %s58, 0
      %p424 = por %p422, %p423
      %p425 = scmp.ne.s32.totalorder %s411, %s412
      %p426 = scmp.eq.s32.totalorder %s59, 3
      %p427 = por %p425, %p426
      %p429 = scmp.ne.s32.totalorder %s412, %s428
      %p430 = scmp.eq.s32.totalorder %s59, 0
      %p431 = por %p429, %p430
      %s432 = ssub.s32 %s61, %s68
      %p433 = scmp.eq.s32.totalorder %s432, 0
      %s435 = sadd.s32 %s434, 1
      %s436 = scalar_select %p433, %s434, %s435
      %p439 = pneg %p433
      %p440 = scmp.eq.s32.totalorder %s53, 3
      %p441 = por %p439, %p440
      %p442 = scmp.ne.s32.totalorder %s434, %s437
      %p443 = scmp.eq.s32.totalorder %s53, 0
      %p444 = por %p442, %p443
      %p445 = scmp.ne.s32.totalorder %s434, %s437
      %p446 = scmp.eq.s32.totalorder %s58, 3
      %p447 = por %p445, %p446
      %p448 = scmp.ne.s32.totalorder %s437, %s438
      %p449 = scmp.eq.s32.totalorder %s58, 0
      %p450 = por %p448, %p449
      %p451 = scmp.ne.s32.totalorder %s437, %s438
      %p452 = scmp.eq.s32.totalorder %s59, 3
      %p453 = por %p451, %p452
      %p455 = scmp.ne.s32.totalorder %s438, %s454
      %p456 = scmp.eq.s32.totalorder %s59, 0
      %p457 = por %p455, %p456
      %s458 = ssub.s32 %s61, %s68
      %p459 = scmp.eq.s32.totalorder %s458, 0
      %s461 = sadd.s32 %s460, 1
      %s462 = scalar_select %p459, %s460, %s461
      %p465 = pneg %p459
      %p466 = scmp.eq.s32.totalorder %s53, 3
      %p467 = por %p465, %p466
      %p468 = scmp.ne.s32.totalorder %s460, %s463
      %p469 = scmp.eq.s32.totalorder %s53, 0
      %p470 = por %p468, %p469
      %p471 = scmp.ne.s32.totalorder %s460, %s463
      %p472 = scmp.eq.s32.totalorder %s58, 3
      %p473 = por %p471, %p472
      %p474 = scmp.ne.s32.totalorder %s463, %s464
      %p475 = scmp.eq.s32.totalorder %s58, 0
      %p476 = por %p474, %p475
      %p477 = scmp.ne.s32.totalorder %s463, %s464
      %p478 = scmp.eq.s32.totalorder %s59, 3
      %p479 = por %p477, %p478
      %p481 = scmp.ne.s32.totalorder %s464, %s480
      %p482 = scmp.eq.s32.totalorder %s59, 0
      %p483 = por %p481, %p482
      %s485 = sadd.s32 %s484, 1
      %p488 = scmp.eq.s32.totalorder %s53, 3
      %p489 = scmp.ne.s32.totalorder %s484, %s486
      %p490 = scmp.eq.s32.totalorder %s53, 0
      %p491 = por %p489, %p490
      %p492 = scmp.ne.s32.totalorder %s484, %s486
      %p493 = scmp.eq.s32.totalorder %s58, 3
      %p494 = por %p492, %p493
      %p495 = scmp.ne.s32.totalorder %s486, %s487
      %p496 = scmp.eq.s32.totalorder %s58, 0
      %p497 = por %p495, %p496
      %p498 = scmp.ne.s32.totalorder %s486, %s487
      %p499 = scmp.eq.s32.totalorder %s59, 3
      %p500 = por %p498, %p499
      %p502 = scmp.ne.s32.totalorder %s487, %s501
      %p503 = scmp.eq.s32.totalorder %s59, 0
      %p504 = por %p502, %p503
      %s506 = sadd.s32 %s505, 1
      %p509 = scmp.eq.s32.totalorder %s53, 3
      %p510 = scmp.ne.s32.totalorder %s505, %s507
      %p511 = scmp.eq.s32.totalorder %s53, 0
      %p512 = por %p510, %p511
      %p513 = scmp.ne.s32.totalorder %s505, %s507
      %p514 = scmp.eq.s32.totalorder %s58, 3
      %p515 = por %p513, %p514
      %p516 = scmp.ne.s32.totalorder %s507, %s508
      %p517 = scmp.eq.s32.totalorder %s58, 0
      %p518 = por %p516, %p517
      %p519 = scmp.ne.s32.totalorder %s507, %s508
      %p520 = scmp.eq.s32.totalorder %s59, 3
      %p521 = por %p519, %p520
      %p523 = scmp.ne.s32.totalorder %s508, %s522
      %p524 = scmp.eq.s32.totalorder %s59, 0
      %p525 = por %p523, %p524
      %s527 = sadd.s32 %s526, 1
      %p530 = scmp.eq.s32.totalorder %s53, 3
      %p531 = scmp.ne.s32.totalorder %s526, %s528
      %p532 = scmp.eq.s32.totalorder %s53, 0
      %p533 = por %p531, %p532
      %p534 = scmp.ne.s32.totalorder %s526, %s528
      %p535 = scmp.eq.s32.totalorder %s58, 3
      %p536 = por %p534, %p535
      %p537 = scmp.ne.s32.totalorder %s528, %s529
      %p538 = scmp.eq.s32.totalorder %s58, 0
      %p539 = por %p537, %p538
      %p540 = scmp.ne.s32.totalorder %s528, %s529
      %p541 = scmp.eq.s32.totalorder %s59, 3
      %p542 = por %p540, %p541
      %p544 = scmp.ne.s32.totalorder %s529, %s543
      %p545 = scmp.eq.s32.totalorder %s59, 0
      %p546 = por %p544, %p545
      %s548 = sadd.s32 %s547, 1
      %p551 = scmp.eq.s32.totalorder %s53, 3
      %p552 = scmp.ne.s32.totalorder %s547, %s549
      %p553 = scmp.eq.s32.totalorder %s53, 0
      %p554 = por %p552, %p553
      %p555 = scmp.ne.s32.totalorder %s547, %s549
      %p556 = scmp.eq.s32.totalorder %s58, 3
      %p557 = por %p555, %p556
      %p558 = scmp.ne.s32.totalorder %s549, %s550
      %p559 = scmp.eq.s32.totalorder %s58, 0
      %p560 = por %p558, %p559
      %p561 = scmp.ne.s32.totalorder %s549, %s550
      %p562 = scmp.eq.s32.totalorder %s59, 3
      %p563 = por %p561, %p562
      %p565 = scmp.ne.s32.totalorder %s550, %s564
      %p566 = scmp.eq.s32.totalorder %s59, 0
      %p567 = por %p565, %p566
      %s569 = sadd.s32 %s568, 1
      %p572 = scmp.eq.s32.totalorder %s53, 3
      %p573 = scmp.ne.s32.totalorder %s568, %s570
      %p574 = scmp.eq.s32.totalorder %s53, 0
      %p575 = por %p573, %p574
      %p576 = scmp.ne.s32.totalorder %s568, %s570
      %p577 = scmp.eq.s32.totalorder %s58, 3
      %p578 = por %p576, %p577
      %p579 = scmp.ne.s32.totalorder %s570, %s571
      %p580 = scmp.eq.s32.totalorder %s58, 0
      %p581 = por %p579, %p580
      %p582 = scmp.ne.s32.totalorder %s570, %s571
      %p583 = scmp.eq.s32.totalorder %s59, 3
      %p584 = por %p582, %p583
      %p586 = scmp.ne.s32.totalorder %s571, %s585
      %p587 = scmp.eq.s32.totalorder %s59, 0
      %p588 = por %p586, %p587
      %s590 = sadd.s32 %s589, 1
      %p593 = scmp.eq.s32.totalorder %s53, 3
      %p594 = scmp.ne.s32.totalorder %s589, %s591
      %p595 = scmp.eq.s32.totalorder %s53, 0
      %p596 = por %p594, %p595
      %p597 = scmp.ne.s32.totalorder %s589, %s591
      %p598 = scmp.eq.s32.totalorder %s58, 3
      %p599 = por %p597, %p598
      %p600 = scmp.ne.s32.totalorder %s591, %s592
      %p601 = scmp.eq.s32.totalorder %s58, 0
      %p602 = por %p600, %p601
      %p603 = scmp.ne.s32.totalorder %s591, %s592
      %p604 = scmp.eq.s32.totalorder %s59, 3
      %p605 = por %p603, %p604
      %p607 = scmp.ne.s32.totalorder %s592, %s606
      %p608 = scmp.eq.s32.totalorder %s59, 0
      %p609 = por %p607, %p608
      %s610 = ssub.s32 %s60, %s72
      %p611 = scmp.eq.s32.totalorder %s610, 0
      %s613 = sadd.s32 %s612, 1
      %s614 = scalar_select %p611, %s612, %s613
      %p617 = pneg %p611
      %p618 = scmp.eq.s32.totalorder %s53, 3
      %p619 = por %p617, %p618
      %p620 = scmp.ne.s32.totalorder %s612, %s615
      %p621 = scmp.eq.s32.totalorder %s53, 0
      %p622 = por %p620, %p621
      %p623 = scmp.ne.s32.totalorder %s612, %s615
      %p624 = scmp.eq.s32.totalorder %s58, 3
      %p625 = por %p623, %p624
      %p626 = scmp.ne.s32.totalorder %s615, %s616
      %p627 = scmp.eq.s32.totalorder %s58, 0
      %p628 = por %p626, %p627
      %p629 = scmp.ne.s32.totalorder %s615, %s616
      %p630 = scmp.eq.s32.totalorder %s59, 3
      %p631 = por %p629, %p630
      %p633 = scmp.ne.s32.totalorder %s616, %s632
      %p634 = scmp.eq.s32.totalorder %s59, 0
      %p635 = por %p633, %p634
      %p636 = scmp.le.s32.totalorder 1, %s53
      %p637 = scmp.lt.s32.totalorder %s53, 5
      %p638 = pnand %p636, %p637
      %p639 = pneg %p638
      // Predicated region
      $region9: #{tpu_custom_call.1} parent=5 // pred_check
        _
      $region10: #{tpu_custom_call.1} parent=5 // pred_check_branch
        %641 = sbr.rel (%p638) target = $region12
      $region11: #{tpu_custom_call.1} parent=5 // pred_region
        %s642 = ssub.s32 %s53, 1
        // Predicated region
        $region13: #{tpu_custom_call.1} parent=11 // pred_check
          %p643 = pneg %p164
        $region14: #{tpu_custom_call.1} parent=11 // pred_check_branch
          %645 = sbr.rel (%p643) target = $region16
        $region15: #{tpu_custom_call.1} parent=11 // pred_region
          %647 = vsyncadd [#allocation7], 0
          %s649 = sshll.u32 %s3, 4
          %s650 = int_to_ptr.hbm [resolvable:$true] %s649
          %s651 = sshll.u32 [#allocation8], 4
          %s652 = int_to_ptr.vmem [resolvable:$true] %s651
          %654 = dma.hbm_to_vmem [thread:$0]  %s650, 128, %s652, [#allocation7]
        $region16: #{tpu_custom_call.1} parent=11 // pred_fallthru
          _
        // Predicated region
        $region17: #{tpu_custom_call.1} parent=11 // pred_check
          %p655 = pneg %p497
        $region18: #{tpu_custom_call.1} parent=11 // pred_check_branch
          %657 = sbr.rel (%p655) target = $region20
        $region19: #{tpu_custom_call.1} parent=11 // pred_region
          _
        $region20: #{tpu_custom_call.1} parent=11 // pred_fallthru
          _
        // Predicated region
        $region21: #{tpu_custom_call.1} parent=11 // pred_check
          %p658 = pneg %p518
        $region22: #{tpu_custom_call.1} parent=11 // pred_check_branch
          %660 = sbr.rel (%p658) target = $region24
        $region23: #{tpu_custom_call.1} parent=11 // pred_region
          _
        $region24: #{tpu_custom_call.1} parent=11 // pred_fallthru
          _
        // Predicated region
        $region25: #{tpu_custom_call.1} parent=11 // pred_check
          %p661 = pneg %p539
        $region26: #{tpu_custom_call.1} parent=11 // pred_check_branch
          %663 = sbr.rel (%p661) target = $region28
        $region27: #{tpu_custom_call.1} parent=11 // pred_region
          %665 = vsyncadd [#allocation22], 0
          %s666 = sshll.u32 %s18, 4
          %s667 = int_to_ptr.hbm [resolvable:$true] %s666
          %s668 = sshll.u32 [#allocation23], 4
          %s669 = int_to_ptr.vmem [resolvable:$true] %s668
          %674 = dma.hbm_to_vmem [thread:$0]  %s667, 1024, %s669, [#allocation22], 64, 64, 4
        $region28: #{tpu_custom_call.1} parent=11 // pred_fallthru
          _
        // Predicated region
        $region29: #{tpu_custom_call.1} parent=11 // pred_check
          %p675 = pneg %p560
        $region30: #{tpu_custom_call.1} parent=11 // pred_check_branch
          %677 = sbr.rel (%p675) target = $region32
        $region31: #{tpu_custom_call.1} parent=11 // pred_region
          _
        $region32: #{tpu_custom_call.1} parent=11 // pred_fallthru
          _
        // Predicated region
        $region33: #{tpu_custom_call.1} parent=11 // pred_check
          %p678 = pneg %p581
        $region34: #{tpu_custom_call.1} parent=11 // pred_check_branch
          %680 = sbr.rel (%p678) target = $region36
        $region35: #{tpu_custom_call.1} parent=11 // pred_region
          %682 = vsyncadd [#allocation25], 0
          %s683 = sshll.u32 %s20, 4
          %s684 = int_to_ptr.hbm [resolvable:$true] %s683
          %s685 = sshll.u32 [#allocation24], 4
          %s686 = int_to_ptr.vmem [resolvable:$true] %s685
          %691 = dma.hbm_to_vmem [thread:$0]  %s684, 1024, %s686, [#allocation25], 64, 64, 4
        $region36: #{tpu_custom_call.1} parent=11 // pred_fallthru
          _
        // Predicated region
        $region37: #{tpu_custom_call.1} parent=11 // pred_check
          %p692 = pneg %p602
        $region38: #{tpu_custom_call.1} parent=11 // pred_check_branch
          %694 = sbr.rel (%p692) target = $region40
        $region39: #{tpu_custom_call.1} parent=11 // pred_region
          _
        $region40: #{tpu_custom_call.1} parent=11 // pred_fallthru
          _
      $region12: #{tpu_custom_call.1} parent=5 // pred_fallthru
        _
      %p695 = scmp.lt.s32.totalorder %s53, 4
      // Predicated region
      $region41: #{tpu_custom_call.1} parent=5 // pred_check
        %p696 = pneg %p695
      $region42: #{tpu_custom_call.1} parent=5 // pred_check_branch
        %698 = sbr.rel (%p696) target = $region44
      $region43: #{tpu_custom_call.1} parent=5 // pred_region
        // Predicated region
        $region45: #{tpu_custom_call.1} parent=43 // pred_check
          %p699 = pneg %p85
        $region46: #{tpu_custom_call.1} parent=43 // pred_check_branch
          %701 = sbr.rel (%p699) target = $region48
        $region47: #{tpu_custom_call.1} parent=43 // pred_region
          %s702 = sand.u32 %s75, 1
          %s703 = scalar_lea.sflag [#allocation4], %s702
          %s704 = sand.u32 %s75, 1
          %s705 = smul.addr %s704, 8
          %s706 = scalar_lea.vmem [#allocation3], %s705
          %708 = vsyncadd %s703, 0
          %s709 = smul.addr %s60, 8
          %s710 = scalar_lea.hbm %s0, %s709
          %s712 = sshll.u32 %s710, 4
          %s713 = int_to_ptr.hbm [resolvable:$true] %s712
          %s714 = sshll.u32 %s706, 4
          %s715 = int_to_ptr.vmem [resolvable:$true] %s714
          %717 = dma.hbm_to_vmem [thread:$0]  %s713, 128, %s715, %s703
        $region48: #{tpu_custom_call.1} parent=43 // pred_fallthru
          _
        // Predicated region
        $region49: #{tpu_custom_call.1} parent=43 // pred_check
          %p718 = pneg %p111
        $region50: #{tpu_custom_call.1} parent=43 // pred_check_branch
          %720 = sbr.rel (%p718) target = $region52
        $region51: #{tpu_custom_call.1} parent=43 // pred_region
          %s721 = sand.u32 %s53, 1
          %s722 = scalar_lea.sflag [#allocation7], %s721
          %s723 = sand.u32 %s101, 1
          %s724 = scalar_lea.vmem [#allocation6], %s723
          %726 = vsyncadd %s722, 0
          %s727 = scalar_lea.hbm %s1, %s60
          %s729 = sshll.u32 %s727, 4
          %s730 = int_to_ptr.hbm [resolvable:$true] %s729
          %s731 = sshll.u32 %s724, 4
          %s732 = int_to_ptr.vmem [resolvable:$true] %s731
          %734 = dma.hbm_to_vmem [thread:$0]  %s730, 16, %s732, %s722
        $region52: #{tpu_custom_call.1} parent=43 // pred_fallthru
          _
        // Predicated region
        $region53: #{tpu_custom_call.1} parent=43 // pred_check
          %p735 = pneg %p137
        $region54: #{tpu_custom_call.1} parent=43 // pred_check_branch
          %737 = sbr.rel (%p735) target = $region56
        $region55: #{tpu_custom_call.1} parent=43 // pred_region
          %p738 = scmp.lt.s32.totalorder %s60, 1
          %s739 = scalar_select %p738, %s60, 1
          %s740 = smul.addr %s739, 8
          %s741 = scalar_lea.vmem %s2, %s740
        $region56: #{tpu_custom_call.1} parent=43 // pred_fallthru
          _
        // Predicated region
        $region57: #{tpu_custom_call.1} parent=43 // pred_check
          %p742 = pneg %p184
        $region58: #{tpu_custom_call.1} parent=43 // pred_check_branch
          %744 = sbr.rel (%p742) target = $region60
        $region59: #{tpu_custom_call.1} parent=43 // pred_region
          %s745 = sand.u32 %s53, 1
          %s746 = scalar_lea.sflag [#allocation10], %s745
          %s747 = sand.u32 %s174, 1
          %s748 = scalar_lea.vmem [#allocation9], %s747
          %750 = vsyncadd %s746, 0
          %s751 = scalar_lea.hbm %s4, %s61
          %s753 = sshll.u32 %s751, 4
          %s754 = int_to_ptr.hbm [resolvable:$true] %s753
          %s755 = sshll.u32 %s748, 4
          %s756 = int_to_ptr.vmem [resolvable:$true] %s755
          %758 = dma.hbm_to_vmem [thread:$0]  %s754, 16, %s756, %s746
        $region60: #{tpu_custom_call.1} parent=43 // pred_fallthru
          _
        // Predicated region
        $region61: #{tpu_custom_call.1} parent=43 // pred_check
          %p759 = pneg %p210
        $region62: #{tpu_custom_call.1} parent=43 // pred_check_branch
          %761 = sbr.rel (%p759) target = $region64
        $region63: #{tpu_custom_call.1} parent=43 // pred_region
          %s762 = sand.u32 %s53, 1
          %s763 = scalar_lea.sflag [#allocation10], %s762
          %s764 = sand.u32 %s200, 1
          %s765 = scalar_lea.vmem [#allocation11], %s764
          %767 = vsyncadd %s763, 0
          %s768 = scalar_lea.hbm %s5, %s61
          %s770 = sshll.u32 %s768, 4
          %s771 = int_to_ptr.hbm [resolvable:$true] %s770
          %s772 = sshll.u32 %s765, 4
          %s773 = int_to_ptr.vmem [resolvable:$true] %s772
          %775 = dma.hbm_to_vmem [thread:$0]  %s771, 16, %s773, %s763
        $region64: #{tpu_custom_call.1} parent=43 // pred_fallthru
          _
        // Predicated region
        $region65: #{tpu_custom_call.1} parent=43 // pred_check
          %p776 = pneg %p236
        $region66: #{tpu_custom_call.1} parent=43 // pred_check_branch
          %778 = sbr.rel (%p776) target = $region68
        $region67: #{tpu_custom_call.1} parent=43 // pred_region
          %s779 = sand.u32 %s53, 1
          %s780 = scalar_lea.sflag [#allocation13], %s779
          %s781 = sand.u32 %s226, 1
          %s782 = smul.addr %s781, 768
          %s783 = scalar_lea.vmem [#allocation12], %s782
          %785 = vsyncadd %s780, 0
          %s786 = smul.addr %s61, 192
          %s787 = smul.addr %s786, 4
          %s788 = scalar_lea.hbm %s6, %s787
          %s789 = sshll.u32 %s788, 4
          %s790 = int_to_ptr.hbm [resolvable:$true] %s789
          %s791 = sshll.u32 %s783, 4
          %s792 = int_to_ptr.vmem [resolvable:$true] %s791
          %797 = dma.hbm_to_vmem [thread:$0]  %s790, 12288, %s792, %s780, 768, 768, 48
        $region68: #{tpu_custom_call.1} parent=43 // pred_fallthru
          _
        // Predicated region
        $region69: #{tpu_custom_call.1} parent=43 // pred_check
          %p798 = pneg %p262
        $region70: #{tpu_custom_call.1} parent=43 // pred_check_branch
          %800 = sbr.rel (%p798) target = $region72
        $region71: #{tpu_custom_call.1} parent=43 // pred_region
          %p801 = scmp.lt.s32.totalorder %s61, 1
          %s802 = scalar_select %p801, %s61, 1
          %s803 = smul.addr %s802, 12
          %s804 = scalar_lea.vmem %s7, %s803
        $region72: #{tpu_custom_call.1} parent=43 // pred_fallthru
          _
        // Predicated region
        $region73: #{tpu_custom_call.1} parent=43 // pred_check
          %p805 = pneg %p288
        $region74: #{tpu_custom_call.1} parent=43 // pred_check_branch
          %807 = sbr.rel (%p805) target = $region76
        $region75: #{tpu_custom_call.1} parent=43 // pred_region
          %s808 = sand.u32 %s53, 1
          %s809 = scalar_lea.sflag [#allocation13], %s808
          %s810 = sand.u32 %s278, 1
          %s811 = smul.addr %s810, 256
          %s812 = scalar_lea.vmem [#allocation14], %s811
          %814 = vsyncadd %s809, 0
          %s815 = smul.addr %s61, 64
          %s816 = smul.addr %s815, 4
          %s817 = scalar_lea.hbm %s8, %s816
          %s818 = sshll.u32 %s817, 4
          %s819 = int_to_ptr.hbm [resolvable:$true] %s818
          %s820 = sshll.u32 %s812, 4
          %s821 = int_to_ptr.vmem [resolvable:$true] %s820
          %826 = dma.hbm_to_vmem [thread:$0]  %s819, 4096, %s821, %s809, 64, 64, 4
        $region76: #{tpu_custom_call.1} parent=43 // pred_fallthru
          _
        // Predicated region
        $region77: #{tpu_custom_call.1} parent=43 // pred_check
          %p827 = pneg %p314
        $region78: #{tpu_custom_call.1} parent=43 // pred_check_branch
          %829 = sbr.rel (%p827) target = $region80
        $region79: #{tpu_custom_call.1} parent=43 // pred_region
          %s830 = sand.u32 %s53, 1
          %s831 = scalar_lea.sflag [#allocation16], %s830
          %s832 = sand.u32 %s304, 1
          %s833 = scalar_lea.vmem [#allocation15], %s832
          %835 = vsyncadd %s831, 0
          %s836 = scalar_lea.hbm %s9, %s61
          %s838 = sshll.u32 %s836, 4
          %s839 = int_to_ptr.hbm [resolvable:$true] %s838
          %s840 = sshll.u32 %s833, 4
          %s841 = int_to_ptr.vmem [resolvable:$true] %s840
          %843 = dma.hbm_to_vmem [thread:$0]  %s839, 16, %s841, %s831
        $region80: #{tpu_custom_call.1} parent=43 // pred_fallthru
          _
        // Predicated region
        $region81: #{tpu_custom_call.1} parent=43 // pred_check
          %p844 = pneg %p340
        $region82: #{tpu_custom_call.1} parent=43 // pred_check_branch
          %846 = sbr.rel (%p844) target = $region84
        $region83: #{tpu_custom_call.1} parent=43 // pred_region
          %s847 = sand.u32 %s53, 1
          %s848 = scalar_lea.sflag [#allocation16], %s847
          %s849 = sand.u32 %s330, 1
          %s850 = scalar_lea.vmem [#allocation17], %s849
          %852 = vsyncadd %s848, 0
          %s853 = scalar_lea.hbm %s10, %s61
          %s855 = sshll.u32 %s853, 4
          %s856 = int_to_ptr.hbm [resolvable:$true] %s855
          %s857 = sshll.u32 %s850, 4
          %s858 = int_to_ptr.vmem [resolvable:$true] %s857
          %860 = dma.hbm_to_vmem [thread:$0]  %s856, 16, %s858, %s848
        $region84: #{tpu_custom_call.1} parent=43 // pred_fallthru
          _
        // Predicated region
        $region85: #{tpu_custom_call.1} parent=43 // pred_check
          %p861 = pneg %p366
        $region86: #{tpu_custom_call.1} parent=43 // pred_check_branch
          %863 = sbr.rel (%p861) target = $region88
        $region87: #{tpu_custom_call.1} parent=43 // pred_region
          %s864 = sand.u32 %s53, 1
          %s865 = scalar_lea.sflag [#allocation19], %s864
          %s866 = sand.u32 %s356, 1
          %s867 = scalar_lea.vmem [#allocation18], %s866
          %869 = vsyncadd %s865, 0
          %s870 = scalar_lea.hbm %s11, %s61
          %s872 = sshll.u32 %s870, 4
          %s873 = int_to_ptr.hbm [resolvable:$true] %s872
          %s874 = sshll.u32 %s867, 4
          %s875 = int_to_ptr.vmem [resolvable:$true] %s874
          %877 = dma.hbm_to_vmem [thread:$0]  %s873, 16, %s875, %s865
        $region88: #{tpu_custom_call.1} parent=43 // pred_fallthru
          _
        // Predicated region
        $region89: #{tpu_custom_call.1} parent=43 // pred_check
          %p878 = pneg %p392
        $region90: #{tpu_custom_call.1} parent=43 // pred_check_branch
          %880 = sbr.rel (%p878) target = $region92
        $region91: #{tpu_custom_call.1} parent=43 // pred_region
          %s881 = sand.u32 %s53, 1
          %s882 = scalar_lea.sflag [#allocation19], %s881
          %s883 = sand.u32 %s382, 1
          %s884 = smul.addr %s883, 128
          %s885 = scalar_lea.vmem [#allocation20], %s884
          %887 = vsyncadd %s882, 0
          %s888 = smul.addr %s61, 32
          %s889 = smul.addr %s888, 4
          %s890 = scalar_lea.hbm %s12, %s889
          %s891 = sshll.u32 %s890, 4
          %s892 = int_to_ptr.hbm [resolvable:$true] %s891
          %s893 = sshll.u32 %s885, 4
          %s894 = int_to_ptr.vmem [resolvable:$true] %s893
          %899 = dma.hbm_to_vmem [thread:$0]  %s892, 2048, %s894, %s882, 128, 128, 8
        $region92: #{tpu_custom_call.1} parent=43 // pred_fallthru
          _
        // Predicated region
        $region93: #{tpu_custom_call.1} parent=43 // pred_check
          %p900 = pneg %p418
        $region94: #{tpu_custom_call.1} parent=43 // pred_check_branch
          %902 = sbr.rel (%p900) target = $region96
        $region95: #{tpu_custom_call.1} parent=43 // pred_region
          %p903 = scmp.lt.s32.totalorder %s61, 1
          %s904 = scalar_select %p903, %s61, 1
          %s905 = smul.addr %s904, 2
          %s906 = scalar_lea.vmem %s13, %s905
        $region96: #{tpu_custom_call.1} parent=43 // pred_fallthru
          _
        // Predicated region
        $region97: #{tpu_custom_call.1} parent=43 // pred_check
          %p907 = pneg %p444
        $region98: #{tpu_custom_call.1} parent=43 // pred_check_branch
          %909 = sbr.rel (%p907) target = $region100
        $region99: #{tpu_custom_call.1} parent=43 // pred_region
          %s910 = sand.u32 %s53, 1
          %s911 = scalar_lea.sflag [#allocation22], %s910
          %s912 = sand.u32 %s434, 1
          %s913 = smul.addr %s912, 128
          %s914 = scalar_lea.vmem [#allocation21], %s913
          %916 = vsyncadd %s911, 0
          %s917 = smul.addr %s61, 32
          %s918 = smul.addr %s917, 4
          %s919 = scalar_lea.hbm %s14, %s918
          %s920 = sshll.u32 %s919, 4
          %s921 = int_to_ptr.hbm [resolvable:$true] %s920
          %s922 = sshll.u32 %s914, 4
          %s923 = int_to_ptr.vmem [resolvable:$true] %s922
          %928 = dma.hbm_to_vmem [thread:$0]  %s921, 2048, %s923, %s911, 64, 64, 4
        $region100: #{tpu_custom_call.1} parent=43 // pred_fallthru
          _
        // Predicated region
        $region101: #{tpu_custom_call.1} parent=43 // pred_check
          %p929 = pneg %p470
        $region102: #{tpu_custom_call.1} parent=43 // pred_check_branch
          %931 = sbr.rel (%p929) target = $region104
        $region103: #{tpu_custom_call.1} parent=43 // pred_region
          %p932 = scmp.lt.s32.totalorder %s61, 1
          %s933 = scalar_select %p932, %s61, 1
          %s934 = scalar_lea.vmem %s15, %s933
        $region104: #{tpu_custom_call.1} parent=43 // pred_fallthru
          _
      $region44: #{tpu_custom_call.1} parent=5 // pred_fallthru
        _
      %p935 = scmp.le.s32.totalorder 1, %s53
      %p936 = scmp.lt.s32.totalorder %s53, 5
      %p937 = pnand %p935, %p936
      %p938 = pneg %p937
      // Predicated region
      $region105: #{tpu_custom_call.1} parent=5 // pred_check
        _
      $region106: #{tpu_custom_call.1} parent=5 // pred_check_branch
        %940 = sbr.rel (%p937) target = $region108
      $region107: #{tpu_custom_call.1} parent=5 // pred_region
        %s941 = ssub.s32 %s53, 1
        %s942 = sand.u32 %s78, 1
        %s943 = scalar_lea.sflag [#allocation4], %s942
        %s944 = sand.u32 %s78, 1
        %s945 = smul.addr %s944, 8
        %s946 = scalar_lea.vmem [#allocation3], %s945
        // Predicated region
        $region109: #{tpu_custom_call.1} parent=107 // pred_check
          %p947 = pneg %p91
        $region110: #{tpu_custom_call.1} parent=107 // pred_check_branch
          %949 = sbr.rel (%p947) target = $region112
        $region111: #{tpu_custom_call.1} parent=107 // pred_region
          %951 = dma.done %s943, 128
        $region112: #{tpu_custom_call.1} parent=107 // pred_fallthru
          _
        %s952 = sand.u32 %s58, 1
        %s953 = scalar_lea.sflag [#allocation7], %s952
        %s954 = sand.u32 %s104, 1
        %s955 = scalar_lea.vmem [#allocation6], %s954
        // Predicated region
        $region113: #{tpu_custom_call.1} parent=107 // pred_check
          %p956 = pneg %p117
        $region114: #{tpu_custom_call.1} parent=107 // pred_check_branch
          %958 = sbr.rel (%p956) target = $region116
        $region115: #{tpu_custom_call.1} parent=107 // pred_region
          %960 = dma.done %s953, 16
        $region116: #{tpu_custom_call.1} parent=107 // pred_fallthru
          _
        // Predicated region
        $region117: #{tpu_custom_call.1} parent=107 // pred_check
          %p961 = pneg %p164
        $region118: #{tpu_custom_call.1} parent=107 // pred_check_branch
          %963 = sbr.rel (%p961) target = $region120
        $region119: #{tpu_custom_call.1} parent=107 // pred_region
          %965 = dma.done [#allocation7], 128
        $region120: #{tpu_custom_call.1} parent=107 // pred_fallthru
          _
        %s966 = sand.u32 %s58, 1
        %s967 = scalar_lea.sflag [#allocation10], %s966
        %s968 = sand.u32 %s177, 1
        %s969 = scalar_lea.vmem [#allocation9], %s968
        // Predicated region
        $region121: #{tpu_custom_call.1} parent=107 // pred_check
          %p970 = pneg %p190
        $region122: #{tpu_custom_call.1} parent=107 // pred_check_branch
          %972 = sbr.rel (%p970) target = $region124
        $region123: #{tpu_custom_call.1} parent=107 // pred_region
          %974 = dma.done %s967, 16
        $region124: #{tpu_custom_call.1} parent=107 // pred_fallthru
          _
        %s975 = sand.u32 %s58, 1
        %s976 = scalar_lea.sflag [#allocation10], %s975
        %s977 = sand.u32 %s203, 1
        %s978 = scalar_lea.vmem [#allocation11], %s977
        // Predicated region
        $region125: #{tpu_custom_call.1} parent=107 // pred_check
          %p979 = pneg %p216
        $region126: #{tpu_custom_call.1} parent=107 // pred_check_branch
          %981 = sbr.rel (%p979) target = $region128
        $region127: #{tpu_custom_call.1} parent=107 // pred_region
          %983 = dma.done %s976, 16
        $region128: #{tpu_custom_call.1} parent=107 // pred_fallthru
          _
        %s984 = sand.u32 %s58, 1
        %s985 = scalar_lea.sflag [#allocation13], %s984
        %s986 = sand.u32 %s229, 1
        %s987 = smul.addr %s986, 768
        %s988 = scalar_lea.vmem [#allocation12], %s987
        // Predicated region
        $region129: #{tpu_custom_call.1} parent=107 // pred_check
          %p989 = pneg %p242
        $region130: #{tpu_custom_call.1} parent=107 // pred_check_branch
          %991 = sbr.rel (%p989) target = $region132
        $region131: #{tpu_custom_call.1} parent=107 // pred_region
          %993 = dma.done %s985, 12288
        $region132: #{tpu_custom_call.1} parent=107 // pred_fallthru
          _
        %s994 = sand.u32 %s58, 1
        %s995 = scalar_lea.sflag [#allocation13], %s994
        %s996 = sand.u32 %s281, 1
        %s997 = smul.addr %s996, 256
        %s998 = scalar_lea.vmem [#allocation14], %s997
        // Predicated region
        $region133: #{tpu_custom_call.1} parent=107 // pred_check
          %p999 = pneg %p294
        $region134: #{tpu_custom_call.1} parent=107 // pred_check_branch
          %1001 = sbr.rel (%p999) target = $region136
        $region135: #{tpu_custom_call.1} parent=107 // pred_region
          %1003 = dma.done %s995, 4096
        $region136: #{tpu_custom_call.1} parent=107 // pred_fallthru
          _
        %s1004 = sand.u32 %s58, 1
        %s1005 = scalar_lea.sflag [#allocation16], %s1004
        %s1006 = sand.u32 %s307, 1
        %s1007 = scalar_lea.vmem [#allocation15], %s1006
        // Predicated region
        $region137: #{tpu_custom_call.1} parent=107 // pred_check
          %p1008 = pneg %p320
        $region138: #{tpu_custom_call.1} parent=107 // pred_check_branch
          %1010 = sbr.rel (%p1008) target = $region140
        $region139: #{tpu_custom_call.1} parent=107 // pred_region
          %1012 = dma.done %s1005, 16
        $region140: #{tpu_custom_call.1} parent=107 // pred_fallthru
          _
        %s1013 = sand.u32 %s58, 1
        %s1014 = scalar_lea.sflag [#allocation16], %s1013
        %s1015 = sand.u32 %s333, 1
        %s1016 = scalar_lea.vmem [#allocation17], %s1015
        // Predicated region
        $region141: #{tpu_custom_call.1} parent=107 // pred_check
          %p1017 = pneg %p346
        $region142: #{tpu_custom_call.1} parent=107 // pred_check_branch
          %1019 = sbr.rel (%p1017) target = $region144
        $region143: #{tpu_custom_call.1} parent=107 // pred_region
          %1021 = dma.done %s1014, 16
        $region144: #{tpu_custom_call.1} parent=107 // pred_fallthru
          _
        %s1022 = sand.u32 %s58, 1
        %s1023 = scalar_lea.sflag [#allocation19], %s1022
        %s1024 = sand.u32 %s359, 1
        %s1025 = scalar_lea.vmem [#allocation18], %s1024
        // Predicated region
        $region145: #{tpu_custom_call.1} parent=107 // pred_check
          %p1026 = pneg %p372
        $region146: #{tpu_custom_call.1} parent=107 // pred_check_branch
          %1028 = sbr.rel (%p1026) target = $region148
        $region147: #{tpu_custom_call.1} parent=107 // pred_region
          %1030 = dma.done %s1023, 16
        $region148: #{tpu_custom_call.1} parent=107 // pred_fallthru
          _
        %s1031 = sand.u32 %s58, 1
        %s1032 = scalar_lea.sflag [#allocation19], %s1031
        %s1033 = sand.u32 %s385, 1
        %s1034 = smul.addr %s1033, 128
        %s1035 = scalar_lea.vmem [#allocation20], %s1034
        // Predicated region
        $region149: #{tpu_custom_call.1} parent=107 // pred_check
          %p1036 = pneg %p398
        $region150: #{tpu_custom_call.1} parent=107 // pred_check_branch
          %1038 = sbr.rel (%p1036) target = $region152
        $region151: #{tpu_custom_call.1} parent=107 // pred_region
          %1040 = dma.done %s1032, 2048
        $region152: #{tpu_custom_call.1} parent=107 // pred_fallthru
          _
        %s1041 = sand.u32 %s58, 1
        %s1042 = scalar_lea.sflag [#allocation22], %s1041
        %s1043 = sand.u32 %s437, 1
        %s1044 = smul.addr %s1043, 128
        %s1045 = scalar_lea.vmem [#allocation21], %s1044
        // Predicated region
        $region153: #{tpu_custom_call.1} parent=107 // pred_check
          %p1046 = pneg %p450
        $region154: #{tpu_custom_call.1} parent=107 // pred_check_branch
          %1048 = sbr.rel (%p1046) target = $region156
        $region155: #{tpu_custom_call.1} parent=107 // pred_region
          %1050 = dma.done %s1042, 2048
        $region156: #{tpu_custom_call.1} parent=107 // pred_fallthru
          _
        // Predicated region
        $region157: #{tpu_custom_call.1} parent=107 // pred_check
          %p1051 = pneg %p539
        $region158: #{tpu_custom_call.1} parent=107 // pred_check_branch
          %1053 = sbr.rel (%p1051) target = $region160
        $region159: #{tpu_custom_call.1} parent=107 // pred_region
          %1055 = dma.done [#allocation22], 1024
        $region160: #{tpu_custom_call.1} parent=107 // pred_fallthru
          _
        // Predicated region
        $region161: #{tpu_custom_call.1} parent=107 // pred_check
          %p1056 = pneg %p581
        $region162: #{tpu_custom_call.1} parent=107 // pred_check_branch
          %1058 = sbr.rel (%p1056) target = $region164
        $region163: #{tpu_custom_call.1} parent=107 // pred_region
          %1060 = dma.done [#allocation25], 1024
        $region164: #{tpu_custom_call.1} parent=107 // pred_fallthru
          _
        %s1061 = sand.u32 %s78, 1
        %s1062 = scalar_lea.sflag [#allocation4], %s1061
        %s1063 = sand.u32 %s78, 1
        %s1064 = smul.addr %s1063, 8
        %s1065 = scalar_lea.vmem [#allocation3], %s1064
        %p1066 = pneg %p91
        %p1067 = pneg %p88
        %s1068 = sand.u32 %s58, 1
        %s1069 = scalar_lea.sflag [#allocation7], %s1068
        %s1070 = sand.u32 %s104, 1
        %s1071 = scalar_lea.vmem [#allocation6], %s1070
        %p1072 = pneg %p117
        %p1073 = pneg %p114
        %p1074 = scmp.lt.s32.totalorder %s62, 1
        %s1075 = scalar_select %p1074, %s62, 1
        %s1076 = smul.addr %s1075, 8
        %s1077 = scalar_lea.vmem %s2, %s1076
        %p1078 = pneg %p143
        %p1079 = pneg %p140
        %p1080 = pneg %p164
        %p1081 = pneg %p161
        %s1082 = sand.u32 %s58, 1
        %s1083 = scalar_lea.sflag [#allocation10], %s1082
        %s1084 = sand.u32 %s177, 1
        %s1085 = scalar_lea.vmem [#allocation9], %s1084
        %p1086 = pneg %p190
        %p1087 = pneg %p187
        %s1088 = sand.u32 %s58, 1
        %s1089 = scalar_lea.sflag [#allocation10], %s1088
        %s1090 = sand.u32 %s203, 1
        %s1091 = scalar_lea.vmem [#allocation11], %s1090
        %p1092 = pneg %p216
        %p1093 = pneg %p213
        %s1094 = sand.u32 %s58, 1
        %s1095 = scalar_lea.sflag [#allocation13], %s1094
        %s1096 = sand.u32 %s229, 1
        %s1097 = smul.addr %s1096, 768
        %s1098 = scalar_lea.vmem [#allocation12], %s1097
        %p1099 = pneg %p242
        %p1100 = pneg %p239
        %p1101 = scmp.lt.s32.totalorder %s63, 1
        %s1102 = scalar_select %p1101, %s63, 1
        %s1103 = smul.addr %s1102, 12
        %s1104 = scalar_lea.vmem %s7, %s1103
        %p1105 = pneg %p268
        %p1106 = pneg %p265
        %s1107 = sand.u32 %s58, 1
        %s1108 = scalar_lea.sflag [#allocation13], %s1107
        %s1109 = sand.u32 %s281, 1
        %s1110 = smul.addr %s1109, 256
        %s1111 = scalar_lea.vmem [#allocation14], %s1110
        %p1112 = pneg %p294
        %p1113 = pneg %p291
        %s1114 = sand.u32 %s58, 1
        %s1115 = scalar_lea.sflag [#allocation16], %s1114
        %s1116 = sand.u32 %s307, 1
        %s1117 = scalar_lea.vmem [#allocation15], %s1116
        %p1118 = pneg %p320
        %p1119 = pneg %p317
        %s1120 = sand.u32 %s58, 1
        %s1121 = scalar_lea.sflag [#allocation16], %s1120
        %s1122 = sand.u32 %s333, 1
        %s1123 = scalar_lea.vmem [#allocation17], %s1122
        %p1124 = pneg %p346
        %p1125 = pneg %p343
        %s1126 = sand.u32 %s58, 1
        %s1127 = scalar_lea.sflag [#allocation19], %s1126
        %s1128 = sand.u32 %s359, 1
        %s1129 = scalar_lea.vmem [#allocation18], %s1128
        %p1130 = pneg %p372
        %p1131 = pneg %p369
        %s1132 = sand.u32 %s58, 1
        %s1133 = scalar_lea.sflag [#allocation19], %s1132
        %s1134 = sand.u32 %s385, 1
        %s1135 = smul.addr %s1134, 128
        %s1136 = scalar_lea.vmem [#allocation20], %s1135
        %p1137 = pneg %p398
        %p1138 = pneg %p395
        %p1139 = scmp.lt.s32.totalorder %s63, 1
        %s1140 = scalar_select %p1139, %s63, 1
        %s1141 = smul.addr %s1140, 2
        %s1142 = scalar_lea.vmem %s13, %s1141
        %p1143 = pneg %p424
        %p1144 = pneg %p421
        %s1145 = sand.u32 %s58, 1
        %s1146 = scalar_lea.sflag [#allocation22], %s1145
        %s1147 = sand.u32 %s437, 1
        %s1148 = smul.addr %s1147, 128
        %s1149 = scalar_lea.vmem [#allocation21], %s1148
        %p1150 = pneg %p450
        %p1151 = pneg %p447
        %p1152 = scmp.lt.s32.totalorder %s63, 1
        %s1153 = scalar_select %p1152, %s63, 1
        %s1154 = scalar_lea.vmem %s15, %s1153
        %p1155 = pneg %p476
        %p1156 = pneg %p473
        %p1157 = pneg %p497
        %p1158 = pneg %p494
        %p1159 = pneg %p518
        %p1160 = pneg %p515
        %p1161 = pneg %p539
        %p1162 = pneg %p536
        %p1163 = pneg %p560
        %p1164 = pneg %p557
        %p1165 = pneg %p581
        %p1166 = pneg %p578
        %p1167 = pneg %p602
        %p1168 = pneg %p599
        %p1169 = pneg %p628
        %p1170 = pneg %p625
        %s1171 = sand.u32 %s615, 1
        %s1172 = scalar_lea.sflag [#allocation5], %s1171
        %s1173 = sand.u32 %s615, 1
        %s1174 = scalar_lea.vmem [#allocation26], %s1173
        %p1175 = scmp.lt.s32.totalorder %s62, 1
        %s1176 = scalar_select %p1175, %s62, 1
        %s1177 = smul.addr %s1176, 8
        %s1178 = scalar_lea.vmem %s2, %s1177
        %p1179 = scmp.lt.s32.totalorder %s63, 1
        %s1180 = scalar_select %p1179, %s63, 1
        %s1181 = smul.addr %s1180, 12
        %s1182 = scalar_lea.vmem %s7, %s1181
        %p1183 = scmp.lt.s32.totalorder %s63, 1
        %s1184 = scalar_select %p1183, %s63, 1
        %s1185 = smul.addr %s1184, 2
        %s1186 = scalar_lea.vmem %s13, %s1185
        %p1187 = scmp.lt.s32.totalorder %s63, 1
        %s1188 = scalar_select %p1187, %s63, 1
        %s1189 = scalar_lea.vmem %s15, %s1188
        %p1191 = scmp.eq.s32.totalorder %s63, 0
        // Predicated region
        $region165: #{tpu_custom_call.1} parent=107 // pred_check
          %p1192 = pneg %p1191
        $region166: #{tpu_custom_call.1} parent=107 // pred_check_branch
          %1194 = sbr.rel (%p1192) target = $region168
        $region167: #{tpu_custom_call.1} parent=107 // pred_region
          %v1195 = vld [vmem:[%s946] sm:$0xff]
          %v1196 = vld [vmem:[%s1178] sm:$0xff]
          %1198 = vset.pattern.permute.xlu0 0
          %1199 = vperm.xlu0 %1198, %v1196
          %v1200 = vpop.permute.xlu0 %1199
          %v1202 = vmul.f32 %v1195, %v1200
          %v1203 = vld [vmem:[#allocation8] sm:$0xff]
          %v1204 = vadd.f32 %v1202, %v1203
          %1205 = vst [vmem:[#allocation2] sm:$0xff] %v1204
        $region168: #{tpu_custom_call.1} parent=107 // pred_fallthru
          _
        %v1206 = vld [vmem:[#allocation2] sm:$0xff]
        %v1207 = vld [vmem:[%s955] sm:$0x1]
        %v1208 = vsub.f32 %v1207, 1.0
        %v1209 = vmul.f32 %v1208, 1e+18
        %v1210 = vld [vmem:[%s969] sm:$0x1]
        %v1211 = vld [vmem:[%s978] sm:$0x1]
        %1212 = vadd.xlane.f32.xlu0 %v1206
        %v1213 = vpop.xlane.xlu0 %1212
        %v1214 = vrcp.pop 128.0
        %v1215 = vmul.f32 128.0, %v1214
        %v1216 = vsub.f32 1.0, %v1215
        %v1217 = vmul.f32 %v1214, %v1216
        %v1218 = vadd.f32 %v1214, %v1217
        %vm1219 = vweird.f32 %v1214
        %v1220 = vsel %vm1219, %v1214, %v1218
        %v1221 = vmul.f32 %v1213, %v1220
        %v1222 = vsub.f32 %v1206, %v1221
        %v1223 = vmul.f32 %v1222, %v1222
        %1224 = vadd.xlane.f32.xlu0 %v1223
        %v1225 = vpop.xlane.xlu0 %1224
        %v1226 = vmul.f32 %v1225, %v1220
        %v1227 = vadd.f32 %v1226, 1e-06
        %v1228 = vrsqrt.pop %v1227
        %v1229 = vmul.f32 %v1228, %v1227
        %v1230 = vmul.f32 %v1229, %v1228
        %v1231 = vmul.f32 0.5, %v1230
        %v1232 = vsub.f32 1.5, %v1231
        %v1233 = vmul.f32 %v1228, %v1232
        %vm1234 = vweird.f32 %v1227
        %vm1235 = vweird.f32 %v1228
        %vm1236 = vmor %vm1234, %vm1235
        %v1237 = vsel %vm1236, %v1228, %v1233
        %v1238 = vmul.f32 %v1222, %v1237
        %v1240 = vperm.slane %v1210, 0
        %v1242 = vmul.f32 %v1238, %v1240
        %v1244 = vperm.slane %v1211, 0
        %v1246 = vadd.f32 %v1242, %v1244
        %p1247 = scmp.gt.s32.totalorder %s63, 0
        %s1248 = scalar_select %p1247, 1, 0
        %s1249 = scvt.s32.f32 %s1248
        %v1250 = vsub.f32 %v1246, %v1206
        %v1251 = vstv %s1249
        %v1252 = vmul.f32 %v1251, %v1250
        %v1253 = vadd.f32 %v1206, %v1252
        %v1254 = vpack.c.bf16 %v1253, %v1253
        %v1255 = vld [vmem:[%s988] sm:$0xff]
        %v1256 = vld [vmem:[%s988 + $0x8] sm:$0xff]
        %v1257 = vld [vmem:[%s988 + $0x10] sm:$0xff]
        %v1258 = vld [vmem:[%s988 + $0x18] sm:$0xff]
        %v1259 = vld [vmem:[%s988 + $0x20] sm:$0xff]
        %v1260 = vld [vmem:[%s988 + $0x28] sm:$0xff]
        %v1261 = vld [vmem:[%s988 + $0x30] sm:$0xff]
        %v1262 = vld [vmem:[%s988 + $0x38] sm:$0xff]
        %v1263 = vld [vmem:[%s988 + $0x40] sm:$0xff]
        %v1264 = vld [vmem:[%s988 + $0x48] sm:$0xff]
        %v1265 = vld [vmem:[%s988 + $0x50] sm:$0xff]
        %v1266 = vld [vmem:[%s988 + $0x58] sm:$0xff]
        %v1267 = vld [vmem:[%s988 + $0x60] sm:$0xff]
        %v1268 = vld [vmem:[%s988 + $0x68] sm:$0xff]
        %v1269 = vld [vmem:[%s988 + $0x70] sm:$0xff]
        %v1270 = vld [vmem:[%s988 + $0x78] sm:$0xff]
        %v1271 = vld [vmem:[%s988 + $0x80] sm:$0xff]
        %v1272 = vld [vmem:[%s988 + $0x88] sm:$0xff]
        %v1273 = vld [vmem:[%s988 + $0x90] sm:$0xff]
        %v1274 = vld [vmem:[%s988 + $0x98] sm:$0xff]
        %v1275 = vld [vmem:[%s988 + $0xa0] sm:$0xff]
        %v1276 = vld [vmem:[%s988 + $0xa8] sm:$0xff]
        %v1277 = vld [vmem:[%s988 + $0xb0] sm:$0xff]
        %v1278 = vld [vmem:[%s988 + $0xb8] sm:$0xff]
        %v1279 = vld [vmem:[%s988 + $0xc0] sm:$0xff]
        %v1280 = vld [vmem:[%s988 + $0xc8] sm:$0xff]
        %v1281 = vld [vmem:[%s988 + $0xd0] sm:$0xff]
        %v1282 = vld [vmem:[%s988 + $0xd8] sm:$0xff]
        %v1283 = vld [vmem:[%s988 + $0xe0] sm:$0xff]
        %v1284 = vld [vmem:[%s988 + $0xe8] sm:$0xff]
        %v1285 = vld [vmem:[%s988 + $0xf0] sm:$0xff]
        %v1286 = vld [vmem:[%s988 + $0xf8] sm:$0xff]
        %v1287 = vld [vmem:[%s988 + $0x100] sm:$0xff]
        %v1288 = vld [vmem:[%s988 + $0x108] sm:$0xff]
        %v1289 = vld [vmem:[%s988 + $0x110] sm:$0xff]
        %v1290 = vld [vmem:[%s988 + $0x118] sm:$0xff]
        %v1291 = vld [vmem:[%s988 + $0x120] sm:$0xff]
        %v1292 = vld [vmem:[%s988 + $0x128] sm:$0xff]
        %v1293 = vld [vmem:[%s988 + $0x130] sm:$0xff]
        %v1294 = vld [vmem:[%s988 + $0x138] sm:$0xff]
        %v1295 = vld [vmem:[%s988 + $0x140] sm:$0xff]
        %v1296 = vld [vmem:[%s988 + $0x148] sm:$0xff]
        %v1297 = vld [vmem:[%s988 + $0x150] sm:$0xff]
        %v1298 = vld [vmem:[%s988 + $0x158] sm:$0xff]
        %v1299 = vld [vmem:[%s988 + $0x160] sm:$0xff]
        %v1300 = vld [vmem:[%s988 + $0x168] sm:$0xff]
        %v1301 = vld [vmem:[%s988 + $0x170] sm:$0xff]
        %v1302 = vld [vmem:[%s988 + $0x178] sm:$0xff]
        %v1303 = vld [vmem:[%s988 + $0x180] sm:$0xff]
        %v1304 = vld [vmem:[%s988 + $0x188] sm:$0xff]
        %v1305 = vld [vmem:[%s988 + $0x190] sm:$0xff]
        %v1306 = vld [vmem:[%s988 + $0x198] sm:$0xff]
        %v1307 = vld [vmem:[%s988 + $0x1a0] sm:$0xff]
        %v1308 = vld [vmem:[%s988 + $0x1a8] sm:$0xff]
        %v1309 = vld [vmem:[%s988 + $0x1b0] sm:$0xff]
        %v1310 = vld [vmem:[%s988 + $0x1b8] sm:$0xff]
        %v1311 = vld [vmem:[%s988 + $0x1c0] sm:$0xff]
        %v1312 = vld [vmem:[%s988 + $0x1c8] sm:$0xff]
        %v1313 = vld [vmem:[%s988 + $0x1d0] sm:$0xff]
        %v1314 = vld [vmem:[%s988 + $0x1d8] sm:$0xff]
        %v1315 = vld [vmem:[%s988 + $0x1e0] sm:$0xff]
        %v1316 = vld [vmem:[%s988 + $0x1e8] sm:$0xff]
        %v1317 = vld [vmem:[%s988 + $0x1f0] sm:$0xff]
        %v1318 = vld [vmem:[%s988 + $0x1f8] sm:$0xff]
        %v1319 = vld [vmem:[%s988 + $0x200] sm:$0xff]
        %v1320 = vld [vmem:[%s988 + $0x208] sm:$0xff]
        %v1321 = vld [vmem:[%s988 + $0x210] sm:$0xff]
        %v1322 = vld [vmem:[%s988 + $0x218] sm:$0xff]
        %v1323 = vld [vmem:[%s988 + $0x220] sm:$0xff]
        %v1324 = vld [vmem:[%s988 + $0x228] sm:$0xff]
        %v1325 = vld [vmem:[%s988 + $0x230] sm:$0xff]
        %v1326 = vld [vmem:[%s988 + $0x238] sm:$0xff]
        %v1327 = vld [vmem:[%s988 + $0x240] sm:$0xff]
        %v1328 = vld [vmem:[%s988 + $0x248] sm:$0xff]
        %v1329 = vld [vmem:[%s988 + $0x250] sm:$0xff]
        %v1330 = vld [vmem:[%s988 + $0x258] sm:$0xff]
        %v1331 = vld [vmem:[%s988 + $0x260] sm:$0xff]
        %v1332 = vld [vmem:[%s988 + $0x268] sm:$0xff]
        %v1333 = vld [vmem:[%s988 + $0x270] sm:$0xff]
        %v1334 = vld [vmem:[%s988 + $0x278] sm:$0xff]
        %v1335 = vld [vmem:[%s988 + $0x280] sm:$0xff]
        %v1336 = vld [vmem:[%s988 + $0x288] sm:$0xff]
        %v1337 = vld [vmem:[%s988 + $0x290] sm:$0xff]
        %v1338 = vld [vmem:[%s988 + $0x298] sm:$0xff]
        %v1339 = vld [vmem:[%s988 + $0x2a0] sm:$0xff]
        %v1340 = vld [vmem:[%s988 + $0x2a8] sm:$0xff]
        %v1341 = vld [vmem:[%s988 + $0x2b0] sm:$0xff]
        %v1342 = vld [vmem:[%s988 + $0x2b8] sm:$0xff]
        %v1343 = vld [vmem:[%s988 + $0x2c0] sm:$0xff]
        %v1344 = vld [vmem:[%s988 + $0x2c8] sm:$0xff]
        %v1345 = vld [vmem:[%s988 + $0x2d0] sm:$0xff]
        %v1346 = vld [vmem:[%s988 + $0x2d8] sm:$0xff]
        %v1347 = vld [vmem:[%s988 + $0x2e0] sm:$0xff]
        %v1348 = vld [vmem:[%s988 + $0x2e8] sm:$0xff]
        %v1349 = vld [vmem:[%s988 + $0x2f0] sm:$0xff]
        %v1350 = vld [vmem:[%s988 + $0x2f8] sm:$0xff]
        %v1351 = vld [vmem:[%s1182] sm:$0xff]
        %v1352 = vld [vmem:[%s1182 + $0x8] sm:$0xf]
        %v1355 = vperm.slane %v1351, 0
        %v1356 = vperm.slane %v1351, 1
        %v1357 = vperm.slane %v1351, 2
        %v1358 = vperm.slane %v1351, 3
        %v1359 = vperm.slane %v1351, 4
        %v1360 = vperm.slane %v1351, 5
        %v1361 = vperm.slane %v1351, 6
        %v1362 = vperm.slane %v1351, 7
        %v1363 = vperm.slane %v1352, 0
        %v1364 = vperm.slane %v1352, 1
        %v1365 = vperm.slane %v1352, 2
        %v1366 = vperm.slane %v1352, 3
        %v1475 = vunpack.c.l.b16 %v1255
        %v1476 = vunpack.c.h.b16 %v1255
        %v1477 = vunpack.c.l.b16 %v1256
        %v1478 = vunpack.c.h.b16 %v1256
        %v1479 = vunpack.c.l.b16 %v1257
        %v1480 = vunpack.c.h.b16 %v1257
        %v1481 = vunpack.c.l.b16 %v1258
        %v1482 = vunpack.c.h.b16 %v1258
        %v1483 = vunpack.c.l.b16 %v1259
        %v1484 = vunpack.c.h.b16 %v1259
        %v1485 = vunpack.c.l.b16 %v1260
        %v1486 = vunpack.c.h.b16 %v1260
        %v1487 = vunpack.c.l.b16 %v1261
        %v1488 = vunpack.c.h.b16 %v1261
        %v1489 = vunpack.c.l.b16 %v1262
        %v1490 = vunpack.c.h.b16 %v1262
        %v1491 = vunpack.c.l.b16 %v1263
        %v1492 = vunpack.c.h.b16 %v1263
        %v1493 = vunpack.c.l.b16 %v1264
        %v1494 = vunpack.c.h.b16 %v1264
        %v1495 = vunpack.c.l.b16 %v1265
        %v1496 = vunpack.c.h.b16 %v1265
        %v1497 = vunpack.c.l.b16 %v1266
        %v1498 = vunpack.c.h.b16 %v1266
        %v1499 = vunpack.c.l.b16 %v1267
        %v1500 = vunpack.c.h.b16 %v1267
        %v1501 = vunpack.c.l.b16 %v1268
        %v1502 = vunpack.c.h.b16 %v1268
        %v1503 = vunpack.c.l.b16 %v1269
        %v1504 = vunpack.c.h.b16 %v1269
        %v1505 = vunpack.c.l.b16 %v1270
        %v1506 = vunpack.c.h.b16 %v1270
        %v1507 = vunpack.c.l.b16 %v1271
        %v1508 = vunpack.c.h.b16 %v1271
        %v1509 = vunpack.c.l.b16 %v1272
        %v1510 = vunpack.c.h.b16 %v1272
        %v1511 = vunpack.c.l.b16 %v1273
        %v1512 = vunpack.c.h.b16 %v1273
        %v1513 = vunpack.c.l.b16 %v1274
        %v1514 = vunpack.c.h.b16 %v1274
        %v1515 = vunpack.c.l.b16 %v1275
        %v1516 = vunpack.c.h.b16 %v1275
        %v1517 = vunpack.c.l.b16 %v1276
        %v1518 = vunpack.c.h.b16 %v1276
        %v1519 = vunpack.c.l.b16 %v1277
        %v1520 = vunpack.c.h.b16 %v1277
        %v1521 = vunpack.c.l.b16 %v1278
        %v1522 = vunpack.c.h.b16 %v1278
        %v1523 = vunpack.c.l.b16 %v1279
        %v1524 = vunpack.c.h.b16 %v1279
        %v1525 = vunpack.c.l.b16 %v1280
        %v1526 = vunpack.c.h.b16 %v1280
        %v1527 = vunpack.c.l.b16 %v1281
        %v1528 = vunpack.c.h.b16 %v1281
        %v1529 = vunpack.c.l.b16 %v1282
        %v1530 = vunpack.c.h.b16 %v1282
        %v1531 = vunpack.c.l.b16 %v1283
        %v1532 = vunpack.c.h.b16 %v1283
        %v1533 = vunpack.c.l.b16 %v1284
        %v1534 = vunpack.c.h.b16 %v1284
        %v1535 = vunpack.c.l.b16 %v1285
        %v1536 = vunpack.c.h.b16 %v1285
        %v1537 = vunpack.c.l.b16 %v1286
        %v1538 = vunpack.c.h.b16 %v1286
        %v1539 = vunpack.c.l.b16 %v1287
        %v1540 = vunpack.c.h.b16 %v1287
        %v1541 = vunpack.c.l.b16 %v1288
        %v1542 = vunpack.c.h.b16 %v1288
        %v1543 = vunpack.c.l.b16 %v1289
        %v1544 = vunpack.c.h.b16 %v1289
        %v1545 = vunpack.c.l.b16 %v1290
        %v1546 = vunpack.c.h.b16 %v1290
        %v1547 = vunpack.c.l.b16 %v1291
        %v1548 = vunpack.c.h.b16 %v1291
        %v1549 = vunpack.c.l.b16 %v1292
        %v1550 = vunpack.c.h.b16 %v1292
        %v1551 = vunpack.c.l.b16 %v1293
        %v1552 = vunpack.c.h.b16 %v1293
        %v1553 = vunpack.c.l.b16 %v1294
        %v1554 = vunpack.c.h.b16 %v1294
        %v1555 = vunpack.c.l.b16 %v1295
        %v1556 = vunpack.c.h.b16 %v1295
        %v1557 = vunpack.c.l.b16 %v1296
        %v1558 = vunpack.c.h.b16 %v1296
        %v1559 = vunpack.c.l.b16 %v1297
        %v1560 = vunpack.c.h.b16 %v1297
        %v1561 = vunpack.c.l.b16 %v1298
        %v1562 = vunpack.c.h.b16 %v1298
        %v1563 = vunpack.c.l.b16 %v1299
        %v1564 = vunpack.c.h.b16 %v1299
        %v1565 = vunpack.c.l.b16 %v1300
        %v1566 = vunpack.c.h.b16 %v1300
        %v1567 = vunpack.c.l.b16 %v1301
        %v1568 = vunpack.c.h.b16 %v1301
        %v1569 = vunpack.c.l.b16 %v1302
        %v1570 = vunpack.c.h.b16 %v1302
        %v1571 = vunpack.c.l.b16 %v1303
        %v1572 = vunpack.c.h.b16 %v1303
        %v1573 = vunpack.c.l.b16 %v1304
        %v1574 = vunpack.c.h.b16 %v1304
        %v1575 = vunpack.c.l.b16 %v1305
        %v1576 = vunpack.c.h.b16 %v1305
        %v1577 = vunpack.c.l.b16 %v1306
        %v1578 = vunpack.c.h.b16 %v1306
        %v1579 = vunpack.c.l.b16 %v1307
        %v1580 = vunpack.c.h.b16 %v1307
        %v1581 = vunpack.c.l.b16 %v1308
        %v1582 = vunpack.c.h.b16 %v1308
        %v1583 = vunpack.c.l.b16 %v1309
        %v1584 = vunpack.c.h.b16 %v1309
        %v1585 = vunpack.c.l.b16 %v1310
        %v1586 = vunpack.c.h.b16 %v1310
        %v1587 = vunpack.c.l.b16 %v1311
        %v1588 = vunpack.c.h.b16 %v1311
        %v1589 = vunpack.c.l.b16 %v1312
        %v1590 = vunpack.c.h.b16 %v1312
        %v1591 = vunpack.c.l.b16 %v1313
        %v1592 = vunpack.c.h.b16 %v1313
        %v1593 = vunpack.c.l.b16 %v1314
        %v1594 = vunpack.c.h.b16 %v1314
        %v1595 = vunpack.c.l.b16 %v1315
        %v1596 = vunpack.c.h.b16 %v1315
        %v1597 = vunpack.c.l.b16 %v1316
        %v1598 = vunpack.c.h.b16 %v1316
        %v1599 = vunpack.c.l.b16 %v1317
        %v1600 = vunpack.c.h.b16 %v1317
        %v1601 = vunpack.c.l.b16 %v1318
        %v1602 = vunpack.c.h.b16 %v1318
        %v1603 = vunpack.c.l.b16 %v1319
        %v1604 = vunpack.c.h.b16 %v1319
        %v1605 = vunpack.c.l.b16 %v1320
        %v1606 = vunpack.c.h.b16 %v1320
        %v1607 = vunpack.c.l.b16 %v1321
        %v1608 = vunpack.c.h.b16 %v1321
        %v1609 = vunpack.c.l.b16 %v1322
        %v1610 = vunpack.c.h.b16 %v1322
        %v1611 = vunpack.c.l.b16 %v1323
        %v1612 = vunpack.c.h.b16 %v1323
        %v1613 = vunpack.c.l.b16 %v1324
        %v1614 = vunpack.c.h.b16 %v1324
        %v1615 = vunpack.c.l.b16 %v1325
        %v1616 = vunpack.c.h.b16 %v1325
        %v1617 = vunpack.c.l.b16 %v1326
        %v1618 = vunpack.c.h.b16 %v1326
        %v1619 = vunpack.c.l.b16 %v1327
        %v1620 = vunpack.c.h.b16 %v1327
        %v1621 = vunpack.c.l.b16 %v1328
        %v1622 = vunpack.c.h.b16 %v1328
        %v1623 = vunpack.c.l.b16 %v1329
        %v1624 = vunpack.c.h.b16 %v1329
        %v1625 = vunpack.c.l.b16 %v1330
        %v1626 = vunpack.c.h.b16 %v1330
        %v1627 = vunpack.c.l.b16 %v1331
        %v1628 = vunpack.c.h.b16 %v1331
        %v1629 = vunpack.c.l.b16 %v1332
        %v1630 = vunpack.c.h.b16 %v1332
        %v1631 = vunpack.c.l.b16 %v1333
        %v1632 = vunpack.c.h.b16 %v1333
        %v1633 = vunpack.c.l.b16 %v1334
        %v1634 = vunpack.c.h.b16 %v1334
        %v1635 = vunpack.c.l.b16 %v1335
        %v1636 = vunpack.c.h.b16 %v1335
        %v1637 = vunpack.c.l.b16 %v1336
        %v1638 = vunpack.c.h.b16 %v1336
        %v1639 = vunpack.c.l.b16 %v1337
        %v1640 = vunpack.c.h.b16 %v1337
        %v1641 = vunpack.c.l.b16 %v1338
        %v1642 = vunpack.c.h.b16 %v1338
        %v1643 = vunpack.c.l.b16 %v1339
        %v1644 = vunpack.c.h.b16 %v1339
        %v1645 = vunpack.c.l.b16 %v1340
        %v1646 = vunpack.c.h.b16 %v1340
        %v1647 = vunpack.c.l.b16 %v1341
        %v1648 = vunpack.c.h.b16 %v1341
        %v1649 = vunpack.c.l.b16 %v1342
        %v1650 = vunpack.c.h.b16 %v1342
        %v1651 = vunpack.c.l.b16 %v1343
        %v1652 = vunpack.c.h.b16 %v1343
        %v1653 = vunpack.c.l.b16 %v1344
        %v1654 = vunpack.c.h.b16 %v1344
        %v1655 = vunpack.c.l.b16 %v1345
        %v1656 = vunpack.c.h.b16 %v1345
        %v1657 = vunpack.c.l.b16 %v1346
        %v1658 = vunpack.c.h.b16 %v1346
        %v1659 = vunpack.c.l.b16 %v1347
        %v1660 = vunpack.c.h.b16 %v1347
        %v1661 = vunpack.c.l.b16 %v1348
        %v1662 = vunpack.c.h.b16 %v1348
        %v1663 = vunpack.c.l.b16 %v1349
        %v1664 = vunpack.c.h.b16 %v1349
        %v1665 = vunpack.c.l.b16 %v1350
        %v1666 = vunpack.c.h.b16 %v1350
        %v1667 = vpack.c.b16 %v1487, %v1475
        %v1668 = vpack.c.b16 %v1488, %v1476
        %v1669 = vpack.c.b16 %v1489, %v1477
        %v1670 = vpack.c.b16 %v1490, %v1478
        %v1671 = vpack.c.b16 %v1491, %v1479
        %v1672 = vpack.c.b16 %v1492, %v1480
        %v1673 = vpack.c.b16 %v1493, %v1481
        %v1674 = vpack.c.b16 %v1494, %v1482
        %v1675 = vpack.c.b16 %v1495, %v1483
        %v1676 = vpack.c.b16 %v1496, %v1484
        %v1677 = vpack.c.b16 %v1497, %v1485
        %v1678 = vpack.c.b16 %v1498, %v1486
        %v1679 = vpack.c.b16 %v1511, %v1499
        %v1680 = vpack.c.b16 %v1512, %v1500
        %v1681 = vpack.c.b16 %v1513, %v1501
        %v1682 = vpack.c.b16 %v1514, %v1502
        %v1683 = vpack.c.b16 %v1515, %v1503
        %v1684 = vpack.c.b16 %v1516, %v1504
        %v1685 = vpack.c.b16 %v1517, %v1505
        %v1686 = vpack.c.b16 %v1518, %v1506
        %v1687 = vpack.c.b16 %v1519, %v1507
        %v1688 = vpack.c.b16 %v1520, %v1508
        %v1689 = vpack.c.b16 %v1521, %v1509
        %v1690 = vpack.c.b16 %v1522, %v1510
        %v1691 = vpack.c.b16 %v1535, %v1523
        %v1692 = vpack.c.b16 %v1536, %v1524
        %v1693 = vpack.c.b16 %v1537, %v1525
        %v1694 = vpack.c.b16 %v1538, %v1526
        %v1695 = vpack.c.b16 %v1539, %v1527
        %v1696 = vpack.c.b16 %v1540, %v1528
        %v1697 = vpack.c.b16 %v1541, %v1529
        %v1698 = vpack.c.b16 %v1542, %v1530
        %v1699 = vpack.c.b16 %v1543, %v1531
        %v1700 = vpack.c.b16 %v1544, %v1532
        %v1701 = vpack.c.b16 %v1545, %v1533
        %v1702 = vpack.c.b16 %v1546, %v1534
        %v1703 = vpack.c.b16 %v1559, %v1547
        %v1704 = vpack.c.b16 %v1560, %v1548
        %v1705 = vpack.c.b16 %v1561, %v1549
        %v1706 = vpack.c.b16 %v1562, %v1550
        %v1707 = vpack.c.b16 %v1563, %v1551
        %v1708 = vpack.c.b16 %v1564, %v1552
        %v1709 = vpack.c.b16 %v1565, %v1553
        %v1710 = vpack.c.b16 %v1566, %v1554
        %v1711 = vpack.c.b16 %v1567, %v1555
        %v1712 = vpack.c.b16 %v1568, %v1556
        %v1713 = vpack.c.b16 %v1569, %v1557
        %v1714 = vpack.c.b16 %v1570, %v1558
        %v1715 = vpack.c.b16 %v1583, %v1571
        %v1716 = vpack.c.b16 %v1584, %v1572
        %v1717 = vpack.c.b16 %v1585, %v1573
        %v1718 = vpack.c.b16 %v1586, %v1574
        %v1719 = vpack.c.b16 %v1587, %v1575
        %v1720 = vpack.c.b16 %v1588, %v1576
        %v1721 = vpack.c.b16 %v1589, %v1577
        %v1722 = vpack.c.b16 %v1590, %v1578
        %v1723 = vpack.c.b16 %v1591, %v1579
        %v1724 = vpack.c.b16 %v1592, %v1580
        %v1725 = vpack.c.b16 %v1593, %v1581
        %v1726 = vpack.c.b16 %v1594, %v1582
        %v1727 = vpack.c.b16 %v1607, %v1595
        %v1728 = vpack.c.b16 %v1608, %v1596
        %v1729 = vpack.c.b16 %v1609, %v1597
        %v1730 = vpack.c.b16 %v1610, %v1598
        %v1731 = vpack.c.b16 %v1611, %v1599
        %v1732 = vpack.c.b16 %v1612, %v1600
        %v1733 = vpack.c.b16 %v1613, %v1601
        %v1734 = vpack.c.b16 %v1614, %v1602
        %v1735 = vpack.c.b16 %v1615, %v1603
        %v1736 = vpack.c.b16 %v1616, %v1604
        %v1737 = vpack.c.b16 %v1617, %v1605
        %v1738 = vpack.c.b16 %v1618, %v1606
        %v1739 = vpack.c.b16 %v1631, %v1619
        %v1740 = vpack.c.b16 %v1632, %v1620
        %v1741 = vpack.c.b16 %v1633, %v1621
        %v1742 = vpack.c.b16 %v1634, %v1622
        %v1743 = vpack.c.b16 %v1635, %v1623
        %v1744 = vpack.c.b16 %v1636, %v1624
        %v1745 = vpack.c.b16 %v1637, %v1625
        %v1746 = vpack.c.b16 %v1638, %v1626
        %v1747 = vpack.c.b16 %v1639, %v1627
        %v1748 = vpack.c.b16 %v1640, %v1628
        %v1749 = vpack.c.b16 %v1641, %v1629
        %v1750 = vpack.c.b16 %v1642, %v1630
        %v1751 = vpack.c.b16 %v1655, %v1643
        %v1752 = vpack.c.b16 %v1656, %v1644
        %v1753 = vpack.c.b16 %v1657, %v1645
        %v1754 = vpack.c.b16 %v1658, %v1646
        %v1755 = vpack.c.b16 %v1659, %v1647
        %v1756 = vpack.c.b16 %v1660, %v1648
        %v1757 = vpack.c.b16 %v1661, %v1649
        %v1758 = vpack.c.b16 %v1662, %v1650
        %v1759 = vpack.c.b16 %v1663, %v1651
        %v1760 = vpack.c.b16 %v1664, %v1652
        %v1761 = vpack.c.b16 %v1665, %v1653
        %v1762 = vpack.c.b16 %v1666, %v1654
        %1859 = vmatpush.bf16.msra.mxu0 %v1751
        %1860 = vmatpush.bf16.msra.mxu0 %v1739
        %1861 = vmatpush.bf16.msra.mxu0 %v1727
        %1862 = vmatpush.bf16.msra.mxu0 %v1715
        %1863 = vmatpush.bf16.msra.mxu0 %v1703
        %1864 = vmatpush.bf16.msra.mxu0 %v1691
        %1865 = vmatpush.bf16.msra.mxu0 %v1679
        %1866 = vmatpush.bf16.msra.mxu0 %v1667
        %1867 = vmatmul.bf16.gmra.mxu0 %v1254
        %v1868 = vpop.f32.mrf.mxu0
        %v1869 = vadd.f32 %v1355, %v1868
        %v1870 = vpop.f32.mrf.mxu0
        %1871 = vdwg.mxu0
        %1872 = vmatpush.bf16.msra.mxu0 %v1752
        %1873 = vmatpush.bf16.msra.mxu0 %v1740
        %1874 = vmatpush.bf16.msra.mxu0 %v1728
        %1875 = vmatpush.bf16.msra.mxu0 %v1716
        %1876 = vmatpush.bf16.msra.mxu0 %v1704
        %1877 = vmatpush.bf16.msra.mxu0 %v1692
        %1878 = vmatpush.bf16.msra.mxu0 %v1680
        %1879 = vmatpush.bf16.msra.mxu0 %v1668
        %1880 = vmatmul.bf16.gmra.mxu0 %v1254
        %v1881 = vpop.f32.mrf.mxu0
        %v1882 = vadd.f32 %v1356, %v1881
        %v1883 = vpop.f32.mrf.mxu0
        %1884 = vdwg.mxu0
        %1885 = vmatpush.bf16.msra.mxu0 %v1753
        %1886 = vmatpush.bf16.msra.mxu0 %v1741
        %1887 = vmatpush.bf16.msra.mxu0 %v1729
        %1888 = vmatpush.bf16.msra.mxu0 %v1717
        %1889 = vmatpush.bf16.msra.mxu0 %v1705
        %1890 = vmatpush.bf16.msra.mxu0 %v1693
        %1891 = vmatpush.bf16.msra.mxu0 %v1681
        %1892 = vmatpush.bf16.msra.mxu0 %v1669
        %1893 = vmatmul.bf16.gmra.mxu0 %v1254
        %v1894 = vpop.f32.mrf.mxu0
        %v1895 = vadd.f32 %v1357, %v1894
        %v1896 = vpop.f32.mrf.mxu0
        %1897 = vdwg.mxu0
        %1898 = vmatpush.bf16.msra.mxu0 %v1754
        %1899 = vmatpush.bf16.msra.mxu0 %v1742
        %1900 = vmatpush.bf16.msra.mxu0 %v1730
        %1901 = vmatpush.bf16.msra.mxu0 %v1718
        %1902 = vmatpush.bf16.msra.mxu0 %v1706
        %1903 = vmatpush.bf16.msra.mxu0 %v1694
        %1904 = vmatpush.bf16.msra.mxu0 %v1682
        %1905 = vmatpush.bf16.msra.mxu0 %v1670
        %1906 = vmatmul.bf16.gmra.mxu0 %v1254
        %v1907 = vpop.f32.mrf.mxu0
        %v1908 = vadd.f32 %v1358, %v1907
        %v1909 = vpop.f32.mrf.mxu0
        %1910 = vdwg.mxu0
        %1911 = vmatpush.bf16.msra.mxu0 %v1755
        %1912 = vmatpush.bf16.msra.mxu0 %v1743
        %1913 = vmatpush.bf16.msra.mxu0 %v1731
        %1914 = vmatpush.bf16.msra.mxu0 %v1719
        %1915 = vmatpush.bf16.msra.mxu0 %v1707
        %1916 = vmatpush.bf16.msra.mxu0 %v1695
        %1917 = vmatpush.bf16.msra.mxu0 %v1683
        %1918 = vmatpush.bf16.msra.mxu0 %v1671
        %1919 = vmatmul.bf16.gmra.mxu0 %v1254
        %v1920 = vpop.f32.mrf.mxu0
        %v1921 = vadd.f32 %v1359, %v1920
        %v1922 = vpop.f32.mrf.mxu0
        %1923 = vdwg.mxu0
        %1924 = vmatpush.bf16.msra.mxu0 %v1756
        %1925 = vmatpush.bf16.msra.mxu0 %v1744
        %1926 = vmatpush.bf16.msra.mxu0 %v1732
        %1927 = vmatpush.bf16.msra.mxu0 %v1720
        %1928 = vmatpush.bf16.msra.mxu0 %v1708
        %1929 = vmatpush.bf16.msra.mxu0 %v1696
        %1930 = vmatpush.bf16.msra.mxu0 %v1684
        %1931 = vmatpush.bf16.msra.mxu0 %v1672
        %1932 = vmatmul.bf16.gmra.mxu0 %v1254
        %v1933 = vpop.f32.mrf.mxu0
        %v1934 = vadd.f32 %v1360, %v1933
        %v1935 = vpop.f32.mrf.mxu0
        %1936 = vdwg.mxu0
        %1937 = vmatpush.bf16.msra.mxu0 %v1757
        %1938 = vmatpush.bf16.msra.mxu0 %v1745
        %1939 = vmatpush.bf16.msra.mxu0 %v1733
        %1940 = vmatpush.bf16.msra.mxu0 %v1721
        %1941 = vmatpush.bf16.msra.mxu0 %v1709
        %1942 = vmatpush.bf16.msra.mxu0 %v1697
        %1943 = vmatpush.bf16.msra.mxu0 %v1685
        %1944 = vmatpush.bf16.msra.mxu0 %v1673
        %1945 = vmatmul.bf16.gmra.mxu0 %v1254
        %v1946 = vpop.f32.mrf.mxu0
        %v1947 = vadd.f32 %v1361, %v1946
        %v1948 = vpop.f32.mrf.mxu0
        %1949 = vdwg.mxu0
        %1950 = vmatpush.bf16.msra.mxu0 %v1758
        %1951 = vmatpush.bf16.msra.mxu0 %v1746
        %1952 = vmatpush.bf16.msra.mxu0 %v1734
        %1953 = vmatpush.bf16.msra.mxu0 %v1722
        %1954 = vmatpush.bf16.msra.mxu0 %v1710
        %1955 = vmatpush.bf16.msra.mxu0 %v1698
        %1956 = vmatpush.bf16.msra.mxu0 %v1686
        %1957 = vmatpush.bf16.msra.mxu0 %v1674
        %1958 = vmatmul.bf16.gmra.mxu0 %v1254
        %v1959 = vpop.f32.mrf.mxu0
        %v1960 = vadd.f32 %v1362, %v1959
        %v1961 = vpop.f32.mrf.mxu0
        %1962 = vdwg.mxu0
        %1963 = vmatpush.bf16.msra.mxu0 %v1759
        %1964 = vmatpush.bf16.msra.mxu0 %v1747
        %1965 = vmatpush.bf16.msra.mxu0 %v1735
        %1966 = vmatpush.bf16.msra.mxu0 %v1723
        %1967 = vmatpush.bf16.msra.mxu0 %v1711
        %1968 = vmatpush.bf16.msra.mxu0 %v1699
        %1969 = vmatpush.bf16.msra.mxu0 %v1687
        %1970 = vmatpush.bf16.msra.mxu0 %v1675
        %1971 = vmatmul.bf16.gmra.mxu0 %v1254
        %v1972 = vpop.f32.mrf.mxu0
        %v1973 = vadd.f32 %v1363, %v1972
        %v1974 = vpop.f32.mrf.mxu0
        %1975 = vdwg.mxu0
        %1976 = vmatpush.bf16.msra.mxu0 %v1760
        %1977 = vmatpush.bf16.msra.mxu0 %v1748
        %1978 = vmatpush.bf16.msra.mxu0 %v1736
        %1979 = vmatpush.bf16.msra.mxu0 %v1724
        %1980 = vmatpush.bf16.msra.mxu0 %v1712
        %1981 = vmatpush.bf16.msra.mxu0 %v1700
        %1982 = vmatpush.bf16.msra.mxu0 %v1688
        %1983 = vmatpush.bf16.msra.mxu0 %v1676
        %1984 = vmatmul.bf16.gmra.mxu0 %v1254
        %v1985 = vpop.f32.mrf.mxu0
        %v1986 = vadd.f32 %v1364, %v1985
        %v1987 = vpop.f32.mrf.mxu0
        %1988 = vdwg.mxu0
        %1989 = vmatpush.bf16.msra.mxu0 %v1761
        %1990 = vmatpush.bf16.msra.mxu0 %v1749
        %1991 = vmatpush.bf16.msra.mxu0 %v1737
        %1992 = vmatpush.bf16.msra.mxu0 %v1725
        %1993 = vmatpush.bf16.msra.mxu0 %v1713
        %1994 = vmatpush.bf16.msra.mxu0 %v1701
        %1995 = vmatpush.bf16.msra.mxu0 %v1689
        %1996 = vmatpush.bf16.msra.mxu0 %v1677
        %1997 = vmatmul.bf16.gmra.mxu0 %v1254
        %v1998 = vpop.f32.mrf.mxu0
        %v1999 = vadd.f32 %v1365, %v1998
        %v2000 = vpop.f32.mrf.mxu0
        %2001 = vdwg.mxu0
        %2002 = vmatpush.bf16.msra.mxu0 %v1762
        %2003 = vmatpush.bf16.msra.mxu0 %v1750
        %2004 = vmatpush.bf16.msra.mxu0 %v1738
        %2005 = vmatpush.bf16.msra.mxu0 %v1726
        %2006 = vmatpush.bf16.msra.mxu0 %v1714
        %2007 = vmatpush.bf16.msra.mxu0 %v1702
        %2008 = vmatpush.bf16.msra.mxu0 %v1690
        %2009 = vmatpush.bf16.msra.mxu0 %v1678
        %2010 = vmatmul.bf16.gmra.mxu0 %v1254
        %v2011 = vpop.f32.mrf.mxu0
        %v2012 = vadd.f32 %v1366, %v2011
        %v2013 = vpop.f32.mrf.mxu0
        %2014 = vdwg.mxu0
        %v2015 = vmul.f32 %v1869, 0.17677669
        %v2016 = vpack.c.bf16 %v2015, %v2015
        %v2017 = vpack.c.bf16 %v1921, %v1921
        %v2018 = vpack.c.bf16 %v1973, %v1973
        %v2020 = vperm.slane %v1209, 0
        %2022 = vmatpush.bf16.xpose.msra.mxu0 0
        %2023 = vmatpush.bf16.xpose.msra.mxu0 0
        %2024 = vmatpush.bf16.xpose.msra.mxu0 0
        %2025 = vmatpush.bf16.xpose.msra.mxu0 0
        %2026 = vmatpush.bf16.xpose.msra.mxu0 0
        %2027 = vmatpush.bf16.xpose.msra.mxu0 0
        %2028 = vmatpush.bf16.xpose.msra.mxu0 0
        %2029 = vmatpush.bf16.xpose.msra.mxu0 %v2017
        %2030 = vmatmul.bf16.gmra.mxu0 %v2016
        %v2031 = vpop.f32.mrf.mxu0
        %v2032 = vadd.f32 %v2020, %v2031
        %v2033 = vpop.f32.mrf.mxu0
        %2034 = vdwg.mxu0
        %vm2035 = vcmask 64512
        %v2036 = vsel %vm2035, %v2032, -inf
        %2037 = vmax.xlane.f32.xlu0 %v2036
        %v2038 = vpop.xlane.xlu0 %2037
        %v2039 = vsub.f32 %v2032, %v2038
        %v2040 = vmul.f32 %v2039, 1.442695
        %v2041 = vpow.pop %v2040
        %v2042 = vsel %vm2035, %v2041, 0.0
        %2043 = vadd.xlane.f32.xlu0 %v2042
        %v2044 = vpop.xlane.xlu0 %2043
        %v2045 = vrcp.pop %v2044
        %v2046 = vmul.f32 %v2044, %v2045
        %v2047 = vsub.f32 1.0, %v2046
        %v2048 = vmul.f32 %v2045, %v2047
        %v2049 = vadd.f32 %v2045, %v2048
        %vm2050 = vweird.f32 %v2044
        %vm2051 = vweird.f32 %v2045
        %vm2052 = vmor %vm2050, %vm2051
        %v2053 = vsel %vm2052, %v2045, %v2049
        %v2054 = vand.u32 2147483647, %v2044
        %vm2055 = vcmp.eq.f32.partialorder %v2054, 8.507059e+37
        %v2056 = vand.u32 %v2044, 2147483648
        %v2057 = vor.u32 1.1754944e-38, %v2056
        %v2058 = vsel %vm2055, %v2057, %v2053
        %v2059 = vmul.f32 %v2041, %v2058
        %v2060 = vpack.c.bf16 %v2059, %v2059
        %v2062 = vsel %vm2035, %v2060, 0
        %vm2064 = vcmask 1043456
        %v2066 = vsel %vm2064, %v2018, 0
        %2068 = vmatpush.bf16.msra.mxu0 0
        %2069 = vmatpush.bf16.msra.mxu0 0
        %2070 = vmatpush.bf16.msra.mxu0 0
        %2071 = vmatpush.bf16.msra.mxu0 0
        %2072 = vmatpush.bf16.msra.mxu0 0
        %2073 = vmatpush.bf16.msra.mxu0 0
        %2074 = vmatpush.bf16.msra.mxu0 0
        %2075 = vmatpush.bf16.msra.mxu0 %v2066
        %2076 = vmatmul.bf16.gmra.mxu0 %v2062
        %v2077 = vpop.f32.mrf.mxu0
        %v2078 = vadd.f32 0.0, %v2077
        %v2079 = vpop.f32.mrf.mxu0
        %2080 = vdwg.mxu0
        %v2081 = vpack.c.bf16 %v2078, %v2078
        %v2082 = vld [vmem:[%s998] sm:$0xf]
        %v2083 = vld [vmem:[%s998 + $0x4] sm:$0xf]
        %v2084 = vld [vmem:[%s998 + $0x8] sm:$0xf]
        %v2085 = vld [vmem:[%s998 + $0xc] sm:$0xf]
        %v2086 = vld [vmem:[%s998 + $0x10] sm:$0xf]
        %v2087 = vld [vmem:[%s998 + $0x14] sm:$0xf]
        %v2088 = vld [vmem:[%s998 + $0x18] sm:$0xf]
        %v2089 = vld [vmem:[%s998 + $0x1c] sm:$0xf]
        %v2090 = vld [vmem:[%s998 + $0x20] sm:$0xf]
        %v2091 = vld [vmem:[%s998 + $0x24] sm:$0xf]
        %v2092 = vld [vmem:[%s998 + $0x28] sm:$0xf]
        %v2093 = vld [vmem:[%s998 + $0x2c] sm:$0xf]
        %v2094 = vld [vmem:[%s998 + $0x30] sm:$0xf]
        %v2095 = vld [vmem:[%s998 + $0x34] sm:$0xf]
        %v2096 = vld [vmem:[%s998 + $0x38] sm:$0xf]
        %v2097 = vld [vmem:[%s998 + $0x3c] sm:$0xf]
        %v2098 = vmul.f32 %v1882, 0.17677669
        %v2099 = vpack.c.bf16 %v2098, %v2098
        %v2100 = vpack.c.bf16 %v1934, %v1934
        %v2101 = vpack.c.bf16 %v1986, %v1986
        %2102 = vmatpush.bf16.xpose.msra.mxu0 0
        %2103 = vmatpush.bf16.xpose.msra.mxu0 0
        %2104 = vmatpush.bf16.xpose.msra.mxu0 0
        %2105 = vmatpush.bf16.xpose.msra.mxu0 0
        %2106 = vmatpush.bf16.xpose.msra.mxu0 0
        %2107 = vmatpush.bf16.xpose.msra.mxu0 0
        %2108 = vmatpush.bf16.xpose.msra.mxu0 0
        %2109 = vmatpush.bf16.xpose.msra.mxu0 %v2100
        %2110 = vmatmul.bf16.gmra.mxu0 %v2099
        %v2111 = vpop.f32.mrf.mxu0
        %v2112 = vadd.f32 %v2020, %v2111
        %v2113 = vpop.f32.mrf.mxu0
        %2114 = vdwg.mxu0
        %v2115 = vsel %vm2035, %v2112, -inf
        %2116 = vmax.xlane.f32.xlu0 %v2115
        %v2117 = vpop.xlane.xlu0 %2116
        %v2118 = vsub.f32 %v2112, %v2117
        %v2119 = vmul.f32 %v2118, 1.442695
        %v2120 = vpow.pop %v2119
        %v2121 = vsel %vm2035, %v2120, 0.0
        %2122 = vadd.xlane.f32.xlu0 %v2121
        %v2123 = vpop.xlane.xlu0 %2122
        %v2124 = vrcp.pop %v2123
        %v2125 = vmul.f32 %v2123, %v2124
        %v2126 = vsub.f32 1.0, %v2125
        %v2127 = vmul.f32 %v2124, %v2126
        %v2128 = vadd.f32 %v2124, %v2127
        %vm2129 = vweird.f32 %v2123
        %vm2130 = vweird.f32 %v2124
        %vm2131 = vmor %vm2129, %vm2130
        %v2132 = vsel %vm2131, %v2124, %v2128
        %v2133 = vand.u32 2147483647, %v2123
        %vm2134 = vcmp.eq.f32.partialorder %v2133, 8.507059e+37
        %v2135 = vand.u32 %v2123, 2147483648
        %v2136 = vor.u32 1.1754944e-38, %v2135
        %v2137 = vsel %vm2134, %v2136, %v2132
        %v2138 = vmul.f32 %v2120, %v2137
        %v2139 = vpack.c.bf16 %v2138, %v2138
        %v2141 = vsel %vm2035, %v2139, 0
        %v2144 = vsel %vm2064, %v2101, 0
        %2146 = vmatpush.bf16.msra.mxu0 0
        %2147 = vmatpush.bf16.msra.mxu0 0
        %2148 = vmatpush.bf16.msra.mxu0 0
        %2149 = vmatpush.bf16.msra.mxu0 0
        %2150 = vmatpush.bf16.msra.mxu0 0
        %2151 = vmatpush.bf16.msra.mxu0 0
        %2152 = vmatpush.bf16.msra.mxu0 0
        %2153 = vmatpush.bf16.msra.mxu0 %v2144
        %2154 = vmatmul.bf16.gmra.mxu0 %v2141
        %v2155 = vpop.f32.mrf.mxu0
        %v2156 = vadd.f32 0.0, %v2155
        %v2157 = vpop.f32.mrf.mxu0
        %2158 = vdwg.mxu0
        %v2159 = vpack.c.bf16 %v2156, %v2156
        %v2160 = vld [vmem:[%s998 + $0x40] sm:$0xf]
        %v2161 = vld [vmem:[%s998 + $0x44] sm:$0xf]
        %v2162 = vld [vmem:[%s998 + $0x48] sm:$0xf]
        %v2163 = vld [vmem:[%s998 + $0x4c] sm:$0xf]
        %v2164 = vld [vmem:[%s998 + $0x50] sm:$0xf]
        %v2165 = vld [vmem:[%s998 + $0x54] sm:$0xf]
        %v2166 = vld [vmem:[%s998 + $0x58] sm:$0xf]
        %v2167 = vld [vmem:[%s998 + $0x5c] sm:$0xf]
        %v2168 = vld [vmem:[%s998 + $0x60] sm:$0xf]
        %v2169 = vld [vmem:[%s998 + $0x64] sm:$0xf]
        %v2170 = vld [vmem:[%s998 + $0x68] sm:$0xf]
        %v2171 = vld [vmem:[%s998 + $0x6c] sm:$0xf]
        %v2172 = vld [vmem:[%s998 + $0x70] sm:$0xf]
        %v2173 = vld [vmem:[%s998 + $0x74] sm:$0xf]
        %v2174 = vld [vmem:[%s998 + $0x78] sm:$0xf]
        %v2175 = vld [vmem:[%s998 + $0x7c] sm:$0xf]
        %v2192 = vunpack.c.l.b16 %v2160
        %v2193 = vunpack.c.l.b16 %v2161
        %v2194 = vunpack.c.l.b16 %v2162
        %v2195 = vunpack.c.l.b16 %v2163
        %v2196 = vunpack.c.l.b16 %v2164
        %v2197 = vunpack.c.l.b16 %v2165
        %v2198 = vunpack.c.l.b16 %v2166
        %v2199 = vunpack.c.l.b16 %v2167
        %v2200 = vunpack.c.l.b16 %v2168
        %v2201 = vunpack.c.l.b16 %v2169
        %v2202 = vunpack.c.l.b16 %v2170
        %v2203 = vunpack.c.l.b16 %v2171
        %v2204 = vunpack.c.l.b16 %v2172
        %v2205 = vunpack.c.l.b16 %v2173
        %v2206 = vunpack.c.l.b16 %v2174
        %v2207 = vunpack.c.l.b16 %v2175
        %v2208 = vpack.c.b16 %v2193, %v2192
        %v2209 = vpack.c.b16 %v2195, %v2194
        %v2210 = vpack.c.b16 %v2197, %v2196
        %v2211 = vpack.c.b16 %v2199, %v2198
        %v2212 = vpack.c.b16 %v2201, %v2200
        %v2213 = vpack.c.b16 %v2203, %v2202
        %v2214 = vpack.c.b16 %v2205, %v2204
        %v2215 = vpack.c.b16 %v2207, %v2206
        %2224 = vmatpush.bf16.msra.mxu0 %v2215
        %2225 = vmatpush.bf16.msra.mxu0 %v2214
        %2226 = vmatpush.bf16.msra.mxu0 %v2213
        %2227 = vmatpush.bf16.msra.mxu0 %v2212
        %2228 = vmatpush.bf16.msra.mxu0 %v2211
        %2229 = vmatpush.bf16.msra.mxu0 %v2210
        %2230 = vmatpush.bf16.msra.mxu0 %v2209
        %2231 = vmatpush.bf16.msra.mxu0 %v2208
        %2232 = vmatmul.bf16.gmra.mxu0 %v2159
        %v2233 = vpop.f32.mrf.mxu0
        %v2234 = vadd.f32 0.0, %v2233
        %v2235 = vpop.f32.mrf.mxu0
        %2236 = vdwg.mxu0
        %v2253 = vunpack.c.l.b16 %v2082
        %v2254 = vunpack.c.l.b16 %v2083
        %v2255 = vunpack.c.l.b16 %v2084
        %v2256 = vunpack.c.l.b16 %v2085
        %v2257 = vunpack.c.l.b16 %v2086
        %v2258 = vunpack.c.l.b16 %v2087
        %v2259 = vunpack.c.l.b16 %v2088
        %v2260 = vunpack.c.l.b16 %v2089
        %v2261 = vunpack.c.l.b16 %v2090
        %v2262 = vunpack.c.l.b16 %v2091
        %v2263 = vunpack.c.l.b16 %v2092
        %v2264 = vunpack.c.l.b16 %v2093
        %v2265 = vunpack.c.l.b16 %v2094
        %v2266 = vunpack.c.l.b16 %v2095
        %v2267 = vunpack.c.l.b16 %v2096
        %v2268 = vunpack.c.l.b16 %v2097
        %v2269 = vpack.c.b16 %v2254, %v2253
        %v2270 = vpack.c.b16 %v2256, %v2255
        %v2271 = vpack.c.b16 %v2258, %v2257
        %v2272 = vpack.c.b16 %v2260, %v2259
        %v2273 = vpack.c.b16 %v2262, %v2261
        %v2274 = vpack.c.b16 %v2264, %v2263
        %v2275 = vpack.c.b16 %v2266, %v2265
        %v2276 = vpack.c.b16 %v2268, %v2267
        %2285 = vmatpush.bf16.msra.mxu0 %v2276
        %2286 = vmatpush.bf16.msra.mxu0 %v2275
        %2287 = vmatpush.bf16.msra.mxu0 %v2274
        %2288 = vmatpush.bf16.msra.mxu0 %v2273
        %2289 = vmatpush.bf16.msra.mxu0 %v2272
        %2290 = vmatpush.bf16.msra.mxu0 %v2271
        %2291 = vmatpush.bf16.msra.mxu0 %v2270
        %2292 = vmatpush.bf16.msra.mxu0 %v2269
        %2293 = vmatmul.bf16.gmra.mxu0 %v2081
        %v2294 = vpop.f32.mrf.mxu0
        %v2295 = vadd.f32 %v2234, %v2294
        %v2296 = vpop.f32.mrf.mxu0
        %2297 = vdwg.mxu0
        %v2298 = vmul.f32 %v1895, 0.17677669
        %v2299 = vpack.c.bf16 %v2298, %v2298
        %v2300 = vpack.c.bf16 %v1947, %v1947
        %v2301 = vpack.c.bf16 %v1999, %v1999
        %2302 = vmatpush.bf16.xpose.msra.mxu0 0
        %2303 = vmatpush.bf16.xpose.msra.mxu0 0
        %2304 = vmatpush.bf16.xpose.msra.mxu0 0
        %2305 = vmatpush.bf16.xpose.msra.mxu0 0
        %2306 = vmatpush.bf16.xpose.msra.mxu0 0
        %2307 = vmatpush.bf16.xpose.msra.mxu0 0
        %2308 = vmatpush.bf16.xpose.msra.mxu0 0
        %2309 = vmatpush.bf16.xpose.msra.mxu0 %v2300
        %2310 = vmatmul.bf16.gmra.mxu0 %v2299
        %v2311 = vpop.f32.mrf.mxu0
        %v2312 = vadd.f32 %v2020, %v2311
        %v2313 = vpop.f32.mrf.mxu0
        %2314 = vdwg.mxu0
        %v2315 = vsel %vm2035, %v2312, -inf
        %2316 = vmax.xlane.f32.xlu0 %v2315
        %v2317 = vpop.xlane.xlu0 %2316
        %v2318 = vsub.f32 %v2312, %v2317
        %v2319 = vmul.f32 %v2318, 1.442695
        %v2320 = vpow.pop %v2319
        %v2321 = vsel %vm2035, %v2320, 0.0
        %2322 = vadd.xlane.f32.xlu0 %v2321
        %v2323 = vpop.xlane.xlu0 %2322
        %v2324 = vrcp.pop %v2323
        %v2325 = vmul.f32 %v2323, %v2324
        %v2326 = vsub.f32 1.0, %v2325
        %v2327 = vmul.f32 %v2324, %v2326
        %v2328 = vadd.f32 %v2324, %v2327
        %vm2329 = vweird.f32 %v2323
        %vm2330 = vweird.f32 %v2324
        %vm2331 = vmor %vm2329, %vm2330
        %v2332 = vsel %vm2331, %v2324, %v2328
        %v2333 = vand.u32 2147483647, %v2323
        %vm2334 = vcmp.eq.f32.partialorder %v2333, 8.507059e+37
        %v2335 = vand.u32 %v2323, 2147483648
        %v2336 = vor.u32 1.1754944e-38, %v2335
        %v2337 = vsel %vm2334, %v2336, %v2332
        %v2338 = vmul.f32 %v2320, %v2337
        %v2339 = vpack.c.bf16 %v2338, %v2338
        %v2341 = vsel %vm2035, %v2339, 0
        %v2344 = vsel %vm2064, %v2301, 0
        %2346 = vmatpush.bf16.msra.mxu0 0
        %2347 = vmatpush.bf16.msra.mxu0 0
        %2348 = vmatpush.bf16.msra.mxu0 0
        %2349 = vmatpush.bf16.msra.mxu0 0
        %2350 = vmatpush.bf16.msra.mxu0 0
        %2351 = vmatpush.bf16.msra.mxu0 0
        %2352 = vmatpush.bf16.msra.mxu0 0
        %2353 = vmatpush.bf16.msra.mxu0 %v2344
        %2354 = vmatmul.bf16.gmra.mxu0 %v2341
        %v2355 = vpop.f32.mrf.mxu0
        %v2356 = vadd.f32 0.0, %v2355
        %v2357 = vpop.f32.mrf.mxu0
        %2358 = vdwg.mxu0
        %v2359 = vpack.c.bf16 %v2356, %v2356
        %v2360 = vld [vmem:[%s998 + $0x80] sm:$0xf]
        %v2361 = vld [vmem:[%s998 + $0x84] sm:$0xf]
        %v2362 = vld [vmem:[%s998 + $0x88] sm:$0xf]
        %v2363 = vld [vmem:[%s998 + $0x8c] sm:$0xf]
        %v2364 = vld [vmem:[%s998 + $0x90] sm:$0xf]
        %v2365 = vld [vmem:[%s998 + $0x94] sm:$0xf]
        %v2366 = vld [vmem:[%s998 + $0x98] sm:$0xf]
        %v2367 = vld [vmem:[%s998 + $0x9c] sm:$0xf]
        %v2368 = vld [vmem:[%s998 + $0xa0] sm:$0xf]
        %v2369 = vld [vmem:[%s998 + $0xa4] sm:$0xf]
        %v2370 = vld [vmem:[%s998 + $0xa8] sm:$0xf]
        %v2371 = vld [vmem:[%s998 + $0xac] sm:$0xf]
        %v2372 = vld [vmem:[%s998 + $0xb0] sm:$0xf]
        %v2373 = vld [vmem:[%s998 + $0xb4] sm:$0xf]
        %v2374 = vld [vmem:[%s998 + $0xb8] sm:$0xf]
        %v2375 = vld [vmem:[%s998 + $0xbc] sm:$0xf]
        %v2392 = vunpack.c.l.b16 %v2360
        %v2393 = vunpack.c.l.b16 %v2361
        %v2394 = vunpack.c.l.b16 %v2362
        %v2395 = vunpack.c.l.b16 %v2363
        %v2396 = vunpack.c.l.b16 %v2364
        %v2397 = vunpack.c.l.b16 %v2365
        %v2398 = vunpack.c.l.b16 %v2366
        %v2399 = vunpack.c.l.b16 %v2367
        %v2400 = vunpack.c.l.b16 %v2368
        %v2401 = vunpack.c.l.b16 %v2369
        %v2402 = vunpack.c.l.b16 %v2370
        %v2403 = vunpack.c.l.b16 %v2371
        %v2404 = vunpack.c.l.b16 %v2372
        %v2405 = vunpack.c.l.b16 %v2373
        %v2406 = vunpack.c.l.b16 %v2374
        %v2407 = vunpack.c.l.b16 %v2375
        %v2408 = vpack.c.b16 %v2393, %v2392
        %v2409 = vpack.c.b16 %v2395, %v2394
        %v2410 = vpack.c.b16 %v2397, %v2396
        %v2411 = vpack.c.b16 %v2399, %v2398
        %v2412 = vpack.c.b16 %v2401, %v2400
        %v2413 = vpack.c.b16 %v2403, %v2402
        %v2414 = vpack.c.b16 %v2405, %v2404
        %v2415 = vpack.c.b16 %v2407, %v2406
        %2424 = vmatpush.bf16.msra.mxu0 %v2415
        %2425 = vmatpush.bf16.msra.mxu0 %v2414
        %2426 = vmatpush.bf16.msra.mxu0 %v2413
        %2427 = vmatpush.bf16.msra.mxu0 %v2412
        %2428 = vmatpush.bf16.msra.mxu0 %v2411
        %2429 = vmatpush.bf16.msra.mxu0 %v2410
        %2430 = vmatpush.bf16.msra.mxu0 %v2409
        %2431 = vmatpush.bf16.msra.mxu0 %v2408
        %2432 = vmatmul.bf16.gmra.mxu0 %v2359
        %v2433 = vpop.f32.mrf.mxu0
        %v2434 = vadd.f32 0.0, %v2433
        %v2435 = vpop.f32.mrf.mxu0
        %2436 = vdwg.mxu0
        %v2437 = vadd.f32 %v2295, %v2434
        %v2438 = vmul.f32 %v1908, 0.17677669
        %v2439 = vpack.c.bf16 %v2438, %v2438
        %v2440 = vpack.c.bf16 %v1960, %v1960
        %v2441 = vpack.c.bf16 %v2012, %v2012
        %2442 = vmatpush.bf16.xpose.msra.mxu0 0
        %2443 = vmatpush.bf16.xpose.msra.mxu0 0
        %2444 = vmatpush.bf16.xpose.msra.mxu0 0
        %2445 = vmatpush.bf16.xpose.msra.mxu0 0
        %2446 = vmatpush.bf16.xpose.msra.mxu0 0
        %2447 = vmatpush.bf16.xpose.msra.mxu0 0
        %2448 = vmatpush.bf16.xpose.msra.mxu0 0
        %2449 = vmatpush.bf16.xpose.msra.mxu0 %v2440
        %2450 = vmatmul.bf16.gmra.mxu0 %v2439
        %v2451 = vpop.f32.mrf.mxu0
        %v2452 = vadd.f32 %v2020, %v2451
        %v2453 = vpop.f32.mrf.mxu0
        %2454 = vdwg.mxu0
        %v2455 = vsel %vm2035, %v2452, -inf
        %2456 = vmax.xlane.f32.xlu0 %v2455
        %v2457 = vpop.xlane.xlu0 %2456
        %v2458 = vsub.f32 %v2452, %v2457
        %v2459 = vmul.f32 %v2458, 1.442695
        %v2460 = vpow.pop %v2459
        %v2461 = vsel %vm2035, %v2460, 0.0
        %2462 = vadd.xlane.f32.xlu0 %v2461
        %v2463 = vpop.xlane.xlu0 %2462
        %v2464 = vrcp.pop %v2463
        %v2465 = vmul.f32 %v2463, %v2464
        %v2466 = vsub.f32 1.0, %v2465
        %v2467 = vmul.f32 %v2464, %v2466
        %v2468 = vadd.f32 %v2464, %v2467
        %vm2469 = vweird.f32 %v2463
        %vm2470 = vweird.f32 %v2464
        %vm2471 = vmor %vm2469, %vm2470
        %v2472 = vsel %vm2471, %v2464, %v2468
        %v2473 = vand.u32 2147483647, %v2463
        %vm2474 = vcmp.eq.f32.partialorder %v2473, 8.507059e+37
        %v2475 = vand.u32 %v2463, 2147483648
        %v2476 = vor.u32 1.1754944e-38, %v2475
        %v2477 = vsel %vm2474, %v2476, %v2472
        %v2478 = vmul.f32 %v2460, %v2477
        %v2479 = vpack.c.bf16 %v2478, %v2478
        %v2481 = vsel %vm2035, %v2479, 0
        %v2484 = vsel %vm2064, %v2441, 0
        %2486 = vmatpush.bf16.msra.mxu0 0
        %2487 = vmatpush.bf16.msra.mxu0 0
        %2488 = vmatpush.bf16.msra.mxu0 0
        %2489 = vmatpush.bf16.msra.mxu0 0
        %2490 = vmatpush.bf16.msra.mxu0 0
        %2491 = vmatpush.bf16.msra.mxu0 0
        %2492 = vmatpush.bf16.msra.mxu0 0
        %2493 = vmatpush.bf16.msra.mxu0 %v2484
        %2494 = vmatmul.bf16.gmra.mxu0 %v2481
        %v2495 = vpop.f32.mrf.mxu0
        %v2496 = vadd.f32 0.0, %v2495
        %v2497 = vpop.f32.mrf.mxu0
        %2498 = vdwg.mxu0
        %v2499 = vpack.c.bf16 %v2496, %v2496
        %v2500 = vld [vmem:[%s998 + $0xc0] sm:$0xf]
        %v2501 = vld [vmem:[%s998 + $0xc4] sm:$0xf]
        %v2502 = vld [vmem:[%s998 + $0xc8] sm:$0xf]
        %v2503 = vld [vmem:[%s998 + $0xcc] sm:$0xf]
        %v2504 = vld [vmem:[%s998 + $0xd0] sm:$0xf]
        %v2505 = vld [vmem:[%s998 + $0xd4] sm:$0xf]
        %v2506 = vld [vmem:[%s998 + $0xd8] sm:$0xf]
        %v2507 = vld [vmem:[%s998 + $0xdc] sm:$0xf]
        %v2508 = vld [vmem:[%s998 + $0xe0] sm:$0xf]
        %v2509 = vld [vmem:[%s998 + $0xe4] sm:$0xf]
        %v2510 = vld [vmem:[%s998 + $0xe8] sm:$0xf]
        %v2511 = vld [vmem:[%s998 + $0xec] sm:$0xf]
        %v2512 = vld [vmem:[%s998 + $0xf0] sm:$0xf]
        %v2513 = vld [vmem:[%s998 + $0xf4] sm:$0xf]
        %v2514 = vld [vmem:[%s998 + $0xf8] sm:$0xf]
        %v2515 = vld [vmem:[%s998 + $0xfc] sm:$0xf]
        %v2532 = vunpack.c.l.b16 %v2500
        %v2533 = vunpack.c.l.b16 %v2501
        %v2534 = vunpack.c.l.b16 %v2502
        %v2535 = vunpack.c.l.b16 %v2503
        %v2536 = vunpack.c.l.b16 %v2504
        %v2537 = vunpack.c.l.b16 %v2505
        %v2538 = vunpack.c.l.b16 %v2506
        %v2539 = vunpack.c.l.b16 %v2507
        %v2540 = vunpack.c.l.b16 %v2508
        %v2541 = vunpack.c.l.b16 %v2509
        %v2542 = vunpack.c.l.b16 %v2510
        %v2543 = vunpack.c.l.b16 %v2511
        %v2544 = vunpack.c.l.b16 %v2512
        %v2545 = vunpack.c.l.b16 %v2513
        %v2546 = vunpack.c.l.b16 %v2514
        %v2547 = vunpack.c.l.b16 %v2515
        %v2548 = vpack.c.b16 %v2533, %v2532
        %v2549 = vpack.c.b16 %v2535, %v2534
        %v2550 = vpack.c.b16 %v2537, %v2536
        %v2551 = vpack.c.b16 %v2539, %v2538
        %v2552 = vpack.c.b16 %v2541, %v2540
        %v2553 = vpack.c.b16 %v2543, %v2542
        %v2554 = vpack.c.b16 %v2545, %v2544
        %v2555 = vpack.c.b16 %v2547, %v2546
        %2564 = vmatpush.bf16.msra.mxu0 %v2555
        %2565 = vmatpush.bf16.msra.mxu0 %v2554
        %2566 = vmatpush.bf16.msra.mxu0 %v2553
        %2567 = vmatpush.bf16.msra.mxu0 %v2552
        %2568 = vmatpush.bf16.msra.mxu0 %v2551
        %2569 = vmatpush.bf16.msra.mxu0 %v2550
        %2570 = vmatpush.bf16.msra.mxu0 %v2549
        %2571 = vmatpush.bf16.msra.mxu0 %v2548
        %2572 = vmatmul.bf16.gmra.mxu0 %v2499
        %v2573 = vpop.f32.mrf.mxu0
        %v2574 = vadd.f32 0.0, %v2573
        %v2575 = vpop.f32.mrf.mxu0
        %2576 = vdwg.mxu0
        %v2577 = vadd.f32 %v2437, %v2574
        %v2578 = vld [vmem:[%s1007] sm:$0x1]
        %v2580 = vperm.slane %v2578, 0
        %v2582 = vadd.f32 %v2577, %v2580
        %v2583 = vadd.f32 %v2582, %v1206
        %v2584 = vld [vmem:[%s1016] sm:$0x1]
        %v2585 = vld [vmem:[%s1025] sm:$0x1]
        %2586 = vadd.xlane.f32.xlu0 %v2583
        %v2587 = vpop.xlane.xlu0 %2586
        %v2588 = vmul.f32 %v2587, %v1220
        %v2589 = vsub.f32 %v2583, %v2588
        %v2590 = vmul.f32 %v2589, %v2589
        %2591 = vadd.xlane.f32.xlu0 %v2590
        %v2592 = vpop.xlane.xlu0 %2591
        %v2593 = vmul.f32 %v2592, %v1220
        %v2594 = vadd.f32 %v2593, 1e-06
        %v2595 = vrsqrt.pop %v2594
        %v2596 = vmul.f32 %v2595, %v2594
        %v2597 = vmul.f32 %v2596, %v2595
        %v2598 = vmul.f32 0.5, %v2597
        %v2599 = vsub.f32 1.5, %v2598
        %v2600 = vmul.f32 %v2595, %v2599
        %vm2601 = vweird.f32 %v2594
        %vm2602 = vweird.f32 %v2595
        %vm2603 = vmor %vm2601, %vm2602
        %v2604 = vsel %vm2603, %v2595, %v2600
        %v2605 = vmul.f32 %v2589, %v2604
        %v2607 = vperm.slane %v2584, 0
        %v2609 = vmul.f32 %v2605, %v2607
        %v2611 = vperm.slane %v2585, 0
        %v2613 = vadd.f32 %v2609, %v2611
        %v2614 = vpack.c.bf16 %v2613, %v2613
        %v2615 = vld [vmem:[%s1035] sm:$0xff]
        %v2616 = vld [vmem:[%s1035 + $0x8] sm:$0xff]
        %v2617 = vld [vmem:[%s1035 + $0x10] sm:$0xff]
        %v2618 = vld [vmem:[%s1035 + $0x18] sm:$0xff]
        %v2619 = vld [vmem:[%s1035 + $0x20] sm:$0xff]
        %v2620 = vld [vmem:[%s1035 + $0x28] sm:$0xff]
        %v2621 = vld [vmem:[%s1035 + $0x30] sm:$0xff]
        %v2622 = vld [vmem:[%s1035 + $0x38] sm:$0xff]
        %v2623 = vld [vmem:[%s1035 + $0x40] sm:$0xff]
        %v2624 = vld [vmem:[%s1035 + $0x48] sm:$0xff]
        %v2625 = vld [vmem:[%s1035 + $0x50] sm:$0xff]
        %v2626 = vld [vmem:[%s1035 + $0x58] sm:$0xff]
        %v2627 = vld [vmem:[%s1035 + $0x60] sm:$0xff]
        %v2628 = vld [vmem:[%s1035 + $0x68] sm:$0xff]
        %v2629 = vld [vmem:[%s1035 + $0x70] sm:$0xff]
        %v2630 = vld [vmem:[%s1035 + $0x78] sm:$0xff]
        %v2631 = vld [vmem:[%s1186] sm:$0x3]
        %v2633 = vperm.slane %v2631, 0
        %v2634 = vperm.slane %v2631, 1
        %v2653 = vunpack.c.l.b16 %v2615
        %v2654 = vunpack.c.h.b16 %v2615
        %v2655 = vunpack.c.l.b16 %v2616
        %v2656 = vunpack.c.h.b16 %v2616
        %v2657 = vunpack.c.l.b16 %v2617
        %v2658 = vunpack.c.h.b16 %v2617
        %v2659 = vunpack.c.l.b16 %v2618
        %v2660 = vunpack.c.h.b16 %v2618
        %v2661 = vunpack.c.l.b16 %v2619
        %v2662 = vunpack.c.h.b16 %v2619
        %v2663 = vunpack.c.l.b16 %v2620
        %v2664 = vunpack.c.h.b16 %v2620
        %v2665 = vunpack.c.l.b16 %v2621
        %v2666 = vunpack.c.h.b16 %v2621
        %v2667 = vunpack.c.l.b16 %v2622
        %v2668 = vunpack.c.h.b16 %v2622
        %v2669 = vunpack.c.l.b16 %v2623
        %v2670 = vunpack.c.h.b16 %v2623
        %v2671 = vunpack.c.l.b16 %v2624
        %v2672 = vunpack.c.h.b16 %v2624
        %v2673 = vunpack.c.l.b16 %v2625
        %v2674 = vunpack.c.h.b16 %v2625
        %v2675 = vunpack.c.l.b16 %v2626
        %v2676 = vunpack.c.h.b16 %v2626
        %v2677 = vunpack.c.l.b16 %v2627
        %v2678 = vunpack.c.h.b16 %v2627
        %v2679 = vunpack.c.l.b16 %v2628
        %v2680 = vunpack.c.h.b16 %v2628
        %v2681 = vunpack.c.l.b16 %v2629
        %v2682 = vunpack.c.h.b16 %v2629
        %v2683 = vunpack.c.l.b16 %v2630
        %v2684 = vunpack.c.h.b16 %v2630
        %v2685 = vpack.c.b16 %v2655, %v2653
        %v2686 = vpack.c.b16 %v2656, %v2654
        %v2687 = vpack.c.b16 %v2659, %v2657
        %v2688 = vpack.c.b16 %v2660, %v2658
        %v2689 = vpack.c.b16 %v2663, %v2661
        %v2690 = vpack.c.b16 %v2664, %v2662
        %v2691 = vpack.c.b16 %v2667, %v2665
        %v2692 = vpack.c.b16 %v2668, %v2666
        %v2693 = vpack.c.b16 %v2671, %v2669
        %v2694 = vpack.c.b16 %v2672, %v2670
        %v2695 = vpack.c.b16 %v2675, %v2673
        %v2696 = vpack.c.b16 %v2676, %v2674
        %v2697 = vpack.c.b16 %v2679, %v2677
        %v2698 = vpack.c.b16 %v2680, %v2678
        %v2699 = vpack.c.b16 %v2683, %v2681
        %v2700 = vpack.c.b16 %v2684, %v2682
        %2717 = vmatpush.bf16.msra.mxu0 %v2699
        %2718 = vmatpush.bf16.msra.mxu0 %v2697
        %2719 = vmatpush.bf16.msra.mxu0 %v2695
        %2720 = vmatpush.bf16.msra.mxu0 %v2693
        %2721 = vmatpush.bf16.msra.mxu0 %v2691
        %2722 = vmatpush.bf16.msra.mxu0 %v2689
        %2723 = vmatpush.bf16.msra.mxu0 %v2687
        %2724 = vmatpush.bf16.msra.mxu0 %v2685
        %2725 = vmatmul.bf16.gmra.mxu0 %v2614
        %v2726 = vpop.f32.mrf.mxu0
        %v2727 = vadd.f32 %v2633, %v2726
        %v2728 = vpop.f32.mrf.mxu0
        %2729 = vdwg.mxu0
        %2730 = vmatpush.bf16.msra.mxu0 %v2700
        %2731 = vmatpush.bf16.msra.mxu0 %v2698
        %2732 = vmatpush.bf16.msra.mxu0 %v2696
        %2733 = vmatpush.bf16.msra.mxu0 %v2694
        %2734 = vmatpush.bf16.msra.mxu0 %v2692
        %2735 = vmatpush.bf16.msra.mxu0 %v2690
        %2736 = vmatpush.bf16.msra.mxu0 %v2688
        %2737 = vmatpush.bf16.msra.mxu0 %v2686
        %2738 = vmatmul.bf16.gmra.mxu0 %v2614
        %v2739 = vpop.f32.mrf.mxu0
        %v2740 = vadd.f32 %v2634, %v2739
        %v2741 = vpop.f32.mrf.mxu0
        %2742 = vdwg.mxu0
        %v2743 = vmul.f32 %v2727, %v2727
        %v2744 = vmul.f32 %v2740, %v2740
        %v2745 = vmul.f32 %v2727, %v2743
        %v2746 = vmul.f32 %v2740, %v2744
        %v2747 = vmul.f32 %v2745, 0.044715
        %v2748 = vmul.f32 %v2746, 0.044715
        %v2749 = vadd.f32 %v2727, %v2747
        %v2750 = vadd.f32 %v2740, %v2748
        %v2751 = vmul.f32 %v2749, 0.7978846
        %v2752 = vmul.f32 %v2750, 0.7978846
        %v2753 = vtanh.pop %v2751
        %v2754 = vtanh.pop %v2752
        %v2755 = vadd.f32 %v2753, 1.0
        %v2756 = vadd.f32 %v2754, 1.0
        %v2757 = vmul.f32 %v2755, 0.5
        %v2758 = vmul.f32 %v2756, 0.5
        %v2759 = vmul.f32 %v2727, %v2757
        %v2760 = vmul.f32 %v2740, %v2758
        %v2761 = vpack.c.bf16 %v2759, %v2759
        %v2762 = vpack.c.bf16 %v2760, %v2760
        %v2763 = vld [vmem:[%s1045] sm:$0xf]
        %v2764 = vld [vmem:[%s1045 + $0x4] sm:$0xf]
        %v2765 = vld [vmem:[%s1045 + $0x8] sm:$0xf]
        %v2766 = vld [vmem:[%s1045 + $0xc] sm:$0xf]
        %v2767 = vld [vmem:[%s1045 + $0x10] sm:$0xf]
        %v2768 = vld [vmem:[%s1045 + $0x14] sm:$0xf]
        %v2769 = vld [vmem:[%s1045 + $0x18] sm:$0xf]
        %v2770 = vld [vmem:[%s1045 + $0x1c] sm:$0xf]
        %v2771 = vld [vmem:[%s1045 + $0x20] sm:$0xf]
        %v2772 = vld [vmem:[%s1045 + $0x24] sm:$0xf]
        %v2773 = vld [vmem:[%s1045 + $0x28] sm:$0xf]
        %v2774 = vld [vmem:[%s1045 + $0x2c] sm:$0xf]
        %v2775 = vld [vmem:[%s1045 + $0x30] sm:$0xf]
        %v2776 = vld [vmem:[%s1045 + $0x34] sm:$0xf]
        %v2777 = vld [vmem:[%s1045 + $0x38] sm:$0xf]
        %v2778 = vld [vmem:[%s1045 + $0x3c] sm:$0xf]
        %v2779 = vld [vmem:[%s1045 + $0x40] sm:$0xf]
        %v2780 = vld [vmem:[%s1045 + $0x44] sm:$0xf]
        %v2781 = vld [vmem:[%s1045 + $0x48] sm:$0xf]
        %v2782 = vld [vmem:[%s1045 + $0x4c] sm:$0xf]
        %v2783 = vld [vmem:[%s1045 + $0x50] sm:$0xf]
        %v2784 = vld [vmem:[%s1045 + $0x54] sm:$0xf]
        %v2785 = vld [vmem:[%s1045 + $0x58] sm:$0xf]
        %v2786 = vld [vmem:[%s1045 + $0x5c] sm:$0xf]
        %v2787 = vld [vmem:[%s1045 + $0x60] sm:$0xf]
        %v2788 = vld [vmem:[%s1045 + $0x64] sm:$0xf]
        %v2789 = vld [vmem:[%s1045 + $0x68] sm:$0xf]
        %v2790 = vld [vmem:[%s1045 + $0x6c] sm:$0xf]
        %v2791 = vld [vmem:[%s1045 + $0x70] sm:$0xf]
        %v2792 = vld [vmem:[%s1045 + $0x74] sm:$0xf]
        %v2793 = vld [vmem:[%s1045 + $0x78] sm:$0xf]
        %v2794 = vld [vmem:[%s1045 + $0x7c] sm:$0xf]
        %v2795 = vld [vmem:[%s1189] sm:$0x1]
        %v2797 = vperm.slane %v2795, 0
        %v2831 = vunpack.c.l.b16 %v2763
        %v2832 = vunpack.c.l.b16 %v2764
        %v2833 = vunpack.c.l.b16 %v2765
        %v2834 = vunpack.c.l.b16 %v2766
        %v2835 = vunpack.c.l.b16 %v2767
        %v2836 = vunpack.c.l.b16 %v2768
        %v2837 = vunpack.c.l.b16 %v2769
        %v2838 = vunpack.c.l.b16 %v2770
        %v2839 = vunpack.c.l.b16 %v2771
        %v2840 = vunpack.c.l.b16 %v2772
        %v2841 = vunpack.c.l.b16 %v2773
        %v2842 = vunpack.c.l.b16 %v2774
        %v2843 = vunpack.c.l.b16 %v2775
        %v2844 = vunpack.c.l.b16 %v2776
        %v2845 = vunpack.c.l.b16 %v2777
        %v2846 = vunpack.c.l.b16 %v2778
        %v2847 = vunpack.c.l.b16 %v2779
        %v2848 = vunpack.c.l.b16 %v2780
        %v2849 = vunpack.c.l.b16 %v2781
        %v2850 = vunpack.c.l.b16 %v2782
        %v2851 = vunpack.c.l.b16 %v2783
        %v2852 = vunpack.c.l.b16 %v2784
        %v2853 = vunpack.c.l.b16 %v2785
        %v2854 = vunpack.c.l.b16 %v2786
        %v2855 = vunpack.c.l.b16 %v2787
        %v2856 = vunpack.c.l.b16 %v2788
        %v2857 = vunpack.c.l.b16 %v2789
        %v2858 = vunpack.c.l.b16 %v2790
        %v2859 = vunpack.c.l.b16 %v2791
        %v2860 = vunpack.c.l.b16 %v2792
        %v2861 = vunpack.c.l.b16 %v2793
        %v2862 = vunpack.c.l.b16 %v2794
        %v2863 = vpack.c.b16 %v2832, %v2831
        %v2864 = vpack.c.b16 %v2834, %v2833
        %v2865 = vpack.c.b16 %v2836, %v2835
        %v2866 = vpack.c.b16 %v2838, %v2837
        %v2867 = vpack.c.b16 %v2840, %v2839
        %v2868 = vpack.c.b16 %v2842, %v2841
        %v2869 = vpack.c.b16 %v2844, %v2843
        %v2870 = vpack.c.b16 %v2846, %v2845
        %v2871 = vpack.c.b16 %v2848, %v2847
        %v2872 = vpack.c.b16 %v2850, %v2849
        %v2873 = vpack.c.b16 %v2852, %v2851
        %v2874 = vpack.c.b16 %v2854, %v2853
        %v2875 = vpack.c.b16 %v2856, %v2855
        %v2876 = vpack.c.b16 %v2858, %v2857
        %v2877 = vpack.c.b16 %v2860, %v2859
        %v2878 = vpack.c.b16 %v2862, %v2861
        %2895 = vmatpush.bf16.msra.mxu0 %v2870
        %2896 = vmatpush.bf16.msra.mxu0 %v2869
        %2897 = vmatpush.bf16.msra.mxu0 %v2868
        %2898 = vmatpush.bf16.msra.mxu0 %v2867
        %2899 = vmatpush.bf16.msra.mxu0 %v2866
        %2900 = vmatpush.bf16.msra.mxu0 %v2865
        %2901 = vmatpush.bf16.msra.mxu0 %v2864
        %2902 = vmatpush.bf16.msra.mxu0 %v2863
        %2903 = vmatmul.bf16.gmra.mxu0 %v2761
        %v2904 = vpop.f32.mrf.mxu0
        %v2905 = vadd.f32 %v2797, %v2904
        %v2906 = vpop.f32.mrf.mxu0
        %2907 = vdwg.mxu0
        %2908 = vmatpush.bf16.msra.mxu0 %v2878
        %2909 = vmatpush.bf16.msra.mxu0 %v2877
        %2910 = vmatpush.bf16.msra.mxu0 %v2876
        %2911 = vmatpush.bf16.msra.mxu0 %v2875
        %2912 = vmatpush.bf16.msra.mxu0 %v2874
        %2913 = vmatpush.bf16.msra.mxu0 %v2873
        %2914 = vmatpush.bf16.msra.mxu0 %v2872
        %2915 = vmatpush.bf16.msra.mxu0 %v2871
        %2916 = vmatmul.bf16.gmra.mxu0 %v2762
        %v2917 = vpop.f32.mrf.mxu0
        %v2918 = vadd.f32 %v2905, %v2917
        %v2919 = vpop.f32.mrf.mxu0
        %2920 = vdwg.mxu0
        %v2921 = vadd.f32 %v2918, %v2583
        %2922 = vst [vmem:[#allocation2] sm:$0xff] %v2921
        %p2923 = scmp.eq.s32.totalorder %s63, 1
        // Predicated region
        $region169: #{tpu_custom_call.1} parent=107 // pred_check
          %p2924 = pneg %p2923
        $region170: #{tpu_custom_call.1} parent=107 // pred_check_branch
          %2926 = sbr.rel (%p2924) target = $region172
        $region171: #{tpu_custom_call.1} parent=107 // pred_region
          %v2927 = vld [vmem:[%s16] sm:$0x1]
          %v2928 = vld [vmem:[%s17] sm:$0x1]
          %2929 = vadd.xlane.f32.xlu0 %v2921
          %v2930 = vpop.xlane.xlu0 %2929
          %v2931 = vmul.f32 %v2930, %v1220
          %v2932 = vsub.f32 %v2921, %v2931
          %v2933 = vmul.f32 %v2932, %v2932
          %2934 = vadd.xlane.f32.xlu0 %v2933
          %v2935 = vpop.xlane.xlu0 %2934
          %v2936 = vmul.f32 %v2935, %v1220
          %v2937 = vadd.f32 %v2936, 1e-06
          %v2938 = vrsqrt.pop %v2937
          %v2939 = vmul.f32 %v2938, %v2937
          %v2940 = vmul.f32 %v2939, %v2938
          %v2941 = vmul.f32 0.5, %v2940
          %v2942 = vsub.f32 1.5, %v2941
          %v2943 = vmul.f32 %v2938, %v2942
          %vm2944 = vweird.f32 %v2937
          %vm2945 = vweird.f32 %v2938
          %vm2946 = vmor %vm2944, %vm2945
          %v2947 = vsel %vm2946, %v2938, %v2943
          %v2948 = vmul.f32 %v2932, %v2947
          %v2950 = vperm.slane %v2927, 0
          %v2952 = vmul.f32 %v2948, %v2950
          %v2954 = vperm.slane %v2928, 0
          %v2956 = vadd.f32 %v2952, %v2954
          %v2957 = vpack.c.bf16 %v2956, %v2956
          %v2958 = vld [vmem:[#allocation23] sm:$0xf]
          %v2959 = vld [vmem:[#allocation23 + $0x4] sm:$0xf]
          %v2960 = vld [vmem:[#allocation23 + $0x8] sm:$0xf]
          %v2961 = vld [vmem:[#allocation23 + $0xc] sm:$0xf]
          %v2962 = vld [vmem:[#allocation23 + $0x10] sm:$0xf]
          %v2963 = vld [vmem:[#allocation23 + $0x14] sm:$0xf]
          %v2964 = vld [vmem:[#allocation23 + $0x18] sm:$0xf]
          %v2965 = vld [vmem:[#allocation23 + $0x1c] sm:$0xf]
          %v2966 = vld [vmem:[#allocation23 + $0x20] sm:$0xf]
          %v2967 = vld [vmem:[#allocation23 + $0x24] sm:$0xf]
          %v2968 = vld [vmem:[#allocation23 + $0x28] sm:$0xf]
          %v2969 = vld [vmem:[#allocation23 + $0x2c] sm:$0xf]
          %v2970 = vld [vmem:[#allocation23 + $0x30] sm:$0xf]
          %v2971 = vld [vmem:[#allocation23 + $0x34] sm:$0xf]
          %v2972 = vld [vmem:[#allocation23 + $0x38] sm:$0xf]
          %v2973 = vld [vmem:[#allocation23 + $0x3c] sm:$0xf]
          %v2974 = vld [vmem:[%s19] sm:$0x1]
          %v2991 = vunpack.c.l.b16 %v2958
          %v2992 = vunpack.c.l.b16 %v2959
          %v2993 = vunpack.c.l.b16 %v2960
          %v2994 = vunpack.c.l.b16 %v2961
          %v2995 = vunpack.c.l.b16 %v2962
          %v2996 = vunpack.c.l.b16 %v2963
          %v2997 = vunpack.c.l.b16 %v2964
          %v2998 = vunpack.c.l.b16 %v2965
          %v2999 = vunpack.c.l.b16 %v2966
          %v3000 = vunpack.c.l.b16 %v2967
          %v3001 = vunpack.c.l.b16 %v2968
          %v3002 = vunpack.c.l.b16 %v2969
          %v3003 = vunpack.c.l.b16 %v2970
          %v3004 = vunpack.c.l.b16 %v2971
          %v3005 = vunpack.c.l.b16 %v2972
          %v3006 = vunpack.c.l.b16 %v2973
          %v3007 = vpack.c.b16 %v2992, %v2991
          %v3008 = vpack.c.b16 %v2994, %v2993
          %v3009 = vpack.c.b16 %v2996, %v2995
          %v3010 = vpack.c.b16 %v2998, %v2997
          %v3011 = vpack.c.b16 %v3000, %v2999
          %v3012 = vpack.c.b16 %v3002, %v3001
          %v3013 = vpack.c.b16 %v3004, %v3003
          %v3014 = vpack.c.b16 %v3006, %v3005
          %3023 = vmatpush.bf16.msra.mxu0 %v3014
          %3024 = vmatpush.bf16.msra.mxu0 %v3013
          %3025 = vmatpush.bf16.msra.mxu0 %v3012
          %3026 = vmatpush.bf16.msra.mxu0 %v3011
          %3027 = vmatpush.bf16.msra.mxu0 %v3010
          %3028 = vmatpush.bf16.msra.mxu0 %v3009
          %3029 = vmatpush.bf16.msra.mxu0 %v3008
          %3030 = vmatpush.bf16.msra.mxu0 %v3007
          %3031 = vmatmul.bf16.gmra.mxu0 %v2957
          %v3032 = vpop.f32.mrf.mxu0
          %v3033 = vadd.f32 %v2974, %v3032
          %v3034 = vpop.f32.mrf.mxu0
          %3035 = vdwg.mxu0
          %v3036 = vtanh.pop %v3033
          %v3037 = vpack.c.bf16 %v3036, %v3036
          %v3038 = vld [vmem:[#allocation24] sm:$0xf]
          %v3039 = vld [vmem:[#allocation24 + $0x4] sm:$0xf]
          %v3040 = vld [vmem:[#allocation24 + $0x8] sm:$0xf]
          %v3041 = vld [vmem:[#allocation24 + $0xc] sm:$0xf]
          %v3042 = vld [vmem:[#allocation24 + $0x10] sm:$0xf]
          %v3043 = vld [vmem:[#allocation24 + $0x14] sm:$0xf]
          %v3044 = vld [vmem:[#allocation24 + $0x18] sm:$0xf]
          %v3045 = vld [vmem:[#allocation24 + $0x1c] sm:$0xf]
          %v3046 = vld [vmem:[#allocation24 + $0x20] sm:$0xf]
          %v3047 = vld [vmem:[#allocation24 + $0x24] sm:$0xf]
          %v3048 = vld [vmem:[#allocation24 + $0x28] sm:$0xf]
          %v3049 = vld [vmem:[#allocation24 + $0x2c] sm:$0xf]
          %v3050 = vld [vmem:[#allocation24 + $0x30] sm:$0xf]
          %v3051 = vld [vmem:[#allocation24 + $0x34] sm:$0xf]
          %v3052 = vld [vmem:[#allocation24 + $0x38] sm:$0xf]
          %v3053 = vld [vmem:[#allocation24 + $0x3c] sm:$0xf]
          %v3054 = vld [vmem:[%s21] sm:$0x1]
          %v3071 = vunpack.c.l.b16 %v3038
          %v3072 = vunpack.c.l.b16 %v3039
          %v3073 = vunpack.c.l.b16 %v3040
          %v3074 = vunpack.c.l.b16 %v3041
          %v3075 = vunpack.c.l.b16 %v3042
          %v3076 = vunpack.c.l.b16 %v3043
          %v3077 = vunpack.c.l.b16 %v3044
          %v3078 = vunpack.c.l.b16 %v3045
          %v3079 = vunpack.c.l.b16 %v3046
          %v3080 = vunpack.c.l.b16 %v3047
          %v3081 = vunpack.c.l.b16 %v3048
          %v3082 = vunpack.c.l.b16 %v3049
          %v3083 = vunpack.c.l.b16 %v3050
          %v3084 = vunpack.c.l.b16 %v3051
          %v3085 = vunpack.c.l.b16 %v3052
          %v3086 = vunpack.c.l.b16 %v3053
          %v3087 = vpack.c.b16 %v3072, %v3071
          %v3088 = vpack.c.b16 %v3074, %v3073
          %v3089 = vpack.c.b16 %v3076, %v3075
          %v3090 = vpack.c.b16 %v3078, %v3077
          %v3091 = vpack.c.b16 %v3080, %v3079
          %v3092 = vpack.c.b16 %v3082, %v3081
          %v3093 = vpack.c.b16 %v3084, %v3083
          %v3094 = vpack.c.b16 %v3086, %v3085
          %3103 = vmatpush.bf16.msra.mxu0 %v3094
          %3104 = vmatpush.bf16.msra.mxu0 %v3093
          %3105 = vmatpush.bf16.msra.mxu0 %v3092
          %3106 = vmatpush.bf16.msra.mxu0 %v3091
          %3107 = vmatpush.bf16.msra.mxu0 %v3090
          %3108 = vmatpush.bf16.msra.mxu0 %v3089
          %3109 = vmatpush.bf16.msra.mxu0 %v3088
          %3110 = vmatpush.bf16.msra.mxu0 %v3087
          %3111 = vmatmul.bf16.gmra.mxu0 %v3037
          %v3112 = vpop.f32.mrf.mxu0
          %v3113 = vadd.f32 %v3054, %v3112
          %v3114 = vpop.f32.mrf.mxu0
          %3115 = vdwg.mxu0
          %3116 = vst [vmem:[%s1174] sm:$0x1] %v3113
        $region172: #{tpu_custom_call.1} parent=107 // pred_fallthru
          _
        %s3117 = sand.u32 %s615, 1
        %s3118 = scalar_lea.sflag [#allocation5], %s3117
        %s3119 = sand.u32 %s615, 1
        %s3120 = scalar_lea.vmem [#allocation26], %s3119
        // Predicated region
        $region173: #{tpu_custom_call.1} parent=107 // pred_check
          %p3121 = pneg %p625
        $region174: #{tpu_custom_call.1} parent=107 // pred_check_branch
          %3123 = sbr.rel (%p3121) target = $region176
        $region175: #{tpu_custom_call.1} parent=107 // pred_region
          %3125 = vsyncadd %s3118, 0
          %s3126 = scalar_lea.hbm %s22, %s62
          %s3128 = sshll.u32 %s3120, 4
          %s3129 = int_to_ptr.vmem [resolvable:$true] %s3128
          %s3130 = sshll.u32 %s3126, 4
          %s3131 = int_to_ptr.hbm [resolvable:$true] %s3130
          %3133 = dma.vmem_to_hbm [thread:$0]  %s3129, 16, %s3131, %s3118
        $region176: #{tpu_custom_call.1} parent=107 // pred_fallthru
          _
      $region108: #{tpu_custom_call.1} parent=5 // pred_fallthru
        _
      %p3134 = scmp.le.s32.totalorder 2, %s53
      // Predicated region
      $region177: #{tpu_custom_call.1} parent=5 // pred_check
        %p3135 = pneg %p3134
      $region178: #{tpu_custom_call.1} parent=5 // pred_check_branch
        %3137 = sbr.rel (%p3135) target = $region180
      $region179: #{tpu_custom_call.1} parent=5 // pred_region
        %s3138 = ssub.s32 %s53, 2
        // Predicated region
        $region181: #{tpu_custom_call.1} parent=179 // pred_check
          %p3139 = pneg %p631
        $region182: #{tpu_custom_call.1} parent=179 // pred_check_branch
          %3141 = sbr.rel (%p3139) target = $region184
        $region183: #{tpu_custom_call.1} parent=179 // pred_region
          %s3142 = sand.u32 %s616, 1
          %s3143 = scalar_lea.sflag [#allocation5], %s3142
          %s3144 = sand.u32 %s616, 1
          %s3145 = scalar_lea.vmem [#allocation26], %s3144
          %3147 = dma.done %s3143, 16
        $region184: #{tpu_custom_call.1} parent=179 // pred_fallthru
          _
      $region180: #{tpu_custom_call.1} parent=5 // pred_fallthru
        _
    $region6: #{tpu_custom_call.1} parent=1 // loop_footer
      %s57 = sadd.s32 1, %s53
    $region7: #{tpu_custom_call.1} parent=1 // loop_footer_branch
      %52 = sbr.rel target = $region3
    $region8: #{tpu_custom_call.1} parent=1 // loop_exit
      _
    %3148 = vsyncpa [#allocation4], 1
    %s3149 = scalar_lea.sflag [#allocation4], 1
    %3150 = vsyncpa %s3149, 1
    %3151 = vsyncpa [#allocation7], 1
    %s3152 = scalar_lea.sflag [#allocation7], 1
    %3153 = vsyncpa %s3152, 1
    %3154 = vsyncpa [#allocation10], 1
    %s3155 = scalar_lea.sflag [#allocation10], 1
    %3156 = vsyncpa %s3155, 1
    %3157 = vsyncpa [#allocation13], 1
    %s3158 = scalar_lea.sflag [#allocation13], 1
    %3159 = vsyncpa %s3158, 1
    %3160 = vsyncpa [#allocation16], 1
    %s3161 = scalar_lea.sflag [#allocation16], 1
    %3162 = vsyncpa %s3161, 1
    %3163 = vsyncpa [#allocation19], 1
    %s3164 = scalar_lea.sflag [#allocation19], 1
    %3165 = vsyncpa %s3164, 1
    %3166 = vsyncpa [#allocation22], 1
    %s3167 = scalar_lea.sflag [#allocation22], 1
    %3168 = vsyncpa %s3167, 1
    %3169 = vsyncpa [#allocation25], 1
    %3170 = vsyncpa [#allocation5], 1
    %s3171 = scalar_lea.sflag [#allocation5], 1
    %3172 = vsyncpa %s3171, 1

</llo_original>
